<compile_context>
chip_gen: v7x
topology: tpu7x:2x2x1
jax: 0.10.0
libtpu: 0.0.40
codegen_flags: <defaults>
</compile_context>

<pallas_src>
import functools
import numpy as np
import jax
import jax.numpy as jnp
from jax import lax
from jax.experimental import pallas as pl
from jax.experimental.pallas import tpu as pltpu


# ----------------------------------------------------------------------------
# Fused forward kernel: edge encoding -> L conv layers -> readout -> graph reduce
# ----------------------------------------------------------------------------
def _nequip_forward_kernel(
        edge_vec_ref, attrs_ref, src_ref, dstT_ref, graphT_ref,
        w_embed_ref, wsc_ref, w1_ref, wr1_ref, wr2_ref, wr3_ref, w2_ref,
        wh1_ref, wh2_ref,
        ae_ref, ge_ref,
        *, C, T, B, H, L, CH, r_max, inv_sqrt_nb, resnet):
    f32 = jnp.float32
    C4 = 4 * C

    # ---------------- edge encoding (Bessel * polynomial cutoff, SH l<=1) ------
    v = edge_vec_ref[...]                                   # [E, 3]
    ex = v[:, 0:1]
    ey = v[:, 1:2]
    ez = v[:, 2:3]
    r = jnp.sqrt(ex * ex + ey * ey + ez * ez)
    r_safe = jnp.maximum(r, 1e-6)
    inv_r = 1.0 / r_safe

    # Bessel basis: sqrt(2/r_max) * sin(n*pi*r/r_max) / r  (frequencies at init values).
    # Frequencies are built in-kernel from an iota so no array constant is captured.
    n_idx = lax.broadcasted_iota(jnp.int32, (1, B), 1).astype(f32) + 1.0    # [1, B]
    freqs = n_idx * np.float32(np.pi / r_max)
    bessel = np.float32(np.sqrt(2.0 / r_max)) * jnp.sin(r * freqs) * inv_r  # [E, B]

    # Polynomial cutoff (DimeNet).  TODO(synk): polynomial_p hard-coded to default 6.0.
    p = np.float32(6.0)
    u = r * np.float32(1.0 / r_max)
    u2 = u * u
    u3 = u2 * u
    u6 = u3 * u3
    u7 = u6 * u
    u8 = u7 * u
    fcut = (1.0
            - 0.5 * (p + 1.0) * (p + 2.0) * u6
            + p * (p + 2.0) * u7
            - 0.5 * p * (p + 1.0) * u8)
    fcut = jnp.where(u < 1.0, fcut, 0.0)
    eemb = bessel * fcut                                    # [E, B], resident across layers

    # Spherical harmonics l<=1, normalize=True, normalization='component'.
    # (e3nn orders l=1 as (y,z,x); the fixed permutation is absorbed by synthetic weights.)
    sqrt3 = np.float32(np.sqrt(3.0))
    s0 = jnp.ones_like(r)
    sx = sqrt3 * ex * inv_r
    sy = sqrt3 * ey * inv_r
    sz = sqrt3 * ez * inv_r

    # ---------------- chemical embedding: one-hot attrs -> C x 0e scalars -------
    attrs = attrs_ref[...]                                  # [N, T]
    x0 = jnp.dot(attrs, w_embed_ref[...],
                 preferred_element_type=f32) * np.float32(1.0 / np.sqrt(T))
    zC = jnp.zeros_like(x0)
    x = jnp.concatenate([x0, zC, zC, zC], axis=1)           # [N, 4C]

    src = src_ref[...]                                      # [E, N]  one-hot(source)
    dstT = dstT_ref[...]                                    # [N, E]  one-hot(dest)^T
    # TODO(synk): at production graph sizes replace the dense one-hot gather/scatter
    #             (O(E*N) VMEM) with scalar-prefetch / DMA index gather and a parallel
    #             node-tile grid axis (needed for v7x's 64 MiB VMEM and 2nd TensorCore).

    inv_sqrt_c = np.float32(1.0 / np.sqrt(C))
    inv_sqrt_tc = np.float32(1.0 / np.sqrt(T * C))
    inv_sqrt_b = np.float32(1.0 / np.sqrt(B))
    inv_sqrt_h = np.float32(1.0 / np.sqrt(H))
    inv_sqrt3 = np.float32(1.0 / np.sqrt(3.0))
    inv_sqrt2 = np.float32(1.0 / np.sqrt(2.0))
    nb = np.float32(inv_sqrt_nb)

    for l in range(L):                                      # layers unrolled in-body
        use_resnet = bool(resnet and l > 0)                 # layer 0 changes irreps

        # ---- self connection: one wide matmul + per-type VPU mask-reduce ----
        # wsc[l]: [4C, T*4C]; column block t = blockdiag(wsc0_t, wsc1_t, wsc1_t, wsc1_t)
        sc_wide = jnp.dot(x, wsc_ref[l], preferred_element_type=f32)   # [N, T*4C]
        sc = jnp.zeros_like(x)
        for t in range(T):
            sc = sc + attrs[:, t:t + 1] * sc_wide[:, t * C4:(t + 1) * C4]
        sc = sc * inv_sqrt_tc

        # ---- linear_1: block-diagonal [4C,4C] (shared over m for l=1) ----
        y = jnp.dot(x, w1_ref[l], preferred_element_type=f32) * inv_sqrt_c  # [N, 4C]

        # ---- gather source-node features onto edges: one one-hot matmul ----
        xs = jnp.dot(src, y, preferred_element_type=f32)                    # [E, 4C]

        # ---- radial MLP (bias-free, silu) -> per-path per-channel TP weights ----
        h = jax.nn.silu(jnp.dot(eemb, wr1_ref[l], preferred_element_type=f32) * inv_sqrt_b)
        h = jax.nn.silu(jnp.dot(h, wr2_ref[l], preferred_element_type=f32) * inv_sqrt_h)
        w = jnp.dot(h, wr3_ref[l], preferred_element_type=f32) * inv_sqrt_h  # [E, 5C]

        xs0 = xs[:, 0 * C:1 * C]
        xsx = xs[:, 1 * C:2 * C]
        xsy = xs[:, 2 * C:3 * C]
        xsz = xs[:, 3 * C:4 * C]
        w00 = w[:, 0 * C:1 * C]     # 0e x 0e -> 0e
        w110 = w[:, 1 * C:2 * C]    # 1  x 1  -> 0e  (dot)
        w01 = w[:, 2 * C:3 * C]     # 0e x 1  -> 1
        w10 = w[:, 3 * C:4 * C]     # 1  x 0e -> 1
        w111 = w[:, 4 * C:5 * C]    # 1  x 1  -> 1   (cross)

        # ---- depthwise l<=1 tensor-product messages (explicit CG paths) ----
        dot13 = xsx * sx + xsy * sy + xsz * sz
        m0 = w00 * xs0 * s0 + w110 * dot13 * inv_sqrt3
        cx = xsy * sz - xsz * sy
        cy = xsz * sx - xsx * sz
        cz = xsx * sy - xsy * sx
        mx = w01 * xs0 * sx + w10 * xsx * s0 + w111 * cx * inv_sqrt2
        my = w01 * xs0 * sy + w10 * xsy * s0 + w111 * cy * inv_sqrt2
        mz = w01 * xs0 * sz + w10 * xsz * s0 + w111 * cz * inv_sqrt2
        m = jnp.concatenate([m0, mx, my, mz], axis=1)                        # [E, 4C]

        # ---- scatter-add messages to destination nodes: one one-hot^T matmul ----
        agg = jnp.dot(dstT, m, preferred_element_type=f32) * nb              # [N, 4C]

        # ---- linear_2 (block-diagonal) + self connection ----
        z = jnp.dot(agg, w2_ref[l], preferred_element_type=f32) * inv_sqrt_c + sc

        # ---- equivariant nonlinearity ----
        # TODO(synk): reference uses e3nn Gate with dedicated gate scalars; here l=1
        #             features are gated by sigmoid of the matching scalar channel
        #             (still E(3)-equivariant).
        gate = jax.nn.sigmoid(z[:, 0:C])
        o = z * jnp.concatenate([gate, gate, gate, gate], axis=1)
        if use_resnet:
            o = o + x
        x = o

    # ---------------- readout: scalar head -> atomic energy -> per-graph reduce --
    x0f = x[:, 0:C]                          # only the 0e block feeds the energy head
    hid = jnp.dot(x0f, wh1_ref[...], preferred_element_type=f32) * inv_sqrt_c
    ae = jnp.dot(hid, wh2_ref[...],
                 preferred_element_type=f32) * np.float32(1.0 / np.sqrt(CH))
    ae_ref[...] = ae
    ge_ref[...] = jnp.dot(graphT_ref[...], ae, preferred_element_type=f32)


def _full_spec(shape):
    nd = len(shape)
    return pl.BlockSpec(shape, lambda i, _nd=nd: (0,) * _nd)


def nequip_forward(edge_vec, node_attrs, src_oh, dstT_oh, graphT_oh, params, *,
                   C, T, B, H, r_max, inv_sqrt_nb, resnet, C_half):
    """Single fused pallas_call for the whole forward pass (weights stacked per layer)."""
    L = len(params["layers"])

    # ---- plain-JAX glue: pre-layout weights so the kernel does batched matmuls ----
    def blkdiag_linear(w0, w1):
        Z = jnp.zeros((C, C), jnp.float32)
        return jnp.block([[w0, Z, Z, Z],
                          [Z, w1, Z, Z],
                          [Z, Z, w1, Z],
                          [Z, Z, Z, w1]])                              # [4C, 4C]

    def sc_block(wsc0, wsc1):
        # [4C, T*4C]: column block t = blockdiag(wsc0[:,tC:(t+1)C], wsc1[...]x3)
        cols = [blkdiag_linear(wsc0[:, t * C:(t + 1) * C],
                               wsc1[:, t * C:(t + 1) * C]) for t in range(T)]
        return jnp.concatenate(cols, axis=1)

    wsc = jnp.stack([sc_block(p["wsc0"], p["wsc1"]) for p in params["layers"]])
    w1 = jnp.stack([blkdiag_linear(p["w10"], p["w11"]) for p in params["layers"]])
    w2 = jnp.stack([blkdiag_linear(p["w20"], p["w21"]) for p in params["layers"]])
    wr1 = jnp.stack([p["wr1"] for p in params["layers"]])
    wr2 = jnp.stack([p["wr2"] for p in params["layers"]])
    wr3 = jnp.stack([p["wr3"] for p in params["layers"]])

    inputs = (edge_vec, node_attrs, src_oh, dstT_oh, graphT_oh,
              params["w_embed"], wsc, w1, wr1, wr2, wr3, w2,
              params["wh1"], params["wh2"])
    N = node_attrs.shape[0]
    G = graphT_oh.shape[0]
    kern = functools.partial(_nequip_forward_kernel, C=C, T=T, B=B, H=H, L=L,
                             CH=C_half, r_max=r_max, inv_sqrt_nb=inv_sqrt_nb,
                             resnet=resnet)
    return pl.pallas_call(
        kern,
        grid=(1,),
        in_specs=[_full_spec(a.shape) for a in inputs],
        out_specs=(_full_spec((N, 1)), _full_spec((G, 1))),
        out_shape=(jax.ShapeDtypeStruct((N, 1), jnp.float32),
                   jax.ShapeDtypeStruct((G, 1), jnp.float32)),
        compiler_params=pltpu.CompilerParams(dimension_semantics=("arbitrary",)),
    )(*inputs)


# ----------------------------------------------------------------------------
# Parameter init (deterministic, synthetic)
# ----------------------------------------------------------------------------
def init_params(key, *, T, C, B, H, num_layers, C_half):
    keys = jax.random.split(key, 2 + 9 * num_layers + 2)
    ki = iter(range(len(keys)))
    params = {"w_embed": jax.random.normal(keys[next(ki)], (T, C), jnp.float32)}
    layers = []
    for _ in range(num_layers):
        layers.append({
            # self-connection weights, laid out as [C, T*C] (column block t = type-t mix)
            "wsc0": jax.random.normal(keys[next(ki)], (C, T * C), jnp.float32),
            "wsc1": jax.random.normal(keys[next(ki)], (C, T * C), jnp.float32),
            "w10": jax.random.normal(keys[next(ki)], (C, C), jnp.float32),
            "w11": jax.random.normal(keys[next(ki)], (C, C), jnp.float32),
            "wr1": jax.random.normal(keys[next(ki)], (B, H), jnp.float32),
            "wr2": jax.random.normal(keys[next(ki)], (H, H), jnp.float32),
            "wr3": jax.random.normal(keys[next(ki)], (H, 5 * C), jnp.float32),
            "w20": jax.random.normal(keys[next(ki)], (C, C), jnp.float32),
            "w21": jax.random.normal(keys[next(ki)], (C, C), jnp.float32),
        })
    params["layers"] = layers
    params["wh1"] = jax.random.normal(keys[next(ki)], (C, C_half), jnp.float32)
    params["wh2"] = jax.random.normal(keys[next(ki)], (C_half, 1), jnp.float32)
    return params


def _pad_to(n, m):
    return ((n + m - 1) // m) * m


if __name__ == "__main__":
    # ---- hyperparameters (mirroring Nequip.__init__) ----
    T = 4                 # num_atom_types
    r_max = 4.0
    lmax = 1
    parity = 1
    num_layers = 2
    C = 8                 # num_features
    invariant_layers = 2
    H = 16                # invariant_neurons
    B = 8                 # bessel_num_basis
    poly_p = 6.0
    resnet = True
    C_half = max(1, C // 2)

    key = jax.random.PRNGKey(0)
    kdata, kparam = jax.random.split(key)

    # ---- synthetic batched graph input (2 "data" dicts: pos, atom_types, edge_index, cell, cut_off) ----
    natoms = [5, 7]
    nedges = [8, 10]
    G = len(natoms)
    dkeys = jax.random.split(kdata, 4 * G)
    pos_list, type_list, ei_list, slice_list = [], [], [], []
    offset = 0
    for g in range(G):
        n, ne = natoms[g], nedges[g]
        pos = jax.random.uniform(dkeys[4 * g + 0], (n, 3), jnp.float32, 0.0, 3.0)
        atype = jax.random.randint(dkeys[4 * g + 1], (n,), 0, T)
        srcg = jax.random.randint(dkeys[4 * g + 2], (ne,), 0, n)
        delta = jax.random.randint(dkeys[4 * g + 3], (ne,), 1, n)
        dstg = (srcg + delta) % n
        ei = jnp.stack([srcg, dstg], axis=0) + offset   # edge_index + atom offset
        pos_list.append(pos)
        type_list.append(atype)
        ei_list.append(ei)
        slice_list.append(jnp.full((n,), g, jnp.int32))
        offset += n

    pos = jnp.concatenate(pos_list, axis=0)                       # [N, 3]
    atom_types = jnp.concatenate(type_list, axis=0)               # [N]
    edge_index = jnp.concatenate(ei_list, axis=1)                 # [2, E0]
    data_slice = jnp.concatenate(slice_list, axis=0)              # [N]
    # TODO(synk): get_edge_cell_shift (PBC minimum-image shifts) is an external helper; non-periodic cell assumed.
    edge_cell_shift = jnp.zeros((edge_index.shape[1], 3), jnp.float32)

    # double edges (both directions), negate shifts — as in the reference forward
    edge_index = jnp.concatenate([edge_index, edge_index[::-1]], axis=1)
    edge_cell_shift = jnp.concatenate([edge_cell_shift, -edge_cell_shift], axis=0)
    edge_vectors = pos[edge_index[1]] - pos[edge_index[0]] + edge_cell_shift   # [E, 3]

    N_real = pos.shape[0]
    E_real = edge_index.shape[1]
    N_pad = _pad_to(N_real, 8)
    E_pad = _pad_to(E_real, 8)

    # padded one-hot encodings (out-of-range index -> all-zero row, so padding is inert)
    atype_pad = jnp.concatenate([atom_types, -jnp.ones((N_pad - N_real,), jnp.int32)])
    node_attrs = jax.nn.one_hot(atype_pad, T, dtype=jnp.float32)                     # [N_pad, T]
    slice_pad = jnp.concatenate([data_slice, -jnp.ones((N_pad - N_real,), jnp.int32)])
    graphT_oh = jax.nn.one_hot(slice_pad, G, dtype=jnp.float32).T                    # [G, N_pad]

    # nequip convention: edge_index[0] = receiver (dst), edge_index[1] = neighbor (src)
    src_pad = jnp.concatenate([edge_index[1], -jnp.ones((E_pad - E_real,), jnp.int32)])
    dst_pad = jnp.concatenate([edge_index[0], -jnp.ones((E_pad - E_real,), jnp.int32)])
    src_oh = jax.nn.one_hot(src_pad, N_pad, dtype=jnp.float32)                       # [E_pad, N_pad]
    dstT_oh = jax.nn.one_hot(dst_pad, N_pad, dtype=jnp.float32).T                    # [N_pad, E_pad]

    pad_vec = jnp.tile(jnp.array([[1.0, 0.0, 0.0]], jnp.float32), (E_pad - E_real, 1))
    edge_vec_pad = jnp.concatenate([edge_vectors, pad_vec], axis=0)                  # [E_pad, 3]

    # ---- parameters ----
    params = init_params(kparam, T=T, C=C, B=B, H=H, num_layers=num_layers, C_half=C_half)

    avg_num_neighbors = E_real / N_real
    inv_sqrt_nb = float(1.0 / np.sqrt(avg_num_neighbors))

    # ---- fused forward: edge encode + chemical embedding + conv layers + readout ----
    atomic_energy, total_energy_per_data = nequip_forward(
        edge_vec_pad, node_attrs, src_oh, dstT_oh, graphT_oh, params,
        C=C, T=T, B=B, H=H, r_max=r_max,
        inv_sqrt_nb=inv_sqrt_nb, resnet=resnet, C_half=C_half)

    total_energy_per_data = total_energy_per_data.reshape(-1)     # [G]
    atomic_energy = atomic_energy[:N_real]                        # drop padded atoms

    # TODO(synk): atomic_force = -d(total_energy)/d(pos) requires autodiff through pallas_call
    #             (torch.autograd.grad in the reference); no custom VJP is defined here.

    jax.block_until_ready(total_energy_per_data)
    jax.block_until_ready(atomic_energy)
    assert total_energy_per_data.shape == (G,)
    assert atomic_energy.shape == (N_real, 1)
    assert bool(jnp.all(jnp.isfinite(total_energy_per_data)))
    assert bool(jnp.all(jnp.isfinite(atomic_energy)))
    print("KERNEL_OK")
</pallas_src>

<mosaic_0001>
module attributes {stable_mosaic.version = 11 : i64} {
  func.func @_nequip_forward_kernel(%arg0: i32, %arg1: memref<40x3xf32, #tpu.memory_space<vmem>>, %arg2: memref<16x4xf32, #tpu.memory_space<vmem>>, %arg3: memref<40x16xf32, #tpu.memory_space<vmem>>, %arg4: memref<16x40xf32, #tpu.memory_space<vmem>>, %arg5: memref<2x16xf32, #tpu.memory_space<vmem>>, %arg6: memref<4x8xf32, #tpu.memory_space<vmem>>, %arg7: memref<2x32x128xf32, #tpu.memory_space<vmem>>, %arg8: memref<2x32x32xf32, #tpu.memory_space<vmem>>, %arg9: memref<2x8x16xf32, #tpu.memory_space<vmem>>, %arg10: memref<2x16x16xf32, #tpu.memory_space<vmem>>, %arg11: memref<2x16x40xf32, #tpu.memory_space<vmem>>, %arg12: memref<2x32x32xf32, #tpu.memory_space<vmem>>, %arg13: memref<8x4xf32, #tpu.memory_space<vmem>>, %arg14: memref<4x1xf32, #tpu.memory_space<vmem>>, %arg15: memref<16x1xf32, #tpu.memory_space<vmem>>, %arg16: memref<2x1xf32, #tpu.memory_space<vmem>>) attributes {dimension_semantics = [#tpu.dimension_semantics<arbitrary>], iteration_bounds = array<i64: 1>, scalar_prefetch = 0 : i64, scratch_operands = 0 : i64, tpu.core_type = #tpu.core_type<tc>, window_params = [{pipeline_mode = #tpu.pipeline_mode<synchronous>, transform_indices = @transform_0, window_bounds = array<i64: 40, 3>}, {pipeline_mode = #tpu.pipeline_mode<synchronous>, transform_indices = @transform_1, window_bounds = array<i64: 16, 4>}, {pipeline_mode = #tpu.pipeline_mode<synchronous>, transform_indices = @transform_2, window_bounds = array<i64: 40, 16>}, {pipeline_mode = #tpu.pipeline_mode<synchronous>, transform_indices = @transform_3, window_bounds = array<i64: 16, 40>}, {pipeline_mode = #tpu.pipeline_mode<synchronous>, transform_indices = @transform_4, window_bounds = array<i64: 2, 16>}, {pipeline_mode = #tpu.pipeline_mode<synchronous>, transform_indices = @transform_5, window_bounds = array<i64: 4, 8>}, {pipeline_mode = #tpu.pipeline_mode<synchronous>, transform_indices = @transform_6, window_bounds = array<i64: 2, 32, 128>}, {pipeline_mode = #tpu.pipeline_mode<synchronous>, transform_indices = @transform_7, window_bounds = array<i64: 2, 32, 32>}, {pipeline_mode = #tpu.pipeline_mode<synchronous>, transform_indices = @transform_8, window_bounds = array<i64: 2, 8, 16>}, {pipeline_mode = #tpu.pipeline_mode<synchronous>, transform_indices = @transform_9, window_bounds = array<i64: 2, 16, 16>}, {pipeline_mode = #tpu.pipeline_mode<synchronous>, transform_indices = @transform_10, window_bounds = array<i64: 2, 16, 40>}, {pipeline_mode = #tpu.pipeline_mode<synchronous>, transform_indices = @transform_11, window_bounds = array<i64: 2, 32, 32>}, {pipeline_mode = #tpu.pipeline_mode<synchronous>, transform_indices = @transform_12, window_bounds = array<i64: 8, 4>}, {pipeline_mode = #tpu.pipeline_mode<synchronous>, transform_indices = @transform_13, window_bounds = array<i64: 4, 1>}, {pipeline_mode = #tpu.pipeline_mode<synchronous>, transform_indices = @transform_14, window_bounds = array<i64: 16, 1>}, {pipeline_mode = #tpu.pipeline_mode<synchronous>, transform_indices = @transform_15, window_bounds = array<i64: 2, 1>}]} {
    %c0 = arith.constant 0 : index
    %c0_0 = arith.constant 0 : index
    %0 = vector.load %arg1[%c0, %c0_0] : memref<40x3xf32, #tpu.memory_space<vmem>>, vector<40x3xf32>
    %1 = vector.extract_strided_slice %0 {offsets = [0, 0], sizes = [40, 1], strides = [1, 1]} : vector<40x3xf32> to vector<40x1xf32>
    %2 = vector.extract_strided_slice %0 {offsets = [0, 1], sizes = [40, 1], strides = [1, 1]} : vector<40x3xf32> to vector<40x1xf32>
    %3 = vector.extract_strided_slice %0 {offsets = [0, 2], sizes = [40, 1], strides = [1, 1]} : vector<40x3xf32> to vector<40x1xf32>
    %4 = arith.mulf %1, %1 : vector<40x1xf32>
    %5 = arith.mulf %2, %2 : vector<40x1xf32>
    %6 = arith.addf %4, %5 : vector<40x1xf32>
    %7 = arith.mulf %3, %3 : vector<40x1xf32>
    %8 = arith.addf %6, %7 : vector<40x1xf32>
    %9 = math.sqrt %8 : vector<40x1xf32>
    %cst = arith.constant 9.99999997E-7 : f32
    %10 = vector.broadcast %cst : f32 to vector<40x1xf32>
    %11 = arith.maximumf %9, %10 : vector<40x1xf32>
    %cst_1 = arith.constant 1.000000e+00 : f32
    %12 = vector.broadcast %cst_1 : f32 to vector<40x1xf32>
    %13 = arith.divf %12, %11 : vector<40x1xf32>
    %14 = tpu.iota {dimensions = array<i32: 1>} : vector<1x8xi32>
    %15 = arith.sitofp %14 : vector<1x8xi32> to vector<1x8xf32>
    %cst_2 = arith.constant 1.000000e+00 : f32
    %16 = vector.broadcast %cst_2 : f32 to vector<1x8xf32>
    %17 = arith.addf %15, %16 : vector<1x8xf32>
    %cst_3 = arith.constant 0.785398185 : f32
    %18 = vector.broadcast %cst_3 : f32 to vector<1x8xf32>
    %19 = arith.mulf %17, %18 : vector<1x8xf32>
    %20 = vector.broadcast %9 : vector<40x1xf32> to vector<40x8xf32>
    %21 = vector.broadcast %19 : vector<1x8xf32> to vector<40x8xf32>
    %22 = arith.mulf %20, %21 : vector<40x8xf32>
    %23 = math.sin %22 : vector<40x8xf32>
    %cst_4 = arith.constant 0.707106769 : f32
    %24 = vector.broadcast %cst_4 : f32 to vector<40x8xf32>
    %25 = arith.mulf %24, %23 : vector<40x8xf32>
    %26 = vector.broadcast %13 : vector<40x1xf32> to vector<40x8xf32>
    %27 = arith.mulf %25, %26 : vector<40x8xf32>
    %cst_5 = arith.constant 2.500000e-01 : f32
    %28 = vector.broadcast %cst_5 : f32 to vector<40x1xf32>
    %29 = arith.mulf %9, %28 : vector<40x1xf32>
    %30 = arith.mulf %29, %29 : vector<40x1xf32>
    %31 = arith.mulf %30, %29 : vector<40x1xf32>
    %32 = arith.mulf %31, %31 : vector<40x1xf32>
    %33 = arith.mulf %32, %29 : vector<40x1xf32>
    %34 = arith.mulf %33, %29 : vector<40x1xf32>
    %cst_6 = arith.constant 2.800000e+01 : f32
    %35 = vector.broadcast %cst_6 : f32 to vector<40x1xf32>
    %36 = arith.mulf %35, %32 : vector<40x1xf32>
    %cst_7 = arith.constant 1.000000e+00 : f32
    %37 = vector.broadcast %cst_7 : f32 to vector<40x1xf32>
    %38 = arith.subf %37, %36 : vector<40x1xf32>
    %cst_8 = arith.constant 4.800000e+01 : f32
    %39 = vector.broadcast %cst_8 : f32 to vector<40x1xf32>
    %40 = arith.mulf %39, %33 : vector<40x1xf32>
    %41 = arith.addf %38, %40 : vector<40x1xf32>
    %cst_9 = arith.constant 2.100000e+01 : f32
    %42 = vector.broadcast %cst_9 : f32 to vector<40x1xf32>
    %43 = arith.mulf %42, %34 : vector<40x1xf32>
    %44 = arith.subf %41, %43 : vector<40x1xf32>
    %cst_10 = arith.constant 1.000000e+00 : f32
    %45 = vector.broadcast %cst_10 : f32 to vector<40x1xf32>
    %46 = arith.cmpf olt, %29, %45 : vector<40x1xf32>
    %cst_11 = arith.constant 0.000000e+00 : f32
    %47 = vector.broadcast %cst_11 : f32 to vector<40x1xf32>
    %48 = arith.select %46, %44, %47 : vector<40x1xi1>, vector<40x1xf32>
    %49 = vector.broadcast %48 : vector<40x1xf32> to vector<40x8xf32>
    %50 = arith.mulf %27, %49 : vector<40x8xf32>
    %cst_12 = arith.constant 1.000000e+00 : f32
    %51 = vector.broadcast %cst_12 : f32 to vector<40x1xf32>
    %cst_13 = arith.constant 1.73205078 : f32
    %52 = vector.broadcast %cst_13 : f32 to vector<40x1xf32>
    %53 = arith.mulf %52, %1 : vector<40x1xf32>
    %54 = arith.mulf %53, %13 : vector<40x1xf32>
    %cst_14 = arith.constant 1.73205078 : f32
    %55 = vector.broadcast %cst_14 : f32 to vector<40x1xf32>
    %56 = arith.mulf %55, %2 : vector<40x1xf32>
    %57 = arith.mulf %56, %13 : vector<40x1xf32>
    %cst_15 = arith.constant 1.73205078 : f32
    %58 = vector.broadcast %cst_15 : f32 to vector<40x1xf32>
    %59 = arith.mulf %58, %3 : vector<40x1xf32>
    %60 = arith.mulf %59, %13 : vector<40x1xf32>
    %c0_16 = arith.constant 0 : index
    %c0_17 = arith.constant 0 : index
    %61 = vector.load %arg2[%c0_16, %c0_17] : memref<16x4xf32, #tpu.memory_space<vmem>>, vector<16x4xf32>
    %c0_18 = arith.constant 0 : index
    %c0_19 = arith.constant 0 : index
    %62 = vector.load %arg6[%c0_18, %c0_19] : memref<4x8xf32, #tpu.memory_space<vmem>>, vector<4x8xf32>
    %cst_20 = arith.constant dense<0.000000e+00> : vector<16x8xf32>
    %63 = tpu.matmul %61, %62, %cst_20 {dimension_numbers = #tpu.dot_dimension_numbers<[1], [0], [0], [1], [0, 0, 1, 1], [], []>} : vector<16x4xf32>, vector<4x8xf32>, vector<16x8xf32> -> vector<16x8xf32>
    %cst_21 = arith.constant 5.000000e-01 : f32
    %64 = vector.broadcast %cst_21 : f32 to vector<16x8xf32>
    %65 = arith.mulf %63, %64 : vector<16x8xf32>
    %cst_22 = arith.constant 0.000000e+00 : f32
    %66 = vector.broadcast %cst_22 : f32 to vector<16x8xf32>
    %67 = tpu.concatenate %65, %66, %66, %66 in 1 : vector<16x8xf32>, vector<16x8xf32>, vector<16x8xf32>, vector<16x8xf32> -> vector<16x32xf32>
    %c0_23 = arith.constant 0 : index
    %c0_24 = arith.constant 0 : index
    %68 = vector.load %arg3[%c0_23, %c0_24] : memref<40x16xf32, #tpu.memory_space<vmem>>, vector<40x16xf32>
    %c0_25 = arith.constant 0 : index
    %c0_26 = arith.constant 0 : index
    %69 = vector.load %arg4[%c0_25, %c0_26] : memref<16x40xf32, #tpu.memory_space<vmem>>, vector<16x40xf32>
    %c0_27 = arith.constant 0 : index
    %c0_28 = arith.constant 0 : index
    %c0_29 = arith.constant 0 : index
    %70 = vector.load %arg7[%c0_27, %c0_28, %c0_29] : memref<2x32x128xf32, #tpu.memory_space<vmem>>, vector<1x32x128xf32>
    %71 = vector.shape_cast %70 : vector<1x32x128xf32> to vector<32x128xf32>
    %cst_30 = arith.constant dense<0.000000e+00> : vector<16x128xf32>
    %72 = tpu.matmul %67, %71, %cst_30 {dimension_numbers = #tpu.dot_dimension_numbers<[1], [0], [0], [1], [0, 0, 1, 1], [], []>} : vector<16x32xf32>, vector<32x128xf32>, vector<16x128xf32> -> vector<16x128xf32>
    %cst_31 = arith.constant 0.000000e+00 : f32
    %73 = vector.broadcast %cst_31 : f32 to vector<16x32xf32>
    %74 = vector.extract_strided_slice %61 {offsets = [0, 0], sizes = [16, 1], strides = [1, 1]} : vector<16x4xf32> to vector<16x1xf32>
    %75 = vector.extract_strided_slice %72 {offsets = [0, 0], sizes = [16, 32], strides = [1, 1]} : vector<16x128xf32> to vector<16x32xf32>
    %76 = vector.broadcast %74 : vector<16x1xf32> to vector<16x32xf32>
    %77 = arith.mulf %76, %75 : vector<16x32xf32>
    %78 = arith.addf %73, %77 : vector<16x32xf32>
    %79 = vector.extract_strided_slice %61 {offsets = [0, 1], sizes = [16, 1], strides = [1, 1]} : vector<16x4xf32> to vector<16x1xf32>
    %80 = vector.extract_strided_slice %72 {offsets = [0, 32], sizes = [16, 32], strides = [1, 1]} : vector<16x128xf32> to vector<16x32xf32>
    %81 = vector.broadcast %79 : vector<16x1xf32> to vector<16x32xf32>
    %82 = arith.mulf %81, %80 : vector<16x32xf32>
    %83 = arith.addf %78, %82 : vector<16x32xf32>
    %84 = vector.extract_strided_slice %61 {offsets = [0, 2], sizes = [16, 1], strides = [1, 1]} : vector<16x4xf32> to vector<16x1xf32>
    %85 = vector.extract_strided_slice %72 {offsets = [0, 64], sizes = [16, 32], strides = [1, 1]} : vector<16x128xf32> to vector<16x32xf32>
    %86 = vector.broadcast %84 : vector<16x1xf32> to vector<16x32xf32>
    %87 = arith.mulf %86, %85 : vector<16x32xf32>
    %88 = arith.addf %83, %87 : vector<16x32xf32>
    %89 = vector.extract_strided_slice %61 {offsets = [0, 3], sizes = [16, 1], strides = [1, 1]} : vector<16x4xf32> to vector<16x1xf32>
    %90 = vector.extract_strided_slice %72 {offsets = [0, 96], sizes = [16, 32], strides = [1, 1]} : vector<16x128xf32> to vector<16x32xf32>
    %91 = vector.broadcast %89 : vector<16x1xf32> to vector<16x32xf32>
    %92 = arith.mulf %91, %90 : vector<16x32xf32>
    %93 = arith.addf %88, %92 : vector<16x32xf32>
    %cst_32 = arith.constant 0.176776692 : f32
    %94 = vector.broadcast %cst_32 : f32 to vector<16x32xf32>
    %95 = arith.mulf %93, %94 : vector<16x32xf32>
    %c0_33 = arith.constant 0 : index
    %c0_34 = arith.constant 0 : index
    %c0_35 = arith.constant 0 : index
    %96 = vector.load %arg8[%c0_33, %c0_34, %c0_35] : memref<2x32x32xf32, #tpu.memory_space<vmem>>, vector<1x32x32xf32>
    %97 = vector.shape_cast %96 : vector<1x32x32xf32> to vector<32x32xf32>
    %cst_36 = arith.constant dense<0.000000e+00> : vector<16x32xf32>
    %98 = tpu.matmul %67, %97, %cst_36 {dimension_numbers = #tpu.dot_dimension_numbers<[1], [0], [0], [1], [0, 0, 1, 1], [], []>} : vector<16x32xf32>, vector<32x32xf32>, vector<16x32xf32> -> vector<16x32xf32>
    %cst_37 = arith.constant 0.353553385 : f32
    %99 = vector.broadcast %cst_37 : f32 to vector<16x32xf32>
    %100 = arith.mulf %98, %99 : vector<16x32xf32>
    %cst_38 = arith.constant dense<0.000000e+00> : vector<40x32xf32>
    %101 = tpu.matmul %68, %100, %cst_38 {dimension_numbers = #tpu.dot_dimension_numbers<[1], [0], [0], [1], [0, 0, 1, 1], [], []>} : vector<40x16xf32>, vector<16x32xf32>, vector<40x32xf32> -> vector<40x32xf32>
    %c0_39 = arith.constant 0 : index
    %c0_40 = arith.constant 0 : index
    %c0_41 = arith.constant 0 : index
    %102 = vector.load %arg9[%c0_39, %c0_40, %c0_41] : memref<2x8x16xf32, #tpu.memory_space<vmem>>, vector<1x8x16xf32>
    %103 = vector.shape_cast %102 : vector<1x8x16xf32> to vector<8x16xf32>
    %cst_42 = arith.constant dense<0.000000e+00> : vector<40x16xf32>
    %104 = tpu.matmul %50, %103, %cst_42 {dimension_numbers = #tpu.dot_dimension_numbers<[1], [0], [0], [1], [0, 0, 1, 1], [], []>} : vector<40x8xf32>, vector<8x16xf32>, vector<40x16xf32> -> vector<40x16xf32>
    %cst_43 = arith.constant 0.353553385 : f32
    %105 = vector.broadcast %cst_43 : f32 to vector<40x16xf32>
    %106 = arith.mulf %104, %105 : vector<40x16xf32>
    %107 = arith.negf %106 : vector<40x16xf32>
    %108 = math.exp %107 : vector<40x16xf32>
    %cst_44 = arith.constant 1.000000e+00 : f32
    %109 = vector.broadcast %cst_44 : f32 to vector<40x16xf32>
    %110 = arith.addf %109, %108 : vector<40x16xf32>
    %111 = arith.divf %109, %110 : vector<40x16xf32>
    %112 = arith.mulf %106, %111 : vector<40x16xf32>
    %c0_45 = arith.constant 0 : index
    %c0_46 = arith.constant 0 : index
    %c0_47 = arith.constant 0 : index
    %113 = vector.load %arg10[%c0_45, %c0_46, %c0_47] : memref<2x16x16xf32, #tpu.memory_space<vmem>>, vector<1x16x16xf32>
    %114 = vector.shape_cast %113 : vector<1x16x16xf32> to vector<16x16xf32>
    %cst_48 = arith.constant dense<0.000000e+00> : vector<40x16xf32>
    %115 = tpu.matmul %112, %114, %cst_48 {dimension_numbers = #tpu.dot_dimension_numbers<[1], [0], [0], [1], [0, 0, 1, 1], [], []>} : vector<40x16xf32>, vector<16x16xf32>, vector<40x16xf32> -> vector<40x16xf32>
    %cst_49 = arith.constant 2.500000e-01 : f32
    %116 = vector.broadcast %cst_49 : f32 to vector<40x16xf32>
    %117 = arith.mulf %115, %116 : vector<40x16xf32>
    %118 = arith.negf %117 : vector<40x16xf32>
    %119 = math.exp %118 : vector<40x16xf32>
    %cst_50 = arith.constant 1.000000e+00 : f32
    %120 = vector.broadcast %cst_50 : f32 to vector<40x16xf32>
    %121 = arith.addf %120, %119 : vector<40x16xf32>
    %122 = arith.divf %120, %121 : vector<40x16xf32>
    %123 = arith.mulf %117, %122 : vector<40x16xf32>
    %c0_51 = arith.constant 0 : index
    %c0_52 = arith.constant 0 : index
    %c0_53 = arith.constant 0 : index
    %124 = vector.load %arg11[%c0_51, %c0_52, %c0_53] : memref<2x16x40xf32, #tpu.memory_space<vmem>>, vector<1x16x40xf32>
    %125 = vector.shape_cast %124 : vector<1x16x40xf32> to vector<16x40xf32>
    %cst_54 = arith.constant dense<0.000000e+00> : vector<40x40xf32>
    %126 = tpu.matmul %123, %125, %cst_54 {dimension_numbers = #tpu.dot_dimension_numbers<[1], [0], [0], [1], [0, 0, 1, 1], [], []>} : vector<40x16xf32>, vector<16x40xf32>, vector<40x40xf32> -> vector<40x40xf32>
    %cst_55 = arith.constant 2.500000e-01 : f32
    %127 = vector.broadcast %cst_55 : f32 to vector<40x40xf32>
    %128 = arith.mulf %126, %127 : vector<40x40xf32>
    %129 = vector.extract_strided_slice %101 {offsets = [0, 0], sizes = [40, 8], strides = [1, 1]} : vector<40x32xf32> to vector<40x8xf32>
    %130 = vector.extract_strided_slice %101 {offsets = [0, 8], sizes = [40, 8], strides = [1, 1]} : vector<40x32xf32> to vector<40x8xf32>
    %131 = vector.extract_strided_slice %101 {offsets = [0, 16], sizes = [40, 8], strides = [1, 1]} : vector<40x32xf32> to vector<40x8xf32>
    %132 = vector.extract_strided_slice %101 {offsets = [0, 24], sizes = [40, 8], strides = [1, 1]} : vector<40x32xf32> to vector<40x8xf32>
    %133 = vector.extract_strided_slice %128 {offsets = [0, 0], sizes = [40, 8], strides = [1, 1]} : vector<40x40xf32> to vector<40x8xf32>
    %134 = vector.extract_strided_slice %128 {offsets = [0, 8], sizes = [40, 8], strides = [1, 1]} : vector<40x40xf32> to vector<40x8xf32>
    %135 = vector.extract_strided_slice %128 {offsets = [0, 16], sizes = [40, 8], strides = [1, 1]} : vector<40x40xf32> to vector<40x8xf32>
    %136 = vector.extract_strided_slice %128 {offsets = [0, 24], sizes = [40, 8], strides = [1, 1]} : vector<40x40xf32> to vector<40x8xf32>
    %137 = vector.extract_strided_slice %128 {offsets = [0, 32], sizes = [40, 8], strides = [1, 1]} : vector<40x40xf32> to vector<40x8xf32>
    %138 = vector.broadcast %54 : vector<40x1xf32> to vector<40x8xf32>
    %139 = arith.mulf %130, %138 : vector<40x8xf32>
    %140 = vector.broadcast %57 : vector<40x1xf32> to vector<40x8xf32>
    %141 = arith.mulf %131, %140 : vector<40x8xf32>
    %142 = arith.addf %139, %141 : vector<40x8xf32>
    %143 = vector.broadcast %60 : vector<40x1xf32> to vector<40x8xf32>
    %144 = arith.mulf %132, %143 : vector<40x8xf32>
    %145 = arith.addf %142, %144 : vector<40x8xf32>
    %146 = arith.mulf %133, %129 : vector<40x8xf32>
    %147 = vector.broadcast %51 : vector<40x1xf32> to vector<40x8xf32>
    %148 = arith.mulf %146, %147 : vector<40x8xf32>
    %149 = arith.mulf %134, %145 : vector<40x8xf32>
    %cst_56 = arith.constant 0.577350259 : f32
    %150 = vector.broadcast %cst_56 : f32 to vector<40x8xf32>
    %151 = arith.mulf %149, %150 : vector<40x8xf32>
    %152 = arith.addf %148, %151 : vector<40x8xf32>
    %153 = vector.broadcast %60 : vector<40x1xf32> to vector<40x8xf32>
    %154 = arith.mulf %131, %153 : vector<40x8xf32>
    %155 = vector.broadcast %57 : vector<40x1xf32> to vector<40x8xf32>
    %156 = arith.mulf %132, %155 : vector<40x8xf32>
    %157 = arith.subf %154, %156 : vector<40x8xf32>
    %158 = vector.broadcast %54 : vector<40x1xf32> to vector<40x8xf32>
    %159 = arith.mulf %132, %158 : vector<40x8xf32>
    %160 = vector.broadcast %60 : vector<40x1xf32> to vector<40x8xf32>
    %161 = arith.mulf %130, %160 : vector<40x8xf32>
    %162 = arith.subf %159, %161 : vector<40x8xf32>
    %163 = vector.broadcast %57 : vector<40x1xf32> to vector<40x8xf32>
    %164 = arith.mulf %130, %163 : vector<40x8xf32>
    %165 = vector.broadcast %54 : vector<40x1xf32> to vector<40x8xf32>
    %166 = arith.mulf %131, %165 : vector<40x8xf32>
    %167 = arith.subf %164, %166 : vector<40x8xf32>
    %168 = arith.mulf %135, %129 : vector<40x8xf32>
    %169 = vector.broadcast %54 : vector<40x1xf32> to vector<40x8xf32>
    %170 = arith.mulf %168, %169 : vector<40x8xf32>
    %171 = arith.mulf %136, %130 : vector<40x8xf32>
    %172 = vector.broadcast %51 : vector<40x1xf32> to vector<40x8xf32>
    %173 = arith.mulf %171, %172 : vector<40x8xf32>
    %174 = arith.addf %170, %173 : vector<40x8xf32>
    %175 = arith.mulf %137, %157 : vector<40x8xf32>
    %cst_57 = arith.constant 0.707106769 : f32
    %176 = vector.broadcast %cst_57 : f32 to vector<40x8xf32>
    %177 = arith.mulf %175, %176 : vector<40x8xf32>
    %178 = arith.addf %174, %177 : vector<40x8xf32>
    %179 = arith.mulf %135, %129 : vector<40x8xf32>
    %180 = vector.broadcast %57 : vector<40x1xf32> to vector<40x8xf32>
    %181 = arith.mulf %179, %180 : vector<40x8xf32>
    %182 = arith.mulf %136, %131 : vector<40x8xf32>
    %183 = vector.broadcast %51 : vector<40x1xf32> to vector<40x8xf32>
    %184 = arith.mulf %182, %183 : vector<40x8xf32>
    %185 = arith.addf %181, %184 : vector<40x8xf32>
    %186 = arith.mulf %137, %162 : vector<40x8xf32>
    %cst_58 = arith.constant 0.707106769 : f32
    %187 = vector.broadcast %cst_58 : f32 to vector<40x8xf32>
    %188 = arith.mulf %186, %187 : vector<40x8xf32>
    %189 = arith.addf %185, %188 : vector<40x8xf32>
    %190 = arith.mulf %135, %129 : vector<40x8xf32>
    %191 = vector.broadcast %60 : vector<40x1xf32> to vector<40x8xf32>
    %192 = arith.mulf %190, %191 : vector<40x8xf32>
    %193 = arith.mulf %136, %132 : vector<40x8xf32>
    %194 = vector.broadcast %51 : vector<40x1xf32> to vector<40x8xf32>
    %195 = arith.mulf %193, %194 : vector<40x8xf32>
    %196 = arith.addf %192, %195 : vector<40x8xf32>
    %197 = arith.mulf %137, %167 : vector<40x8xf32>
    %cst_59 = arith.constant 0.707106769 : f32
    %198 = vector.broadcast %cst_59 : f32 to vector<40x8xf32>
    %199 = arith.mulf %197, %198 : vector<40x8xf32>
    %200 = arith.addf %196, %199 : vector<40x8xf32>
    %201 = tpu.concatenate %152, %178, %189, %200 in 1 : vector<40x8xf32>, vector<40x8xf32>, vector<40x8xf32>, vector<40x8xf32> -> vector<40x32xf32>
    %cst_60 = arith.constant dense<0.000000e+00> : vector<16x32xf32>
    %202 = tpu.matmul %69, %201, %cst_60 {dimension_numbers = #tpu.dot_dimension_numbers<[1], [0], [0], [1], [0, 0, 1, 1], [], []>} : vector<16x40xf32>, vector<40x32xf32>, vector<16x32xf32> -> vector<16x32xf32>
    %cst_61 = arith.constant 0.577350259 : f32
    %203 = vector.broadcast %cst_61 : f32 to vector<16x32xf32>
    %204 = arith.mulf %202, %203 : vector<16x32xf32>
    %c0_62 = arith.constant 0 : index
    %c0_63 = arith.constant 0 : index
    %c0_64 = arith.constant 0 : index
    %205 = vector.load %arg12[%c0_62, %c0_63, %c0_64] : memref<2x32x32xf32, #tpu.memory_space<vmem>>, vector<1x32x32xf32>
    %206 = vector.shape_cast %205 : vector<1x32x32xf32> to vector<32x32xf32>
    %cst_65 = arith.constant dense<0.000000e+00> : vector<16x32xf32>
    %207 = tpu.matmul %204, %206, %cst_65 {dimension_numbers = #tpu.dot_dimension_numbers<[1], [0], [0], [1], [0, 0, 1, 1], [], []>} : vector<16x32xf32>, vector<32x32xf32>, vector<16x32xf32> -> vector<16x32xf32>
    %cst_66 = arith.constant 0.353553385 : f32
    %208 = vector.broadcast %cst_66 : f32 to vector<16x32xf32>
    %209 = arith.mulf %207, %208 : vector<16x32xf32>
    %210 = arith.addf %209, %95 : vector<16x32xf32>
    %211 = vector.extract_strided_slice %210 {offsets = [0, 0], sizes = [16, 8], strides = [1, 1]} : vector<16x32xf32> to vector<16x8xf32>
    %212 = arith.negf %211 : vector<16x8xf32>
    %213 = math.exp %212 : vector<16x8xf32>
    %cst_67 = arith.constant 1.000000e+00 : f32
    %214 = vector.broadcast %cst_67 : f32 to vector<16x8xf32>
    %215 = arith.addf %214, %213 : vector<16x8xf32>
    %216 = arith.divf %214, %215 : vector<16x8xf32>
    %217 = tpu.concatenate %216, %216, %216, %216 in 1 : vector<16x8xf32>, vector<16x8xf32>, vector<16x8xf32>, vector<16x8xf32> -> vector<16x32xf32>
    %218 = arith.mulf %210, %217 : vector<16x32xf32>
    %c1 = arith.constant 1 : index
    %c0_68 = arith.constant 0 : index
    %c0_69 = arith.constant 0 : index
    %219 = vector.load %arg7[%c1, %c0_68, %c0_69] : memref<2x32x128xf32, #tpu.memory_space<vmem>>, vector<1x32x128xf32>
    %220 = vector.shape_cast %219 : vector<1x32x128xf32> to vector<32x128xf32>
    %cst_70 = arith.constant dense<0.000000e+00> : vector<16x128xf32>
    %221 = tpu.matmul %218, %220, %cst_70 {dimension_numbers = #tpu.dot_dimension_numbers<[1], [0], [0], [1], [0, 0, 1, 1], [], []>} : vector<16x32xf32>, vector<32x128xf32>, vector<16x128xf32> -> vector<16x128xf32>
    %cst_71 = arith.constant 0.000000e+00 : f32
    %222 = vector.broadcast %cst_71 : f32 to vector<16x32xf32>
    %223 = vector.extract_strided_slice %61 {offsets = [0, 0], sizes = [16, 1], strides = [1, 1]} : vector<16x4xf32> to vector<16x1xf32>
    %224 = vector.extract_strided_slice %221 {offsets = [0, 0], sizes = [16, 32], strides = [1, 1]} : vector<16x128xf32> to vector<16x32xf32>
    %225 = vector.broadcast %223 : vector<16x1xf32> to vector<16x32xf32>
    %226 = arith.mulf %225, %224 : vector<16x32xf32>
    %227 = arith.addf %222, %226 : vector<16x32xf32>
    %228 = vector.extract_strided_slice %61 {offsets = [0, 1], sizes = [16, 1], strides = [1, 1]} : vector<16x4xf32> to vector<16x1xf32>
    %229 = vector.extract_strided_slice %221 {offsets = [0, 32], sizes = [16, 32], strides = [1, 1]} : vector<16x128xf32> to vector<16x32xf32>
    %230 = vector.broadcast %228 : vector<16x1xf32> to vector<16x32xf32>
    %231 = arith.mulf %230, %229 : vector<16x32xf32>
    %232 = arith.addf %227, %231 : vector<16x32xf32>
    %233 = vector.extract_strided_slice %61 {offsets = [0, 2], sizes = [16, 1], strides = [1, 1]} : vector<16x4xf32> to vector<16x1xf32>
    %234 = vector.extract_strided_slice %221 {offsets = [0, 64], sizes = [16, 32], strides = [1, 1]} : vector<16x128xf32> to vector<16x32xf32>
    %235 = vector.broadcast %233 : vector<16x1xf32> to vector<16x32xf32>
    %236 = arith.mulf %235, %234 : vector<16x32xf32>
    %237 = arith.addf %232, %236 : vector<16x32xf32>
    %238 = vector.extract_strided_slice %61 {offsets = [0, 3], sizes = [16, 1], strides = [1, 1]} : vector<16x4xf32> to vector<16x1xf32>
    %239 = vector.extract_strided_slice %221 {offsets = [0, 96], sizes = [16, 32], strides = [1, 1]} : vector<16x128xf32> to vector<16x32xf32>
    %240 = vector.broadcast %238 : vector<16x1xf32> to vector<16x32xf32>
    %241 = arith.mulf %240, %239 : vector<16x32xf32>
    %242 = arith.addf %237, %241 : vector<16x32xf32>
    %cst_72 = arith.constant 0.176776692 : f32
    %243 = vector.broadcast %cst_72 : f32 to vector<16x32xf32>
    %244 = arith.mulf %242, %243 : vector<16x32xf32>
    %c1_73 = arith.constant 1 : index
    %c0_74 = arith.constant 0 : index
    %c0_75 = arith.constant 0 : index
    %245 = vector.load %arg8[%c1_73, %c0_74, %c0_75] : memref<2x32x32xf32, #tpu.memory_space<vmem>>, vector<1x32x32xf32>
    %246 = vector.shape_cast %245 : vector<1x32x32xf32> to vector<32x32xf32>
    %cst_76 = arith.constant dense<0.000000e+00> : vector<16x32xf32>
    %247 = tpu.matmul %218, %246, %cst_76 {dimension_numbers = #tpu.dot_dimension_numbers<[1], [0], [0], [1], [0, 0, 1, 1], [], []>} : vector<16x32xf32>, vector<32x32xf32>, vector<16x32xf32> -> vector<16x32xf32>
    %cst_77 = arith.constant 0.353553385 : f32
    %248 = vector.broadcast %cst_77 : f32 to vector<16x32xf32>
    %249 = arith.mulf %247, %248 : vector<16x32xf32>
    %cst_78 = arith.constant dense<0.000000e+00> : vector<40x32xf32>
    %250 = tpu.matmul %68, %249, %cst_78 {dimension_numbers = #tpu.dot_dimension_numbers<[1], [0], [0], [1], [0, 0, 1, 1], [], []>} : vector<40x16xf32>, vector<16x32xf32>, vector<40x32xf32> -> vector<40x32xf32>
    %c1_79 = arith.constant 1 : index
    %c0_80 = arith.constant 0 : index
    %c0_81 = arith.constant 0 : index
    %251 = vector.load %arg9[%c1_79, %c0_80, %c0_81] : memref<2x8x16xf32, #tpu.memory_space<vmem>>, vector<1x8x16xf32>
    %252 = vector.shape_cast %251 : vector<1x8x16xf32> to vector<8x16xf32>
    %cst_82 = arith.constant dense<0.000000e+00> : vector<40x16xf32>
    %253 = tpu.matmul %50, %252, %cst_82 {dimension_numbers = #tpu.dot_dimension_numbers<[1], [0], [0], [1], [0, 0, 1, 1], [], []>} : vector<40x8xf32>, vector<8x16xf32>, vector<40x16xf32> -> vector<40x16xf32>
    %cst_83 = arith.constant 0.353553385 : f32
    %254 = vector.broadcast %cst_83 : f32 to vector<40x16xf32>
    %255 = arith.mulf %253, %254 : vector<40x16xf32>
    %256 = arith.negf %255 : vector<40x16xf32>
    %257 = math.exp %256 : vector<40x16xf32>
    %cst_84 = arith.constant 1.000000e+00 : f32
    %258 = vector.broadcast %cst_84 : f32 to vector<40x16xf32>
    %259 = arith.addf %258, %257 : vector<40x16xf32>
    %260 = arith.divf %258, %259 : vector<40x16xf32>
    %261 = arith.mulf %255, %260 : vector<40x16xf32>
    %c1_85 = arith.constant 1 : index
    %c0_86 = arith.constant 0 : index
    %c0_87 = arith.constant 0 : index
    %262 = vector.load %arg10[%c1_85, %c0_86, %c0_87] : memref<2x16x16xf32, #tpu.memory_space<vmem>>, vector<1x16x16xf32>
    %263 = vector.shape_cast %262 : vector<1x16x16xf32> to vector<16x16xf32>
    %cst_88 = arith.constant dense<0.000000e+00> : vector<40x16xf32>
    %264 = tpu.matmul %261, %263, %cst_88 {dimension_numbers = #tpu.dot_dimension_numbers<[1], [0], [0], [1], [0, 0, 1, 1], [], []>} : vector<40x16xf32>, vector<16x16xf32>, vector<40x16xf32> -> vector<40x16xf32>
    %cst_89 = arith.constant 2.500000e-01 : f32
    %265 = vector.broadcast %cst_89 : f32 to vector<40x16xf32>
    %266 = arith.mulf %264, %265 : vector<40x16xf32>
    %267 = arith.negf %266 : vector<40x16xf32>
    %268 = math.exp %267 : vector<40x16xf32>
    %cst_90 = arith.constant 1.000000e+00 : f32
    %269 = vector.broadcast %cst_90 : f32 to vector<40x16xf32>
    %270 = arith.addf %269, %268 : vector<40x16xf32>
    %271 = arith.divf %269, %270 : vector<40x16xf32>
    %272 = arith.mulf %266, %271 : vector<40x16xf32>
    %c1_91 = arith.constant 1 : index
    %c0_92 = arith.constant 0 : index
    %c0_93 = arith.constant 0 : index
    %273 = vector.load %arg11[%c1_91, %c0_92, %c0_93] : memref<2x16x40xf32, #tpu.memory_space<vmem>>, vector<1x16x40xf32>
    %274 = vector.shape_cast %273 : vector<1x16x40xf32> to vector<16x40xf32>
    %cst_94 = arith.constant dense<0.000000e+00> : vector<40x40xf32>
    %275 = tpu.matmul %272, %274, %cst_94 {dimension_numbers = #tpu.dot_dimension_numbers<[1], [0], [0], [1], [0, 0, 1, 1], [], []>} : vector<40x16xf32>, vector<16x40xf32>, vector<40x40xf32> -> vector<40x40xf32>
    %cst_95 = arith.constant 2.500000e-01 : f32
    %276 = vector.broadcast %cst_95 : f32 to vector<40x40xf32>
    %277 = arith.mulf %275, %276 : vector<40x40xf32>
    %278 = vector.extract_strided_slice %250 {offsets = [0, 0], sizes = [40, 8], strides = [1, 1]} : vector<40x32xf32> to vector<40x8xf32>
    %279 = vector.extract_strided_slice %250 {offsets = [0, 8], sizes = [40, 8], strides = [1, 1]} : vector<40x32xf32> to vector<40x8xf32>
    %280 = vector.extract_strided_slice %250 {offsets = [0, 16], sizes = [40, 8], strides = [1, 1]} : vector<40x32xf32> to vector<40x8xf32>
    %281 = vector.extract_strided_slice %250 {offsets = [0, 24], sizes = [40, 8], strides = [1, 1]} : vector<40x32xf32> to vector<40x8xf32>
    %282 = vector.extract_strided_slice %277 {offsets = [0, 0], sizes = [40, 8], strides = [1, 1]} : vector<40x40xf32> to vector<40x8xf32>
    %283 = vector.extract_strided_slice %277 {offsets = [0, 8], sizes = [40, 8], strides = [1, 1]} : vector<40x40xf32> to vector<40x8xf32>
    %284 = vector.extract_strided_slice %277 {offsets = [0, 16], sizes = [40, 8], strides = [1, 1]} : vector<40x40xf32> to vector<40x8xf32>
    %285 = vector.extract_strided_slice %277 {offsets = [0, 24], sizes = [40, 8], strides = [1, 1]} : vector<40x40xf32> to vector<40x8xf32>
    %286 = vector.extract_strided_slice %277 {offsets = [0, 32], sizes = [40, 8], strides = [1, 1]} : vector<40x40xf32> to vector<40x8xf32>
    %287 = vector.broadcast %54 : vector<40x1xf32> to vector<40x8xf32>
    %288 = arith.mulf %279, %287 : vector<40x8xf32>
    %289 = vector.broadcast %57 : vector<40x1xf32> to vector<40x8xf32>
    %290 = arith.mulf %280, %289 : vector<40x8xf32>
    %291 = arith.addf %288, %290 : vector<40x8xf32>
    %292 = vector.broadcast %60 : vector<40x1xf32> to vector<40x8xf32>
    %293 = arith.mulf %281, %292 : vector<40x8xf32>
    %294 = arith.addf %291, %293 : vector<40x8xf32>
    %295 = arith.mulf %282, %278 : vector<40x8xf32>
    %296 = vector.broadcast %51 : vector<40x1xf32> to vector<40x8xf32>
    %297 = arith.mulf %295, %296 : vector<40x8xf32>
    %298 = arith.mulf %283, %294 : vector<40x8xf32>
    %cst_96 = arith.constant 0.577350259 : f32
    %299 = vector.broadcast %cst_96 : f32 to vector<40x8xf32>
    %300 = arith.mulf %298, %299 : vector<40x8xf32>
    %301 = arith.addf %297, %300 : vector<40x8xf32>
    %302 = vector.broadcast %60 : vector<40x1xf32> to vector<40x8xf32>
    %303 = arith.mulf %280, %302 : vector<40x8xf32>
    %304 = vector.broadcast %57 : vector<40x1xf32> to vector<40x8xf32>
    %305 = arith.mulf %281, %304 : vector<40x8xf32>
    %306 = arith.subf %303, %305 : vector<40x8xf32>
    %307 = vector.broadcast %54 : vector<40x1xf32> to vector<40x8xf32>
    %308 = arith.mulf %281, %307 : vector<40x8xf32>
    %309 = vector.broadcast %60 : vector<40x1xf32> to vector<40x8xf32>
    %310 = arith.mulf %279, %309 : vector<40x8xf32>
    %311 = arith.subf %308, %310 : vector<40x8xf32>
    %312 = vector.broadcast %57 : vector<40x1xf32> to vector<40x8xf32>
    %313 = arith.mulf %279, %312 : vector<40x8xf32>
    %314 = vector.broadcast %54 : vector<40x1xf32> to vector<40x8xf32>
    %315 = arith.mulf %280, %314 : vector<40x8xf32>
    %316 = arith.subf %313, %315 : vector<40x8xf32>
    %317 = arith.mulf %284, %278 : vector<40x8xf32>
    %318 = vector.broadcast %54 : vector<40x1xf32> to vector<40x8xf32>
    %319 = arith.mulf %317, %318 : vector<40x8xf32>
    %320 = arith.mulf %285, %279 : vector<40x8xf32>
    %321 = vector.broadcast %51 : vector<40x1xf32> to vector<40x8xf32>
    %322 = arith.mulf %320, %321 : vector<40x8xf32>
    %323 = arith.addf %319, %322 : vector<40x8xf32>
    %324 = arith.mulf %286, %306 : vector<40x8xf32>
    %cst_97 = arith.constant 0.707106769 : f32
    %325 = vector.broadcast %cst_97 : f32 to vector<40x8xf32>
    %326 = arith.mulf %324, %325 : vector<40x8xf32>
    %327 = arith.addf %323, %326 : vector<40x8xf32>
    %328 = arith.mulf %284, %278 : vector<40x8xf32>
    %329 = vector.broadcast %57 : vector<40x1xf32> to vector<40x8xf32>
    %330 = arith.mulf %328, %329 : vector<40x8xf32>
    %331 = arith.mulf %285, %280 : vector<40x8xf32>
    %332 = vector.broadcast %51 : vector<40x1xf32> to vector<40x8xf32>
    %333 = arith.mulf %331, %332 : vector<40x8xf32>
    %334 = arith.addf %330, %333 : vector<40x8xf32>
    %335 = arith.mulf %286, %311 : vector<40x8xf32>
    %cst_98 = arith.constant 0.707106769 : f32
    %336 = vector.broadcast %cst_98 : f32 to vector<40x8xf32>
    %337 = arith.mulf %335, %336 : vector<40x8xf32>
    %338 = arith.addf %334, %337 : vector<40x8xf32>
    %339 = arith.mulf %284, %278 : vector<40x8xf32>
    %340 = vector.broadcast %60 : vector<40x1xf32> to vector<40x8xf32>
    %341 = arith.mulf %339, %340 : vector<40x8xf32>
    %342 = arith.mulf %285, %281 : vector<40x8xf32>
    %343 = vector.broadcast %51 : vector<40x1xf32> to vector<40x8xf32>
    %344 = arith.mulf %342, %343 : vector<40x8xf32>
    %345 = arith.addf %341, %344 : vector<40x8xf32>
    %346 = arith.mulf %286, %316 : vector<40x8xf32>
    %cst_99 = arith.constant 0.707106769 : f32
    %347 = vector.broadcast %cst_99 : f32 to vector<40x8xf32>
    %348 = arith.mulf %346, %347 : vector<40x8xf32>
    %349 = arith.addf %345, %348 : vector<40x8xf32>
    %350 = tpu.concatenate %301, %327, %338, %349 in 1 : vector<40x8xf32>, vector<40x8xf32>, vector<40x8xf32>, vector<40x8xf32> -> vector<40x32xf32>
    %cst_100 = arith.constant dense<0.000000e+00> : vector<16x32xf32>
    %351 = tpu.matmul %69, %350, %cst_100 {dimension_numbers = #tpu.dot_dimension_numbers<[1], [0], [0], [1], [0, 0, 1, 1], [], []>} : vector<16x40xf32>, vector<40x32xf32>, vector<16x32xf32> -> vector<16x32xf32>
    %cst_101 = arith.constant 0.577350259 : f32
    %352 = vector.broadcast %cst_101 : f32 to vector<16x32xf32>
    %353 = arith.mulf %351, %352 : vector<16x32xf32>
    %c1_102 = arith.constant 1 : index
    %c0_103 = arith.constant 0 : index
    %c0_104 = arith.constant 0 : index
    %354 = vector.load %arg12[%c1_102, %c0_103, %c0_104] : memref<2x32x32xf32, #tpu.memory_space<vmem>>, vector<1x32x32xf32>
    %355 = vector.shape_cast %354 : vector<1x32x32xf32> to vector<32x32xf32>
    %cst_105 = arith.constant dense<0.000000e+00> : vector<16x32xf32>
    %356 = tpu.matmul %353, %355, %cst_105 {dimension_numbers = #tpu.dot_dimension_numbers<[1], [0], [0], [1], [0, 0, 1, 1], [], []>} : vector<16x32xf32>, vector<32x32xf32>, vector<16x32xf32> -> vector<16x32xf32>
    %cst_106 = arith.constant 0.353553385 : f32
    %357 = vector.broadcast %cst_106 : f32 to vector<16x32xf32>
    %358 = arith.mulf %356, %357 : vector<16x32xf32>
    %359 = arith.addf %358, %244 : vector<16x32xf32>
    %360 = vector.extract_strided_slice %359 {offsets = [0, 0], sizes = [16, 8], strides = [1, 1]} : vector<16x32xf32> to vector<16x8xf32>
    %361 = arith.negf %360 : vector<16x8xf32>
    %362 = math.exp %361 : vector<16x8xf32>
    %cst_107 = arith.constant 1.000000e+00 : f32
    %363 = vector.broadcast %cst_107 : f32 to vector<16x8xf32>
    %364 = arith.addf %363, %362 : vector<16x8xf32>
    %365 = arith.divf %363, %364 : vector<16x8xf32>
    %366 = tpu.concatenate %365, %365, %365, %365 in 1 : vector<16x8xf32>, vector<16x8xf32>, vector<16x8xf32>, vector<16x8xf32> -> vector<16x32xf32>
    %367 = arith.mulf %359, %366 : vector<16x32xf32>
    %368 = arith.addf %367, %218 : vector<16x32xf32>
    %369 = vector.extract_strided_slice %368 {offsets = [0, 0], sizes = [16, 8], strides = [1, 1]} : vector<16x32xf32> to vector<16x8xf32>
    %c0_108 = arith.constant 0 : index
    %c0_109 = arith.constant 0 : index
    %370 = vector.load %arg13[%c0_108, %c0_109] : memref<8x4xf32, #tpu.memory_space<vmem>>, vector<8x4xf32>
    %cst_110 = arith.constant dense<0.000000e+00> : vector<16x4xf32>
    %371 = tpu.matmul %369, %370, %cst_110 {dimension_numbers = #tpu.dot_dimension_numbers<[1], [0], [0], [1], [0, 0, 1, 1], [], []>} : vector<16x8xf32>, vector<8x4xf32>, vector<16x4xf32> -> vector<16x4xf32>
    %cst_111 = arith.constant 0.353553385 : f32
    %372 = vector.broadcast %cst_111 : f32 to vector<16x4xf32>
    %373 = arith.mulf %371, %372 : vector<16x4xf32>
    %c0_112 = arith.constant 0 : index
    %c0_113 = arith.constant 0 : index
    %374 = vector.load %arg14[%c0_112, %c0_113] : memref<4x1xf32, #tpu.memory_space<vmem>>, vector<4x1xf32>
    %cst_114 = arith.constant dense<0.000000e+00> : vector<16x1xf32>
    %375 = tpu.matmul %373, %374, %cst_114 {dimension_numbers = #tpu.dot_dimension_numbers<[1], [0], [0], [1], [0, 0, 1, 1], [], []>} : vector<16x4xf32>, vector<4x1xf32>, vector<16x1xf32> -> vector<16x1xf32>
    %cst_115 = arith.constant 5.000000e-01 : f32
    %376 = vector.broadcast %cst_115 : f32 to vector<16x1xf32>
    %377 = arith.mulf %375, %376 : vector<16x1xf32>
    %c0_116 = arith.constant 0 : index
    %c0_117 = arith.constant 0 : index
    %378 = vector.load %arg15[%c0_116, %c0_117] : memref<16x1xf32, #tpu.memory_space<vmem>>, vector<16x1xf32>
    tpu.vector_store %arg15[%c0_116, %c0_117], %377 {strides = array<i32>} : memref<16x1xf32, #tpu.memory_space<vmem>>, vector<16x1xf32>,
    %c0_118 = arith.constant 0 : index
    %c0_119 = arith.constant 0 : index
    %379 = vector.load %arg5[%c0_118, %c0_119] : memref<2x16xf32, #tpu.memory_space<vmem>>, vector<2x16xf32>
    %cst_120 = arith.constant dense<0.000000e+00> : vector<2x1xf32>
    %380 = tpu.matmul %379, %377, %cst_120 {dimension_numbers = #tpu.dot_dimension_numbers<[1], [0], [0], [1], [0, 0, 1, 1], [], []>} : vector<2x16xf32>, vector<16x1xf32>, vector<2x1xf32> -> vector<2x1xf32>
    %c0_121 = arith.constant 0 : index
    %c0_122 = arith.constant 0 : index
    %381 = vector.load %arg16[%c0_121, %c0_122] : memref<2x1xf32, #tpu.memory_space<vmem>>, vector<2x1xf32>
    tpu.vector_store %arg16[%c0_121, %c0_122], %380 {strides = array<i32>} : memref<2x1xf32, #tpu.memory_space<vmem>>, vector<2x1xf32>,
    return
  }
  func.func @transform_0(%arg0: i32) -> (i32, i32) {
    %c0_i32 = arith.constant 0 : i32
    %c0_i32_0 = arith.constant 0 : i32
    %c0_i32_1 = arith.constant 0 : i32
    return %c0_i32, %c0_i32_0 : i32, i32
  }
  func.func @transform_1(%arg0: i32) -> (i32, i32) {
    %c0_i32 = arith.constant 0 : i32
    %c0_i32_0 = arith.constant 0 : i32
    %c0_i32_1 = arith.constant 0 : i32
    return %c0_i32, %c0_i32_0 : i32, i32
  }
  func.func @transform_2(%arg0: i32) -> (i32, i32) {
    %c0_i32 = arith.constant 0 : i32
    %c0_i32_0 = arith.constant 0 : i32
    %c0_i32_1 = arith.constant 0 : i32
    return %c0_i32, %c0_i32_0 : i32, i32
  }
  func.func @transform_3(%arg0: i32) -> (i32, i32) {
    %c0_i32 = arith.constant 0 : i32
    %c0_i32_0 = arith.constant 0 : i32
    %c0_i32_1 = arith.constant 0 : i32
    return %c0_i32, %c0_i32_0 : i32, i32
  }
  func.func @transform_4(%arg0: i32) -> (i32, i32) {
    %c0_i32 = arith.constant 0 : i32
    %c0_i32_0 = arith.constant 0 : i32
    %c0_i32_1 = arith.constant 0 : i32
    return %c0_i32, %c0_i32_0 : i32, i32
  }
  func.func @transform_5(%arg0: i32) -> (i32, i32) {
    %c0_i32 = arith.constant 0 : i32
    %c0_i32_0 = arith.constant 0 : i32
    %c0_i32_1 = arith.constant 0 : i32
    return %c0_i32, %c0_i32_0 : i32, i32
  }
  func.func @transform_6(%arg0: i32) -> (i32, i32, i32) {
    %c0_i32 = arith.constant 0 : i32
    %c0_i32_0 = arith.constant 0 : i32
    %c0_i32_1 = arith.constant 0 : i32
    %c0_i32_2 = arith.constant 0 : i32
    return %c0_i32, %c0_i32_0, %c0_i32_1 : i32, i32, i32
  }
  func.func @transform_7(%arg0: i32) -> (i32, i32, i32) {
    %c0_i32 = arith.constant 0 : i32
    %c0_i32_0 = arith.constant 0 : i32
    %c0_i32_1 = arith.constant 0 : i32
    %c0_i32_2 = arith.constant 0 : i32
    return %c0_i32, %c0_i32_0, %c0_i32_1 : i32, i32, i32
  }
  func.func @transform_8(%arg0: i32) -> (i32, i32, i32) {
    %c0_i32 = arith.constant 0 : i32
    %c0_i32_0 = arith.constant 0 : i32
    %c0_i32_1 = arith.constant 0 : i32
    %c0_i32_2 = arith.constant 0 : i32
    return %c0_i32, %c0_i32_0, %c0_i32_1 : i32, i32, i32
  }
  func.func @transform_9(%arg0: i32) -> (i32, i32, i32) {
    %c0_i32 = arith.constant 0 : i32
    %c0_i32_0 = arith.constant 0 : i32
    %c0_i32_1 = arith.constant 0 : i32
    %c0_i32_2 = arith.constant 0 : i32
    return %c0_i32, %c0_i32_0, %c0_i32_1 : i32, i32, i32
  }
  func.func @transform_10(%arg0: i32) -> (i32, i32, i32) {
    %c0_i32 = arith.constant 0 : i32
    %c0_i32_0 = arith.constant 0 : i32
    %c0_i32_1 = arith.constant 0 : i32
    %c0_i32_2 = arith.constant 0 : i32
    return %c0_i32, %c0_i32_0, %c0_i32_1 : i32, i32, i32
  }
  func.func @transform_11(%arg0: i32) -> (i32, i32, i32) {
    %c0_i32 = arith.constant 0 : i32
    %c0_i32_0 = arith.constant 0 : i32
    %c0_i32_1 = arith.constant 0 : i32
    %c0_i32_2 = arith.constant 0 : i32
    return %c0_i32, %c0_i32_0, %c0_i32_1 : i32, i32, i32
  }
  func.func @transform_12(%arg0: i32) -> (i32, i32) {
    %c0_i32 = arith.constant 0 : i32
    %c0_i32_0 = arith.constant 0 : i32
    %c0_i32_1 = arith.constant 0 : i32
    return %c0_i32, %c0_i32_0 : i32, i32
  }
  func.func @transform_13(%arg0: i32) -> (i32, i32) {
    %c0_i32 = arith.constant 0 : i32
    %c0_i32_0 = arith.constant 0 : i32
    %c0_i32_1 = arith.constant 0 : i32
    return %c0_i32, %c0_i32_0 : i32, i32
  }
  func.func @transform_14(%arg0: i32) -> (i32, i32) {
    %c0_i32 = arith.constant 0 : i32
    %c0_i32_0 = arith.constant 0 : i32
    %c0_i32_1 = arith.constant 0 : i32
    return %c0_i32, %c0_i32_0 : i32, i32
  }
  func.func @transform_15(%arg0: i32) -> (i32, i32) {
    %c0_i32 = arith.constant 0 : i32
    %c0_i32_0 = arith.constant 0 : i32
    %c0_i32_1 = arith.constant 0 : i32
    return %c0_i32, %c0_i32_0 : i32, i32
  }
}

</mosaic_0001>

<llo_original>
// kernel: tpu_custom_call.1
$region0: #{tpu_custom_call.1}
  #allocation0 [shape = 'u32[]', space=smem, size = 0x4, offset = 0x4, fixed_abs, tag = 'smem constant byte address 0x4 - core index']
  #allocation1 [shape = 'u32[144,128]{1,0:T(1,128)}', space=vmem, size = 0x12000, scoped, tag = 'internal scratch']
  %s0 = inlined_call_operand.vmem [shape: f32[40,3], index: 0, kind: input, shape index: {}]
  %s1 = inlined_call_operand.vmem [shape: f32[16,4], index: 1, kind: input, shape index: {}]
  %s2 = inlined_call_operand.vmem [shape: f32[40,16], index: 2, kind: input, shape index: {}]
  %s3 = inlined_call_operand.hbm [shape: f32[16,40], index: 3, kind: input, shape index: {}]
  %s4 = inlined_call_operand.vmem [shape: f32[2,16], index: 4, kind: input, shape index: {}]
  %s5 = inlined_call_operand.hbm [shape: f32[4,8], index: 5, kind: input, shape index: {}]
  %s6 = inlined_call_operand.vmem [shape: f32[2,32,128], index: 6, kind: input, shape index: {}]
  %s7 = inlined_call_operand.vmem [shape: f32[2,32,32], index: 7, kind: input, shape index: {}]
  %s8 = inlined_call_operand.hbm [shape: f32[2,8,16], index: 8, kind: input, shape index: {}]
  %s9 = inlined_call_operand.vmem [shape: f32[2,16,16], index: 9, kind: input, shape index: {}]
  %s10 = inlined_call_operand.hbm [shape: f32[2,16,40], index: 10, kind: input, shape index: {}]
  %s11 = inlined_call_operand.hbm [shape: f32[2,32,32], index: 11, kind: input, shape index: {}]
  %s12 = inlined_call_operand.vmem [shape: f32[8,4], index: 12, kind: input, shape index: {}]
  %s13 = inlined_call_operand.vmem [shape: f32[4,1], index: 13, kind: input, shape index: {}]
  %s14 = inlined_call_operand.vmem [shape: f32[16,1], index: 14, kind: output, shape index: {0}]
  %s15 = inlined_call_operand.vmem [shape: f32[2,1], index: 15, kind: output, shape index: {1}]
  %16 = xla_tuple %s14, %s15
  %s17 = sld [smem:[#allocation0]]
  $region94: #{tpu_custom_call.1} parent=0
    _
  %s19 = ssub.s32 1, %s17
  %s20 = scalar_select 0, %s19, %s17
  $region1: #{tpu_custom_call.1} parent=0
    #allocation2 [shape = 'u8[8192]{0}', space=vmem, size = 0x2000, scoped, tag = 'input window, operand 3, single buffered']
    #allocation3 [shape = 's32[1]{0}', space=sflag, size = 0x4, scoped, tag = 'scoped memory for tpu_custom_call.1']
    #allocation4 [shape = 'u8[2048]{0}', space=vmem, size = 0x800, scoped, tag = 'input window, operand 5, single buffered']
    #allocation5 [shape = 's32[1]{0}', space=sflag, size = 0x4, scoped, tag = 'scoped memory for tpu_custom_call.1']
    #allocation6 [shape = 'u8[8192]{0}', space=vmem, size = 0x2000, scoped, tag = 'input window, operand 8, single buffered']
    #allocation7 [shape = 'u8[16384]{0}', space=vmem, size = 0x4000, scoped, tag = 'input window, operand 10, single buffered']
    #allocation8 [shape = 's32[1]{0}', space=sflag, size = 0x4, scoped, tag = 'scoped memory for tpu_custom_call.1']
    #allocation9 [shape = 'u8[32768]{0}', space=vmem, size = 0x8000, scoped, tag = 'input window, operand 11, single buffered']
    %21 = vsyncpa [#allocation3], 0
    %22 = vsyncpa [#allocation5], 0
    %23 = vsyncpa [#allocation8], 0
    // Predicated region
    $region2: #{tpu_custom_call.1} parent=1 // pred_check
      _
    $region3: #{tpu_custom_call.1} parent=1 // pred_check_branch
      %25 = sbr.rel (0) target = $region5
    $region4: #{tpu_custom_call.1} parent=1 // pred_region
      _
    $region5: #{tpu_custom_call.1} parent=1 // pred_fallthru
      _
    // Predicated region
    $region6: #{tpu_custom_call.1} parent=1 // pred_check
      _
    $region7: #{tpu_custom_call.1} parent=1 // pred_check_branch
      %27 = sbr.rel (0) target = $region9
    $region8: #{tpu_custom_call.1} parent=1 // pred_region
      _
    $region9: #{tpu_custom_call.1} parent=1 // pred_fallthru
      _
    // Predicated region
    $region10: #{tpu_custom_call.1} parent=1 // pred_check
      _
    $region11: #{tpu_custom_call.1} parent=1 // pred_check_branch
      %29 = sbr.rel (0) target = $region13
    $region12: #{tpu_custom_call.1} parent=1 // pred_region
      _
    $region13: #{tpu_custom_call.1} parent=1 // pred_fallthru
      _
    // Predicated region
    $region14: #{tpu_custom_call.1} parent=1 // pred_check
      _
    $region15: #{tpu_custom_call.1} parent=1 // pred_check_branch
      %31 = sbr.rel (0) target = $region17
    $region16: #{tpu_custom_call.1} parent=1 // pred_region
      %s33 = ssub.s32 256, 256
      %34 = vsyncadd [#allocation3], %s33
      %s35 = sshll.u32 [#allocation2], 4
      %s36 = int_to_ptr.vmem [resolvable:$true] %s35
      %41 = dma.hbm_to_vmem [thread:$0]  %s3, 256, %s36, [#allocation3], 128, 128, 8
    $region17: #{tpu_custom_call.1} parent=1 // pred_fallthru
      _
    // Predicated region
    $region18: #{tpu_custom_call.1} parent=1 // pred_check
      _
    $region19: #{tpu_custom_call.1} parent=1 // pred_check_branch
      %43 = sbr.rel (0) target = $region21
    $region20: #{tpu_custom_call.1} parent=1 // pred_region
      _
    $region21: #{tpu_custom_call.1} parent=1 // pred_fallthru
      _
    // Predicated region
    $region22: #{tpu_custom_call.1} parent=1 // pred_check
      _
    $region23: #{tpu_custom_call.1} parent=1 // pred_check_branch
      %45 = sbr.rel (0) target = $region25
    $region24: #{tpu_custom_call.1} parent=1 // pred_region
      %s47 = ssub.s32 64, 64
      %48 = vsyncadd [#allocation5], %s47
      %s50 = sshll.u32 [#allocation4], 4
      %s51 = int_to_ptr.vmem [resolvable:$true] %s50
      %53 = dma.hbm_to_vmem [thread:$0]  %s5, 64, %s51, [#allocation5]
    $region25: #{tpu_custom_call.1} parent=1 // pred_fallthru
      _
    // Predicated region
    $region26: #{tpu_custom_call.1} parent=1 // pred_check
      _
    $region27: #{tpu_custom_call.1} parent=1 // pred_check_branch
      %55 = sbr.rel (0) target = $region29
    $region28: #{tpu_custom_call.1} parent=1 // pred_region
      _
    $region29: #{tpu_custom_call.1} parent=1 // pred_fallthru
      _
    // Predicated region
    $region30: #{tpu_custom_call.1} parent=1 // pred_check
      _
    $region31: #{tpu_custom_call.1} parent=1 // pred_check_branch
      %57 = sbr.rel (0) target = $region33
    $region32: #{tpu_custom_call.1} parent=1 // pred_region
      _
    $region33: #{tpu_custom_call.1} parent=1 // pred_fallthru
      _
    // Predicated region
    $region34: #{tpu_custom_call.1} parent=1 // pred_check
      _
    $region35: #{tpu_custom_call.1} parent=1 // pred_check_branch
      %59 = sbr.rel (0) target = $region37
    $region36: #{tpu_custom_call.1} parent=1 // pred_region
      %s61 = ssub.s32 256, 256
      %62 = vsyncadd [#allocation5], %s61
      %s63 = sshll.u32 [#allocation6], 4
      %s64 = int_to_ptr.vmem [resolvable:$true] %s63
      %69 = dma.hbm_to_vmem [thread:$0]  %s8, 256, %s64, [#allocation5], 128, 128, 8
    $region37: #{tpu_custom_call.1} parent=1 // pred_fallthru
      _
    // Predicated region
    $region38: #{tpu_custom_call.1} parent=1 // pred_check
      _
    $region39: #{tpu_custom_call.1} parent=1 // pred_check_branch
      %71 = sbr.rel (0) target = $region41
    $region40: #{tpu_custom_call.1} parent=1 // pred_region
      _
    $region41: #{tpu_custom_call.1} parent=1 // pred_fallthru
      _
    // Predicated region
    $region42: #{tpu_custom_call.1} parent=1 // pred_check
      _
    $region43: #{tpu_custom_call.1} parent=1 // pred_check_branch
      %73 = sbr.rel (0) target = $region45
    $region44: #{tpu_custom_call.1} parent=1 // pred_region
      %s75 = ssub.s32 512, 512
      %76 = vsyncadd [#allocation8], %s75
      %s77 = sshll.u32 [#allocation7], 4
      %s78 = int_to_ptr.vmem [resolvable:$true] %s77
      %83 = dma.hbm_to_vmem [thread:$0]  %s10, 512, %s78, [#allocation8], 128, 128, 8
    $region45: #{tpu_custom_call.1} parent=1 // pred_fallthru
      _
    // Predicated region
    $region46: #{tpu_custom_call.1} parent=1 // pred_check
      _
    $region47: #{tpu_custom_call.1} parent=1 // pred_check_branch
      %85 = sbr.rel (0) target = $region49
    $region48: #{tpu_custom_call.1} parent=1 // pred_region
      %s87 = ssub.s32 1024, 1024
      %88 = vsyncadd [#allocation8], %s87
      %s89 = sshll.u32 [#allocation9], 4
      %s90 = int_to_ptr.vmem [resolvable:$true] %s89
      %95 = dma.hbm_to_vmem [thread:$0]  %s11, 1024, %s90, [#allocation8], 128, 128, 8
    $region49: #{tpu_custom_call.1} parent=1 // pred_fallthru
      _
    // Predicated region
    $region50: #{tpu_custom_call.1} parent=1 // pred_check
      _
    $region51: #{tpu_custom_call.1} parent=1 // pred_check_branch
      %97 = sbr.rel (0) target = $region53
    $region52: #{tpu_custom_call.1} parent=1 // pred_region
      _
    $region53: #{tpu_custom_call.1} parent=1 // pred_fallthru
      _
    // Predicated region
    $region54: #{tpu_custom_call.1} parent=1 // pred_check
      _
    $region55: #{tpu_custom_call.1} parent=1 // pred_check_branch
      %99 = sbr.rel (0) target = $region57
    $region56: #{tpu_custom_call.1} parent=1 // pred_region
      _
    $region57: #{tpu_custom_call.1} parent=1 // pred_fallthru
      _
    // Predicated region
    $region58: #{tpu_custom_call.1} parent=1 // pred_check
      _
    $region59: #{tpu_custom_call.1} parent=1 // pred_check_branch
      %101 = sbr.rel (0) target = $region61
    $region60: #{tpu_custom_call.1} parent=1 // pred_region
      %102 = dma.done [#allocation3], 256
    $region61: #{tpu_custom_call.1} parent=1 // pred_fallthru
      _
    // Predicated region
    $region62: #{tpu_custom_call.1} parent=1 // pred_check
      _
    $region63: #{tpu_custom_call.1} parent=1 // pred_check_branch
      %104 = sbr.rel (0) target = $region65
    $region64: #{tpu_custom_call.1} parent=1 // pred_region
      %105 = dma.done [#allocation5], 64
    $region65: #{tpu_custom_call.1} parent=1 // pred_fallthru
      _
    // Predicated region
    $region66: #{tpu_custom_call.1} parent=1 // pred_check
      _
    $region67: #{tpu_custom_call.1} parent=1 // pred_check_branch
      %107 = sbr.rel (0) target = $region69
    $region68: #{tpu_custom_call.1} parent=1 // pred_region
      %108 = dma.done [#allocation5], 256
    $region69: #{tpu_custom_call.1} parent=1 // pred_fallthru
      _
    // Predicated region
    $region70: #{tpu_custom_call.1} parent=1 // pred_check
      _
    $region71: #{tpu_custom_call.1} parent=1 // pred_check_branch
      %110 = sbr.rel (0) target = $region73
    $region72: #{tpu_custom_call.1} parent=1 // pred_region
      %111 = dma.done [#allocation8], 512
    $region73: #{tpu_custom_call.1} parent=1 // pred_fallthru
      _
    // Predicated region
    $region74: #{tpu_custom_call.1} parent=1 // pred_check
      _
    $region75: #{tpu_custom_call.1} parent=1 // pred_check_branch
      %113 = sbr.rel (0) target = $region77
    $region76: #{tpu_custom_call.1} parent=1 // pred_region
      %114 = dma.done [#allocation8], 1024
    $region77: #{tpu_custom_call.1} parent=1 // pred_fallthru
      _
    %v115 = vld [vmem:[%s0] sm:$0xff]
    %v116 = vld [vmem:[%s0 + $0x8] sm:$0xff]
    %v117 = vld [vmem:[%s0 + $0x10] sm:$0xff]
    %v118 = vld [vmem:[%s0 + $0x18] sm:$0xff]
    %v119 = vld [vmem:[%s0 + $0x20] sm:$0xff]
    %v120 = vmul.f32 %v115, %v115
    %v121 = vmul.f32 %v116, %v116
    %v122 = vmul.f32 %v117, %v117
    %v123 = vmul.f32 %v118, %v118
    %v124 = vmul.f32 %v119, %v119
    %130 = vrot.lane.b32.xlu0 %v120, 127
    %v131 = vpop.permute.xlu0 %130
    %132 = vrot.lane.b32.xlu0 %v121, 127
    %v133 = vpop.permute.xlu0 %132
    %134 = vrot.lane.b32.xlu0 %v122, 127
    %v135 = vpop.permute.xlu0 %134
    %136 = vrot.lane.b32.xlu0 %v123, 127
    %v137 = vpop.permute.xlu0 %136
    %138 = vrot.lane.b32.xlu0 %v124, 127
    %v139 = vpop.permute.xlu0 %138
    %v145 = vadd.f32 %v120, %v131
    %v146 = vadd.f32 %v121, %v133
    %v147 = vadd.f32 %v122, %v135
    %v148 = vadd.f32 %v123, %v137
    %v149 = vadd.f32 %v124, %v139
    %150 = vrot.lane.b32.xlu0 %v120, 126
    %v151 = vpop.permute.xlu0 %150
    %152 = vrot.lane.b32.xlu0 %v121, 126
    %v153 = vpop.permute.xlu0 %152
    %154 = vrot.lane.b32.xlu0 %v122, 126
    %v155 = vpop.permute.xlu0 %154
    %156 = vrot.lane.b32.xlu0 %v123, 126
    %v157 = vpop.permute.xlu0 %156
    %158 = vrot.lane.b32.xlu0 %v124, 126
    %v159 = vpop.permute.xlu0 %158
    %v165 = vadd.f32 %v145, %v151
    %v166 = vadd.f32 %v146, %v153
    %v167 = vadd.f32 %v147, %v155
    %v168 = vadd.f32 %v148, %v157
    %v169 = vadd.f32 %v149, %v159
    %v170 = vrsqrt.pop %v165
    %v171 = vmul.f32 %v165, %v170
    %vm172 = vcmp.eq.f32.partialorder %v165, inf
    %v173 = vsel %vm172, %v165, %v171
    %vm174 = vcmp.eq.f32.partialorder %v165, 0.0
    %v175 = vand.u32 %v165, 2147483648
    %v176 = vsel %vm174, %v175, %v173
    %v177 = vrsqrt.pop %v166
    %v178 = vmul.f32 %v166, %v177
    %vm179 = vcmp.eq.f32.partialorder %v166, inf
    %v180 = vsel %vm179, %v166, %v178
    %vm181 = vcmp.eq.f32.partialorder %v166, 0.0
    %v182 = vand.u32 %v166, 2147483648
    %v183 = vsel %vm181, %v182, %v180
    %v184 = vrsqrt.pop %v167
    %v185 = vmul.f32 %v167, %v184
    %vm186 = vcmp.eq.f32.partialorder %v167, inf
    %v187 = vsel %vm186, %v167, %v185
    %vm188 = vcmp.eq.f32.partialorder %v167, 0.0
    %v189 = vand.u32 %v167, 2147483648
    %v190 = vsel %vm188, %v189, %v187
    %v191 = vrsqrt.pop %v168
    %v192 = vmul.f32 %v168, %v191
    %vm193 = vcmp.eq.f32.partialorder %v168, inf
    %v194 = vsel %vm193, %v168, %v192
    %vm195 = vcmp.eq.f32.partialorder %v168, 0.0
    %v196 = vand.u32 %v168, 2147483648
    %v197 = vsel %vm195, %v196, %v194
    %v198 = vrsqrt.pop %v169
    %v199 = vmul.f32 %v169, %v198
    %vm200 = vcmp.eq.f32.partialorder %v169, inf
    %v201 = vsel %vm200, %v169, %v199
    %vm202 = vcmp.eq.f32.partialorder %v169, 0.0
    %v203 = vand.u32 %v169, 2147483648
    %v204 = vsel %vm202, %v203, %v201
    %v205 = vmax.f32 %v176, 1e-06
    %v206 = vmax.f32 %v183, 1e-06
    %v207 = vmax.f32 %v190, 1e-06
    %v208 = vmax.f32 %v197, 1e-06
    %v209 = vmax.f32 %v204, 1e-06
    %v210 = vrcp.pop %v205
    %v211 = vmul.f32 1.0, %v210
    %v212 = vrcp.pop %v206
    %v213 = vmul.f32 1.0, %v212
    %v214 = vrcp.pop %v207
    %v215 = vmul.f32 1.0, %v214
    %v216 = vrcp.pop %v208
    %v217 = vmul.f32 1.0, %v216
    %v218 = vrcp.pop %v209
    %v219 = vmul.f32 1.0, %v218
    %v220 = vlaneseq
    %v221 = vand.u32 %v220, 127
    %v222 = vcvt.s32.f32 %v221
    %v223 = vadd.f32 %v222, 1.0
    %v224 = vmul.f32 %v223, 0.7853982
    %226 = vset.pattern.permute.xlu0 0
    %227 = vperm.xlu0 %226, %v176
    %v228 = vpop.permute.xlu0 %227
    %231 = vset.pattern.permute.xlu0 0
    %232 = vperm.xlu0 %231, %v183
    %v233 = vpop.permute.xlu0 %232
    %236 = vset.pattern.permute.xlu0 0
    %237 = vperm.xlu0 %236, %v190
    %v238 = vpop.permute.xlu0 %237
    %241 = vset.pattern.permute.xlu0 0
    %242 = vperm.xlu0 %241, %v197
    %v243 = vpop.permute.xlu0 %242
    %246 = vset.pattern.permute.xlu0 0
    %247 = vperm.xlu0 %246, %v204
    %v248 = vpop.permute.xlu0 %247
    %v250 = vmul.f32 %v228, %v224
    %v251 = vmul.f32 %v233, %v224
    %v252 = vmul.f32 %v238, %v224
    %v253 = vmul.f32 %v243, %v224
    %v254 = vmul.f32 %v248, %v224
    %v255 = vand.u32 2147483647, %v250
    %vm256 = vcmp.le.f32.partialorder %v255, 0.7853982
    %vm257 = vcmp.lt.s32.totalorder %v250, 0
    %v258 = vand.u32 %v250, 2139095040
    %v259 = vshrl.u32 %v258, 23
    %v260 = vsub.s32 %v259, 127
    %v261 = vand.u32 2147483647, %v250
    %v262 = vand.u32 %v261, 8388607
    %v263 = vor.u32 %v262, 8388608
    %v264 = vsub.s32 0, %v263
    %v265 = vadd.s32 %v260, 1
    %vm266 = vcmp.gt.s32.totalorder %v265, 0
    %v267 = vsel %vm266, %v265, 0
    %v268 = vshrl.u32 %v267, 5
    %v269 = vand.u32 %v267, 31
    %v270 = vsub.s32 32, %v269
    %v271 = vshrl.u32 683565275, %v270
    %v272 = vshll.u32 683565275, %v269
    %v273 = vshrl.u32 2475754826, %v270
    %v274 = vor.u32 %v272, %v273
    %v275 = vshll.u32 2475754826, %v269
    %v276 = vshrl.u32 2131351028, %v270
    %v277 = vor.u32 %v275, %v276
    %v278 = vshll.u32 2131351028, %v269
    %v279 = vshrl.u32 2102212464, %v270
    %v280 = vor.u32 %v278, %v279
    %v281 = vshll.u32 2102212464, %v269
    %v282 = vshrl.u32 920167782, %v270
    %v283 = vor.u32 %v281, %v282
    %v284 = vshll.u32 920167782, %v269
    %v285 = vshrl.u32 1326507024, %v270
    %v286 = vor.u32 %v284, %v285
    %vm287 = vcmp.lt.s32.totalorder %v268, 1
    %vm288 = vcmp.lt.s32.totalorder %v268, 2
    %vm289 = vcmp.lt.s32.totalorder %v268, 3
    %vm290 = vcmp.lt.s32.totalorder %v268, 4
    %v291 = vsel %vm287, %v271, %v274
    %v292 = vsel %vm290, %v280, 2102212464
    %v293 = vsel %vm289, %v277, %v292
    %v294 = vsel %vm288, %v291, %v293
    %v295 = vsel %vm287, %v274, %v277
    %v296 = vsel %vm290, %v283, 920167782
    %v297 = vsel %vm289, %v280, %v296
    %v298 = vsel %vm288, %v295, %v297
    %v299 = vsel %vm287, %v277, %v280
    %v300 = vsel %vm290, %v286, 1326507024
    %v301 = vsel %vm289, %v283, %v300
    %v302 = vsel %vm288, %v299, %v301
    %v303 = vshll.u32 %v263, 8
    %v304 = vmul.u32.u64.compose %v303, %v302
    %v305 = vextract.low.u32 %v304
    %v306 = vextract.high.u32 %v304
    %v307 = vmul.u32.u64.compose %v303, %v298
    %v308 = vextract.low.u32 %v307
    %v309 = vextract.high.u32 %v307
    %v310 = vmul.u32 %v303, %v294
    %v311 = vadd.s32 %v306, %v308
    %vm312 = vc.u32 %v306, %v308
    %v313 = vadd.s32 %v309, 1
    %v314 = vsel %vm312, %v313, %v309
    %v315 = vadd.s32 %v310, %v314
    %v316 = vadd.s32 %v315, 536870912
    %v317 = vshrl.u32 %v316, 30
    %v318 = vshll.u32 %v317, 30
    %v319 = vsub.s32 %v315, %v318
    %vm320 = vcmp.lt.s32.totalorder %v319, 0
    %v321 = vsub.s32 0, %v319
    %v322 = vsel %vm320, %v321, %v319
    %v323 = vclz %v322
    %v324 = vsub.s32 %v323, 2
    %vm325 = vcmp.gt.s32.totalorder 0, %v324
    %v326 = vsel %vm325, 0, %v324
    %v327 = vsub.s32 32, %v326
    %v328 = vshll.u32 %v319, %v326
    %v329 = vshrl.u32 %v311, %v327
    %v330 = vor.u32 %v328, %v329
    %v331 = vsub.s32 4294967266, %v326
    %v332 = vadd.s32 %v331, 127
    %v333 = vshll.u32 %v332, 23
    %v334 = vor.u32 4788187, %v333
    %v335 = vand.u32 2147483647, %v334
    %v337 = vcvt.s32.f32 %v330
    %v338 = vmul.f32 %v337, %v335
    %v339 = vxor.u32 %v338, 2147483648
    %v340 = vsel %vm257, %v339, %v338
    %v341 = vsub.s32 4, %v317
    %v342 = vsel %vm257, %v341, %v317
    %v343 = vsel %vm256, %v250, %v340
    %v344 = vsel %vm256, 0, %v342
    %v345 = vcosq.f32.pop %v343
    %v346 = vsinq.f32.pop %v343
    %vm347 = vweird.f32 %v250
    %v348 = vadd.s32 %v344, 3
    %v349 = vand.u32 %v348, 3
    %vm350 = vcmp.lt.s32.totalorder %v349, 2
    %vm351 = vcmp.eq.s32.totalorder %v349, 0
    %v352 = vxor.u32 %v346, 2147483648
    %v353 = vsel %vm351, %v345, %v352
    %vm354 = vcmp.eq.s32.totalorder %v349, 2
    %v355 = vxor.u32 %v345, 2147483648
    %v356 = vsel %vm354, %v355, %v346
    %v357 = vsel %vm350, %v353, %v356
    %v358 = vsel %vm347, nan, %v357
    %v359 = vand.u32 2147483647, %v251
    %vm360 = vcmp.le.f32.partialorder %v359, 0.7853982
    %vm361 = vcmp.lt.s32.totalorder %v251, 0
    %v362 = vand.u32 %v251, 2139095040
    %v363 = vshrl.u32 %v362, 23
    %v364 = vsub.s32 %v363, 127
    %v365 = vand.u32 2147483647, %v251
    %v366 = vand.u32 %v365, 8388607
    %v367 = vor.u32 %v366, 8388608
    %v368 = vsub.s32 0, %v367
    %v369 = vadd.s32 %v364, 1
    %vm370 = vcmp.gt.s32.totalorder %v369, 0
    %v371 = vsel %vm370, %v369, 0
    %v372 = vshrl.u32 %v371, 5
    %v373 = vand.u32 %v371, 31
    %v374 = vsub.s32 32, %v373
    %v375 = vshrl.u32 683565275, %v374
    %v376 = vshll.u32 683565275, %v373
    %v377 = vshrl.u32 2475754826, %v374
    %v378 = vor.u32 %v376, %v377
    %v379 = vshll.u32 2475754826, %v373
    %v380 = vshrl.u32 2131351028, %v374
    %v381 = vor.u32 %v379, %v380
    %v382 = vshll.u32 2131351028, %v373
    %v383 = vshrl.u32 2102212464, %v374
    %v384 = vor.u32 %v382, %v383
    %v385 = vshll.u32 2102212464, %v373
    %v386 = vshrl.u32 920167782, %v374
    %v387 = vor.u32 %v385, %v386
    %v388 = vshll.u32 920167782, %v373
    %v389 = vshrl.u32 1326507024, %v374
    %v390 = vor.u32 %v388, %v389
    %vm391 = vcmp.lt.s32.totalorder %v372, 1
    %vm392 = vcmp.lt.s32.totalorder %v372, 2
    %vm393 = vcmp.lt.s32.totalorder %v372, 3
    %vm394 = vcmp.lt.s32.totalorder %v372, 4
    %v395 = vsel %vm391, %v375, %v378
    %v396 = vsel %vm394, %v384, 2102212464
    %v397 = vsel %vm393, %v381, %v396
    %v398 = vsel %vm392, %v395, %v397
    %v399 = vsel %vm391, %v378, %v381
    %v400 = vsel %vm394, %v387, 920167782
    %v401 = vsel %vm393, %v384, %v400
    %v402 = vsel %vm392, %v399, %v401
    %v403 = vsel %vm391, %v381, %v384
    %v404 = vsel %vm394, %v390, 1326507024
    %v405 = vsel %vm393, %v387, %v404
    %v406 = vsel %vm392, %v403, %v405
    %v407 = vshll.u32 %v367, 8
    %v408 = vmul.u32.u64.compose %v407, %v406
    %v409 = vextract.low.u32 %v408
    %v410 = vextract.high.u32 %v408
    %v411 = vmul.u32.u64.compose %v407, %v402
    %v412 = vextract.low.u32 %v411
    %v413 = vextract.high.u32 %v411
    %v414 = vmul.u32 %v407, %v398
    %v415 = vadd.s32 %v410, %v412
    %vm416 = vc.u32 %v410, %v412
    %v417 = vadd.s32 %v413, 1
    %v418 = vsel %vm416, %v417, %v413
    %v419 = vadd.s32 %v414, %v418
    %v420 = vadd.s32 %v419, 536870912
    %v421 = vshrl.u32 %v420, 30
    %v422 = vshll.u32 %v421, 30
    %v423 = vsub.s32 %v419, %v422
    %vm424 = vcmp.lt.s32.totalorder %v423, 0
    %v425 = vsub.s32 0, %v423
    %v426 = vsel %vm424, %v425, %v423
    %v427 = vclz %v426
    %v428 = vsub.s32 %v427, 2
    %vm429 = vcmp.gt.s32.totalorder 0, %v428
    %v430 = vsel %vm429, 0, %v428
    %v431 = vsub.s32 32, %v430
    %v432 = vshll.u32 %v423, %v430
    %v433 = vshrl.u32 %v415, %v431
    %v434 = vor.u32 %v432, %v433
    %v435 = vsub.s32 4294967266, %v430
    %v436 = vadd.s32 %v435, 127
    %v437 = vshll.u32 %v436, 23
    %v438 = vor.u32 4788187, %v437
    %v439 = vand.u32 2147483647, %v438
    %v441 = vcvt.s32.f32 %v434
    %v442 = vmul.f32 %v441, %v439
    %v443 = vxor.u32 %v442, 2147483648
    %v444 = vsel %vm361, %v443, %v442
    %v445 = vsub.s32 4, %v421
    %v446 = vsel %vm361, %v445, %v421
    %v447 = vsel %vm360, %v251, %v444
    %v448 = vsel %vm360, 0, %v446
    %v449 = vcosq.f32.pop %v447
    %v450 = vsinq.f32.pop %v447
    %vm451 = vweird.f32 %v251
    %v452 = vadd.s32 %v448, 3
    %v453 = vand.u32 %v452, 3
    %vm454 = vcmp.lt.s32.totalorder %v453, 2
    %vm455 = vcmp.eq.s32.totalorder %v453, 0
    %v456 = vxor.u32 %v450, 2147483648
    %v457 = vsel %vm455, %v449, %v456
    %vm458 = vcmp.eq.s32.totalorder %v453, 2
    %v459 = vxor.u32 %v449, 2147483648
    %v460 = vsel %vm458, %v459, %v450
    %v461 = vsel %vm454, %v457, %v460
    %v462 = vsel %vm451, nan, %v461
    %v463 = vand.u32 2147483647, %v252
    %vm464 = vcmp.le.f32.partialorder %v463, 0.7853982
    %vm465 = vcmp.lt.s32.totalorder %v252, 0
    %v466 = vand.u32 %v252, 2139095040
    %v467 = vshrl.u32 %v466, 23
    %v468 = vsub.s32 %v467, 127
    %v469 = vand.u32 2147483647, %v252
    %v470 = vand.u32 %v469, 8388607
    %v471 = vor.u32 %v470, 8388608
    %v472 = vsub.s32 0, %v471
    %v473 = vadd.s32 %v468, 1
    %vm474 = vcmp.gt.s32.totalorder %v473, 0
    %v475 = vsel %vm474, %v473, 0
    %v476 = vshrl.u32 %v475, 5
    %v477 = vand.u32 %v475, 31
    %v478 = vsub.s32 32, %v477
    %v479 = vshrl.u32 683565275, %v478
    %v480 = vshll.u32 683565275, %v477
    %v481 = vshrl.u32 2475754826, %v478
    %v482 = vor.u32 %v480, %v481
    %v483 = vshll.u32 2475754826, %v477
    %v484 = vshrl.u32 2131351028, %v478
    %v485 = vor.u32 %v483, %v484
    %v486 = vshll.u32 2131351028, %v477
    %v487 = vshrl.u32 2102212464, %v478
    %v488 = vor.u32 %v486, %v487
    %v489 = vshll.u32 2102212464, %v477
    %v490 = vshrl.u32 920167782, %v478
    %v491 = vor.u32 %v489, %v490
    %v492 = vshll.u32 920167782, %v477
    %v493 = vshrl.u32 1326507024, %v478
    %v494 = vor.u32 %v492, %v493
    %vm495 = vcmp.lt.s32.totalorder %v476, 1
    %vm496 = vcmp.lt.s32.totalorder %v476, 2
    %vm497 = vcmp.lt.s32.totalorder %v476, 3
    %vm498 = vcmp.lt.s32.totalorder %v476, 4
    %v499 = vsel %vm495, %v479, %v482
    %v500 = vsel %vm498, %v488, 2102212464
    %v501 = vsel %vm497, %v485, %v500
    %v502 = vsel %vm496, %v499, %v501
    %v503 = vsel %vm495, %v482, %v485
    %v504 = vsel %vm498, %v491, 920167782
    %v505 = vsel %vm497, %v488, %v504
    %v506 = vsel %vm496, %v503, %v505
    %v507 = vsel %vm495, %v485, %v488
    %v508 = vsel %vm498, %v494, 1326507024
    %v509 = vsel %vm497, %v491, %v508
    %v510 = vsel %vm496, %v507, %v509
    %v511 = vshll.u32 %v471, 8
    %v512 = vmul.u32.u64.compose %v511, %v510
    %v513 = vextract.low.u32 %v512
    %v514 = vextract.high.u32 %v512
    %v515 = vmul.u32.u64.compose %v511, %v506
    %v516 = vextract.low.u32 %v515
    %v517 = vextract.high.u32 %v515
    %v518 = vmul.u32 %v511, %v502
    %v519 = vadd.s32 %v514, %v516
    %vm520 = vc.u32 %v514, %v516
    %v521 = vadd.s32 %v517, 1
    %v522 = vsel %vm520, %v521, %v517
    %v523 = vadd.s32 %v518, %v522
    %v524 = vadd.s32 %v523, 536870912
    %v525 = vshrl.u32 %v524, 30
    %v526 = vshll.u32 %v525, 30
    %v527 = vsub.s32 %v523, %v526
    %vm528 = vcmp.lt.s32.totalorder %v527, 0
    %v529 = vsub.s32 0, %v527
    %v530 = vsel %vm528, %v529, %v527
    %v531 = vclz %v530
    %v532 = vsub.s32 %v531, 2
    %vm533 = vcmp.gt.s32.totalorder 0, %v532
    %v534 = vsel %vm533, 0, %v532
    %v535 = vsub.s32 32, %v534
    %v536 = vshll.u32 %v527, %v534
    %v537 = vshrl.u32 %v519, %v535
    %v538 = vor.u32 %v536, %v537
    %v539 = vsub.s32 4294967266, %v534
    %v540 = vadd.s32 %v539, 127
    %v541 = vshll.u32 %v540, 23
    %v542 = vor.u32 4788187, %v541
    %v543 = vand.u32 2147483647, %v542
    %v545 = vcvt.s32.f32 %v538
    %v546 = vmul.f32 %v545, %v543
    %v547 = vxor.u32 %v546, 2147483648
    %v548 = vsel %vm465, %v547, %v546
    %v549 = vsub.s32 4, %v525
    %v550 = vsel %vm465, %v549, %v525
    %v551 = vsel %vm464, %v252, %v548
    %v552 = vsel %vm464, 0, %v550
    %v553 = vcosq.f32.pop %v551
    %v554 = vsinq.f32.pop %v551
    %vm555 = vweird.f32 %v252
    %v556 = vadd.s32 %v552, 3
    %v557 = vand.u32 %v556, 3
    %vm558 = vcmp.lt.s32.totalorder %v557, 2
    %vm559 = vcmp.eq.s32.totalorder %v557, 0
    %v560 = vxor.u32 %v554, 2147483648
    %v561 = vsel %vm559, %v553, %v560
    %vm562 = vcmp.eq.s32.totalorder %v557, 2
    %v563 = vxor.u32 %v553, 2147483648
    %v564 = vsel %vm562, %v563, %v554
    %v565 = vsel %vm558, %v561, %v564
    %v566 = vsel %vm555, nan, %v565
    %v567 = vand.u32 2147483647, %v253
    %vm568 = vcmp.le.f32.partialorder %v567, 0.7853982
    %vm569 = vcmp.lt.s32.totalorder %v253, 0
    %v570 = vand.u32 %v253, 2139095040
    %v571 = vshrl.u32 %v570, 23
    %v572 = vsub.s32 %v571, 127
    %v573 = vand.u32 2147483647, %v253
    %v574 = vand.u32 %v573, 8388607
    %v575 = vor.u32 %v574, 8388608
    %v576 = vsub.s32 0, %v575
    %v577 = vadd.s32 %v572, 1
    %vm578 = vcmp.gt.s32.totalorder %v577, 0
    %v579 = vsel %vm578, %v577, 0
    %v580 = vshrl.u32 %v579, 5
    %v581 = vand.u32 %v579, 31
    %v582 = vsub.s32 32, %v581
    %v583 = vshrl.u32 683565275, %v582
    %v584 = vshll.u32 683565275, %v581
    %v585 = vshrl.u32 2475754826, %v582
    %v586 = vor.u32 %v584, %v585
    %v587 = vshll.u32 2475754826, %v581
    %v588 = vshrl.u32 2131351028, %v582
    %v589 = vor.u32 %v587, %v588
    %v590 = vshll.u32 2131351028, %v581
    %v591 = vshrl.u32 2102212464, %v582
    %v592 = vor.u32 %v590, %v591
    %v593 = vshll.u32 2102212464, %v581
    %v594 = vshrl.u32 920167782, %v582
    %v595 = vor.u32 %v593, %v594
    %v596 = vshll.u32 920167782, %v581
    %v597 = vshrl.u32 1326507024, %v582
    %v598 = vor.u32 %v596, %v597
    %vm599 = vcmp.lt.s32.totalorder %v580, 1
    %vm600 = vcmp.lt.s32.totalorder %v580, 2
    %vm601 = vcmp.lt.s32.totalorder %v580, 3
    %vm602 = vcmp.lt.s32.totalorder %v580, 4
    %v603 = vsel %vm599, %v583, %v586
    %v604 = vsel %vm602, %v592, 2102212464
    %v605 = vsel %vm601, %v589, %v604
    %v606 = vsel %vm600, %v603, %v605
    %v607 = vsel %vm599, %v586, %v589
    %v608 = vsel %vm602, %v595, 920167782
    %v609 = vsel %vm601, %v592, %v608
    %v610 = vsel %vm600, %v607, %v609
    %v611 = vsel %vm599, %v589, %v592
    %v612 = vsel %vm602, %v598, 1326507024
    %v613 = vsel %vm601, %v595, %v612
    %v614 = vsel %vm600, %v611, %v613
    %v615 = vshll.u32 %v575, 8
    %v616 = vmul.u32.u64.compose %v615, %v614
    %v617 = vextract.low.u32 %v616
    %v618 = vextract.high.u32 %v616
    %v619 = vmul.u32.u64.compose %v615, %v610
    %v620 = vextract.low.u32 %v619
    %v621 = vextract.high.u32 %v619
    %v622 = vmul.u32 %v615, %v606
    %v623 = vadd.s32 %v618, %v620
    %vm624 = vc.u32 %v618, %v620
    %v625 = vadd.s32 %v621, 1
    %v626 = vsel %vm624, %v625, %v621
    %v627 = vadd.s32 %v622, %v626
    %v628 = vadd.s32 %v627, 536870912
    %v629 = vshrl.u32 %v628, 30
    %v630 = vshll.u32 %v629, 30
    %v631 = vsub.s32 %v627, %v630
    %vm632 = vcmp.lt.s32.totalorder %v631, 0
    %v633 = vsub.s32 0, %v631
    %v634 = vsel %vm632, %v633, %v631
    %v635 = vclz %v634
    %v636 = vsub.s32 %v635, 2
    %vm637 = vcmp.gt.s32.totalorder 0, %v636
    %v638 = vsel %vm637, 0, %v636
    %v639 = vsub.s32 32, %v638
    %v640 = vshll.u32 %v631, %v638
    %v641 = vshrl.u32 %v623, %v639
    %v642 = vor.u32 %v640, %v641
    %v643 = vsub.s32 4294967266, %v638
    %v644 = vadd.s32 %v643, 127
    %v645 = vshll.u32 %v644, 23
    %v646 = vor.u32 4788187, %v645
    %v647 = vand.u32 2147483647, %v646
    %v649 = vcvt.s32.f32 %v642
    %v650 = vmul.f32 %v649, %v647
    %v651 = vxor.u32 %v650, 2147483648
    %v652 = vsel %vm569, %v651, %v650
    %v653 = vsub.s32 4, %v629
    %v654 = vsel %vm569, %v653, %v629
    %v655 = vsel %vm568, %v253, %v652
    %v656 = vsel %vm568, 0, %v654
    %v657 = vcosq.f32.pop %v655
    %v658 = vsinq.f32.pop %v655
    %vm659 = vweird.f32 %v253
    %v660 = vadd.s32 %v656, 3
    %v661 = vand.u32 %v660, 3
    %vm662 = vcmp.lt.s32.totalorder %v661, 2
    %vm663 = vcmp.eq.s32.totalorder %v661, 0
    %v664 = vxor.u32 %v658, 2147483648
    %v665 = vsel %vm663, %v657, %v664
    %vm666 = vcmp.eq.s32.totalorder %v661, 2
    %v667 = vxor.u32 %v657, 2147483648
    %v668 = vsel %vm666, %v667, %v658
    %v669 = vsel %vm662, %v665, %v668
    %v670 = vsel %vm659, nan, %v669
    %v671 = vand.u32 2147483647, %v254
    %vm672 = vcmp.le.f32.partialorder %v671, 0.7853982
    %vm673 = vcmp.lt.s32.totalorder %v254, 0
    %v674 = vand.u32 %v254, 2139095040
    %v675 = vshrl.u32 %v674, 23
    %v676 = vsub.s32 %v675, 127
    %v677 = vand.u32 2147483647, %v254
    %v678 = vand.u32 %v677, 8388607
    %v679 = vor.u32 %v678, 8388608
    %v680 = vsub.s32 0, %v679
    %v681 = vadd.s32 %v676, 1
    %vm682 = vcmp.gt.s32.totalorder %v681, 0
    %v683 = vsel %vm682, %v681, 0
    %v684 = vshrl.u32 %v683, 5
    %v685 = vand.u32 %v683, 31
    %v686 = vsub.s32 32, %v685
    %v687 = vshrl.u32 683565275, %v686
    %v688 = vshll.u32 683565275, %v685
    %v689 = vshrl.u32 2475754826, %v686
    %v690 = vor.u32 %v688, %v689
    %v691 = vshll.u32 2475754826, %v685
    %v692 = vshrl.u32 2131351028, %v686
    %v693 = vor.u32 %v691, %v692
    %v694 = vshll.u32 2131351028, %v685
    %v695 = vshrl.u32 2102212464, %v686
    %v696 = vor.u32 %v694, %v695
    %v697 = vshll.u32 2102212464, %v685
    %v698 = vshrl.u32 920167782, %v686
    %v699 = vor.u32 %v697, %v698
    %v700 = vshll.u32 920167782, %v685
    %v701 = vshrl.u32 1326507024, %v686
    %v702 = vor.u32 %v700, %v701
    %vm703 = vcmp.lt.s32.totalorder %v684, 1
    %vm704 = vcmp.lt.s32.totalorder %v684, 2
    %vm705 = vcmp.lt.s32.totalorder %v684, 3
    %vm706 = vcmp.lt.s32.totalorder %v684, 4
    %v707 = vsel %vm703, %v687, %v690
    %v708 = vsel %vm706, %v696, 2102212464
    %v709 = vsel %vm705, %v693, %v708
    %v710 = vsel %vm704, %v707, %v709
    %v711 = vsel %vm703, %v690, %v693
    %v712 = vsel %vm706, %v699, 920167782
    %v713 = vsel %vm705, %v696, %v712
    %v714 = vsel %vm704, %v711, %v713
    %v715 = vsel %vm703, %v693, %v696
    %v716 = vsel %vm706, %v702, 1326507024
    %v717 = vsel %vm705, %v699, %v716
    %v718 = vsel %vm704, %v715, %v717
    %v719 = vshll.u32 %v679, 8
    %v720 = vmul.u32.u64.compose %v719, %v718
    %v721 = vextract.low.u32 %v720
    %v722 = vextract.high.u32 %v720
    %v723 = vmul.u32.u64.compose %v719, %v714
    %v724 = vextract.low.u32 %v723
    %v725 = vextract.high.u32 %v723
    %v726 = vmul.u32 %v719, %v710
    %v727 = vadd.s32 %v722, %v724
    %vm728 = vc.u32 %v722, %v724
    %v729 = vadd.s32 %v725, 1
    %v730 = vsel %vm728, %v729, %v725
    %v731 = vadd.s32 %v726, %v730
    %v732 = vadd.s32 %v731, 536870912
    %v733 = vshrl.u32 %v732, 30
    %v734 = vshll.u32 %v733, 30
    %v735 = vsub.s32 %v731, %v734
    %vm736 = vcmp.lt.s32.totalorder %v735, 0
    %v737 = vsub.s32 0, %v735
    %v738 = vsel %vm736, %v737, %v735
    %v739 = vclz %v738
    %v740 = vsub.s32 %v739, 2
    %vm741 = vcmp.gt.s32.totalorder 0, %v740
    %v742 = vsel %vm741, 0, %v740
    %v743 = vsub.s32 32, %v742
    %v744 = vshll.u32 %v735, %v742
    %v745 = vshrl.u32 %v727, %v743
    %v746 = vor.u32 %v744, %v745
    %v747 = vsub.s32 4294967266, %v742
    %v748 = vadd.s32 %v747, 127
    %v749 = vshll.u32 %v748, 23
    %v750 = vor.u32 4788187, %v749
    %v751 = vand.u32 2147483647, %v750
    %v753 = vcvt.s32.f32 %v746
    %v754 = vmul.f32 %v753, %v751
    %v755 = vxor.u32 %v754, 2147483648
    %v756 = vsel %vm673, %v755, %v754
    %v757 = vsub.s32 4, %v733
    %v758 = vsel %vm673, %v757, %v733
    %v759 = vsel %vm672, %v254, %v756
    %v760 = vsel %vm672, 0, %v758
    %v761 = vcosq.f32.pop %v759
    %v762 = vsinq.f32.pop %v759
    %vm763 = vweird.f32 %v254
    %v764 = vadd.s32 %v760, 3
    %v765 = vand.u32 %v764, 3
    %vm766 = vcmp.lt.s32.totalorder %v765, 2
    %vm767 = vcmp.eq.s32.totalorder %v765, 0
    %v768 = vxor.u32 %v762, 2147483648
    %v769 = vsel %vm767, %v761, %v768
    %vm770 = vcmp.eq.s32.totalorder %v765, 2
    %v771 = vxor.u32 %v761, 2147483648
    %v772 = vsel %vm770, %v771, %v762
    %v773 = vsel %vm766, %v769, %v772
    %v774 = vsel %vm763, nan, %v773
    %v775 = vmul.f32 %v358, 0.70710677
    %v776 = vmul.f32 %v462, 0.70710677
    %v777 = vmul.f32 %v566, 0.70710677
    %v778 = vmul.f32 %v670, 0.70710677
    %v779 = vmul.f32 %v774, 0.70710677
    %781 = vset.pattern.permute.xlu0 0
    %782 = vperm.xlu0 %781, %v211
    %v783 = vpop.permute.xlu0 %782
    %786 = vset.pattern.permute.xlu0 0
    %787 = vperm.xlu0 %786, %v213
    %v788 = vpop.permute.xlu0 %787
    %791 = vset.pattern.permute.xlu0 0
    %792 = vperm.xlu0 %791, %v215
    %v793 = vpop.permute.xlu0 %792
    %796 = vset.pattern.permute.xlu0 0
    %797 = vperm.xlu0 %796, %v217
    %v798 = vpop.permute.xlu0 %797
    %801 = vset.pattern.permute.xlu0 0
    %802 = vperm.xlu0 %801, %v219
    %v803 = vpop.permute.xlu0 %802
    %v805 = vmul.f32 %v775, %v783
    %v806 = vmul.f32 %v776, %v788
    %v807 = vmul.f32 %v777, %v793
    %v808 = vmul.f32 %v778, %v798
    %v809 = vmul.f32 %v779, %v803
    %v810 = vmul.f32 %v176, 0.25
    %v811 = vmul.f32 %v183, 0.25
    %v812 = vmul.f32 %v190, 0.25
    %v813 = vmul.f32 %v197, 0.25
    %v814 = vmul.f32 %v204, 0.25
    %v815 = vmul.f32 %v810, %v810
    %v816 = vmul.f32 %v811, %v811
    %v817 = vmul.f32 %v812, %v812
    %v818 = vmul.f32 %v813, %v813
    %v819 = vmul.f32 %v814, %v814
    %v820 = vmul.f32 %v815, %v810
    %v821 = vmul.f32 %v816, %v811
    %v822 = vmul.f32 %v817, %v812
    %v823 = vmul.f32 %v818, %v813
    %v824 = vmul.f32 %v819, %v814
    %v825 = vmul.f32 %v820, %v820
    %v826 = vmul.f32 %v821, %v821
    %v827 = vmul.f32 %v822, %v822
    %v828 = vmul.f32 %v823, %v823
    %v829 = vmul.f32 %v824, %v824
    %v830 = vmul.f32 %v825, %v810
    %v831 = vmul.f32 %v826, %v811
    %v832 = vmul.f32 %v827, %v812
    %v833 = vmul.f32 %v828, %v813
    %v834 = vmul.f32 %v829, %v814
    %v835 = vmul.f32 %v830, %v810
    %v836 = vmul.f32 %v831, %v811
    %v837 = vmul.f32 %v832, %v812
    %v838 = vmul.f32 %v833, %v813
    %v839 = vmul.f32 %v834, %v814
    %v840 = vmul.f32 %v825, 28.0
    %v841 = vmul.f32 %v826, 28.0
    %v842 = vmul.f32 %v827, 28.0
    %v843 = vmul.f32 %v828, 28.0
    %v844 = vmul.f32 %v829, 28.0
    %v845 = vsub.f32 1.0, %v840
    %v846 = vsub.f32 1.0, %v841
    %v847 = vsub.f32 1.0, %v842
    %v848 = vsub.f32 1.0, %v843
    %v849 = vsub.f32 1.0, %v844
    %v850 = vmul.f32 %v830, 48.0
    %v851 = vmul.f32 %v831, 48.0
    %v852 = vmul.f32 %v832, 48.0
    %v853 = vmul.f32 %v833, 48.0
    %v854 = vmul.f32 %v834, 48.0
    %v855 = vadd.f32 %v845, %v850
    %v856 = vadd.f32 %v846, %v851
    %v857 = vadd.f32 %v847, %v852
    %v858 = vadd.f32 %v848, %v853
    %v859 = vadd.f32 %v849, %v854
    %v860 = vmul.f32 %v835, 21.0
    %v861 = vmul.f32 %v836, 21.0
    %v862 = vmul.f32 %v837, 21.0
    %v863 = vmul.f32 %v838, 21.0
    %v864 = vmul.f32 %v839, 21.0
    %v865 = vsub.f32 %v855, %v860
    %v866 = vsub.f32 %v856, %v861
    %v867 = vsub.f32 %v857, %v862
    %v868 = vsub.f32 %v858, %v863
    %v869 = vsub.f32 %v859, %v864
    %vm870 = vcmp.lt.f32.partialorder %v810, 1.0
    %vm871 = vcmp.lt.f32.partialorder %v811, 1.0
    %vm872 = vcmp.lt.f32.partialorder %v812, 1.0
    %vm873 = vcmp.lt.f32.partialorder %v813, 1.0
    %vm874 = vcmp.lt.f32.partialorder %v814, 1.0
    %v875 = vsel %vm870, %v865, 0.0
    %v876 = vsel %vm871, %v866, 0.0
    %v877 = vsel %vm872, %v867, 0.0
    %v878 = vsel %vm873, %v868, 0.0
    %v879 = vsel %vm874, %v869, 0.0
    %881 = vset.pattern.permute.xlu0 0
    %882 = vperm.xlu0 %881, %v875
    %v883 = vpop.permute.xlu0 %882
    %886 = vset.pattern.permute.xlu0 0
    %887 = vperm.xlu0 %886, %v876
    %v888 = vpop.permute.xlu0 %887
    %891 = vset.pattern.permute.xlu0 0
    %892 = vperm.xlu0 %891, %v877
    %v893 = vpop.permute.xlu0 %892
    %896 = vset.pattern.permute.xlu0 0
    %897 = vperm.xlu0 %896, %v878
    %v898 = vpop.permute.xlu0 %897
    %901 = vset.pattern.permute.xlu0 0
    %902 = vperm.xlu0 %901, %v879
    %v903 = vpop.permute.xlu0 %902
    %v905 = vmul.f32 %v805, %v883
    %v906 = vmul.f32 %v806, %v888
    %v907 = vmul.f32 %v807, %v893
    %v908 = vmul.f32 %v808, %v898
    %v909 = vmul.f32 %v809, %v903
    %v910 = vmul.f32 %v115, 1.7320508
    %v911 = vmul.f32 %v116, 1.7320508
    %v912 = vmul.f32 %v117, 1.7320508
    %v913 = vmul.f32 %v118, 1.7320508
    %v914 = vmul.f32 %v119, 1.7320508
    %v915 = vmul.f32 %v910, %v211
    %v916 = vmul.f32 %v911, %v213
    %v917 = vmul.f32 %v912, %v215
    %v918 = vmul.f32 %v913, %v217
    %v919 = vmul.f32 %v914, %v219
    %920 = vrot.lane.b32.xlu0 %v211, 1
    %v921 = vpop.permute.xlu0 %920
    %922 = vrot.lane.b32.xlu0 %v213, 1
    %v923 = vpop.permute.xlu0 %922
    %924 = vrot.lane.b32.xlu0 %v215, 1
    %v925 = vpop.permute.xlu0 %924
    %926 = vrot.lane.b32.xlu0 %v217, 1
    %v927 = vpop.permute.xlu0 %926
    %928 = vrot.lane.b32.xlu0 %v219, 1
    %v929 = vpop.permute.xlu0 %928
    %v935 = vmul.f32 %v910, %v921
    %v936 = vmul.f32 %v911, %v923
    %v937 = vmul.f32 %v912, %v925
    %v938 = vmul.f32 %v913, %v927
    %v939 = vmul.f32 %v914, %v929
    %940 = vrot.lane.b32.xlu0 %v211, 2
    %v941 = vpop.permute.xlu0 %940
    %942 = vrot.lane.b32.xlu0 %v213, 2
    %v943 = vpop.permute.xlu0 %942
    %944 = vrot.lane.b32.xlu0 %v215, 2
    %v945 = vpop.permute.xlu0 %944
    %946 = vrot.lane.b32.xlu0 %v217, 2
    %v947 = vpop.permute.xlu0 %946
    %948 = vrot.lane.b32.xlu0 %v219, 2
    %v949 = vpop.permute.xlu0 %948
    %v955 = vmul.f32 %v910, %v941
    %v956 = vmul.f32 %v911, %v943
    %v957 = vmul.f32 %v912, %v945
    %v958 = vmul.f32 %v913, %v947
    %v959 = vmul.f32 %v914, %v949
    %v960 = vld [vmem:[%s1] sm:$0xff]
    %v961 = vld [vmem:[%s1 + $0x8] sm:$0xff]
    %v962 = vld [vmem:[#allocation4] sm:$0xf]
    %vm963 = vcmask 31744
    %v965 = vsel %vm963, %v960, 0
    %v968 = vsel %vm963, %v961, 0
    %vm970 = vcmask 1043456
    %v972 = vsel %vm970, %v962, 0
    %974 = vmatprep.subr.mxu0 0.0
    %975 = vmatpush1.msra.mxu0 %v972
    %976 = vmatprep.subr.mxu0 0.0
    %977 = vmatpush1.msra.mxu0 0.0
    %978 = vmatprep.subr.mxu0 0.0
    %979 = vmatpush1.msra.mxu0 0.0
    %980 = vmatprep.subr.mxu0 0.0
    %981 = vmatpush1.msra.mxu0 0.0
    %982 = vmatprep.subr.mxu0 0.0
    %983 = vmatpush1.msra.mxu0 0.0
    %984 = vmatprep.subr.mxu0 0.0
    %985 = vmatpush1.msra.mxu0 0.0
    %986 = vmatprep.subr.mxu0 0.0
    %987 = vmatpush1.msra.mxu0 0.0
    %988 = vmatprep.subr.mxu0 0.0
    %989 = vmatpush1.msra.mxu0 0.0
    %990 = vmatprep.subr.mxu0 0.0
    %991 = vmatpush1.msra.mxu0 0.0
    %992 = vmatprep.subr.mxu0 0.0
    %993 = vmatpush1.msra.mxu0 0.0
    %994 = vmatprep.subr.mxu0 0.0
    %995 = vmatpush1.msra.mxu0 0.0
    %996 = vmatprep.subr.mxu0 0.0
    %997 = vmatpush1.msra.mxu0 0.0
    %998 = vmatprep.subr.mxu0 0.0
    %999 = vmatpush1.msra.mxu0 0.0
    %1000 = vmatprep.subr.mxu0 0.0
    %1001 = vmatpush1.msra.mxu0 0.0
    %1002 = vmatprep.subr.mxu0 0.0
    %1003 = vmatpush1.msra.mxu0 0.0
    %1004 = vmatprep.subr.mxu0 0.0
    %1005 = vmatpush1.msra.mxu0 0.0
    %1006 = vmatprep.subr.mxu0 0.0
    %1007 = vmatpush1.msra.mxu0 0.0
    %1008 = vmatprep.subr.mxu0 0.0
    %1009 = vmatpush1.msra.mxu0 0.0
    %1010 = vmatprep.subr.mxu0 0.0
    %1011 = vmatpush1.msra.mxu0 0.0
    %1012 = vmatprep.subr.mxu0 0.0
    %1013 = vmatpush1.msra.mxu0 0.0
    %1014 = vmatprep.subr.mxu0 0.0
    %1015 = vmatpush1.msra.mxu0 0.0
    %1016 = vmatprep.subr.mxu0 0.0
    %1017 = vmatpush1.msra.mxu0 0.0
    %1018 = vmatprep.subr.mxu0 0.0
    %1019 = vmatpush1.msra.mxu0 0.0
    %1020 = vmatprep.subr.mxu0 0.0
    %1021 = vmatpush1.msra.mxu0 0.0
    %1022 = vmatprep.subr.mxu0 0.0
    %1023 = vmatpush1.msra.mxu0 0.0
    %1024 = vmatprep.subr.mxu0 0.0
    %1025 = vmatpush1.msra.mxu0 0.0
    %1026 = vmatprep.subr.mxu0 0.0
    %1027 = vmatpush1.msra.mxu0 0.0
    %1028 = vmatprep.subr.mxu0 0.0
    %1029 = vmatpush1.msra.mxu0 0.0
    %1030 = vmatprep.subr.mxu0 0.0
    %1031 = vmatpush1.msra.mxu0 0.0
    %1032 = vmatprep.subr.mxu0 0.0
    %1033 = vmatpush1.msra.mxu0 0.0
    %1034 = vmatprep.subr.mxu0 0.0
    %1035 = vmatpush1.msra.mxu0 0.0
    %1036 = vmatprep.subr.mxu0 0.0
    %1037 = vmatpush1.msra.mxu0 0.0
    %1038 = vmatprep.mubr.f32.mxu0 0.0
    %1039 = vmatmul.mubr.f32.gmra.mrb[0].mxu0 %v965
    %v1040 = vpop.f32.mrb[0].mxu0
    %v1041 = vadd.f32 0.0, %v1040
    %v1042 = vpop.f32.mrb[0].mxu0
    %1043 = vmatprep.mubr.f32.mxu0 0.0
    %1044 = vmatmul.mubr.f32.gmra.mrb[0].mxu0 %v968
    %v1045 = vpop.f32.mrb[0].mxu0
    %v1046 = vadd.f32 0.0, %v1045
    %v1047 = vpop.f32.mrb[0].mxu0
    %1048 = vdwg.mxu0
    %v1049 = vmul.f32 %v1041, 0.5
    %v1050 = vmul.f32 %v1046, 0.5
    %vm1051 = vcmask 64512
    %v1052 = vsel %vm1051, %v1049, 0.0
    %v1053 = vsel %vm1051, %v1050, 0.0
    %vm1054 = vcmask 130048
    %v1055 = vsel %vm1054, %v1052, 0.0
    %v1056 = vsel %vm1054, %v1053, 0.0
    %vm1057 = vcmask 195584
    %v1058 = vsel %vm1057, %v1055, 0.0
    %v1059 = vsel %vm1057, %v1056, 0.0
    %v1060 = vld [vmem:[%s2] sm:$0xff]
    %v1061 = vld [vmem:[%s2 + $0x8] sm:$0xff]
    %v1062 = vld [vmem:[%s2 + $0x10] sm:$0xff]
    %v1063 = vld [vmem:[%s2 + $0x18] sm:$0xff]
    %v1064 = vld [vmem:[%s2 + $0x20] sm:$0xff]
    %v1065 = vld [vmem:[#allocation2] sm:$0xff]
    %v1066 = vld [vmem:[#allocation2 + $0x8] sm:$0xff]
    %v1067 = vld [vmem:[%s6] sm:$0xff]
    %v1068 = vld [vmem:[%s6 + $0x8] sm:$0xff]
    %v1069 = vld [vmem:[%s6 + $0x10] sm:$0xff]
    %v1070 = vld [vmem:[%s6 + $0x18] sm:$0xff]
    %vm1071 = vcmask 261120
    %v1073 = vsel %vm1071, %v1058, 0
    %v1076 = vsel %vm1071, %v1059, 0
    %1078 = vmatprep.subr.mxu0 0.0
    %1079 = vmatpush1.msra.mxu0 %v1067
    %1080 = vmatprep.subr.mxu0 0.0
    %1081 = vmatpush1.msra.mxu0 %v1068
    %1082 = vmatprep.subr.mxu0 0.0
    %1083 = vmatpush1.msra.mxu0 %v1069
    %1084 = vmatprep.subr.mxu0 0.0
    %1085 = vmatpush1.msra.mxu0 %v1070
    %1086 = vmatprep.subr.mxu0 0.0
    %1087 = vmatpush1.msra.mxu0 0.0
    %1088 = vmatprep.subr.mxu0 0.0
    %1089 = vmatpush1.msra.mxu0 0.0
    %1090 = vmatprep.subr.mxu0 0.0
    %1091 = vmatpush1.msra.mxu0 0.0
    %1092 = vmatprep.subr.mxu0 0.0
    %1093 = vmatpush1.msra.mxu0 0.0
    %1094 = vmatprep.subr.mxu0 0.0
    %1095 = vmatpush1.msra.mxu0 0.0
    %1096 = vmatprep.subr.mxu0 0.0
    %1097 = vmatpush1.msra.mxu0 0.0
    %1098 = vmatprep.subr.mxu0 0.0
    %1099 = vmatpush1.msra.mxu0 0.0
    %1100 = vmatprep.subr.mxu0 0.0
    %1101 = vmatpush1.msra.mxu0 0.0
    %1102 = vmatprep.subr.mxu0 0.0
    %1103 = vmatpush1.msra.mxu0 0.0
    %1104 = vmatprep.subr.mxu0 0.0
    %1105 = vmatpush1.msra.mxu0 0.0
    %1106 = vmatprep.subr.mxu0 0.0
    %1107 = vmatpush1.msra.mxu0 0.0
    %1108 = vmatprep.subr.mxu0 0.0
    %1109 = vmatpush1.msra.mxu0 0.0
    %1110 = vmatprep.subr.mxu0 0.0
    %1111 = vmatpush1.msra.mxu0 0.0
    %1112 = vmatprep.subr.mxu0 0.0
    %1113 = vmatpush1.msra.mxu0 0.0
    %1114 = vmatprep.subr.mxu0 0.0
    %1115 = vmatpush1.msra.mxu0 0.0
    %1116 = vmatprep.subr.mxu0 0.0
    %1117 = vmatpush1.msra.mxu0 0.0
    %1118 = vmatprep.subr.mxu0 0.0
    %1119 = vmatpush1.msra.mxu0 0.0
    %1120 = vmatprep.subr.mxu0 0.0
    %1121 = vmatpush1.msra.mxu0 0.0
    %1122 = vmatprep.subr.mxu0 0.0
    %1123 = vmatpush1.msra.mxu0 0.0
    %1124 = vmatprep.subr.mxu0 0.0
    %1125 = vmatpush1.msra.mxu0 0.0
    %1126 = vmatprep.subr.mxu0 0.0
    %1127 = vmatpush1.msra.mxu0 0.0
    %1128 = vmatprep.subr.mxu0 0.0
    %1129 = vmatpush1.msra.mxu0 0.0
    %1130 = vmatprep.subr.mxu0 0.0
    %1131 = vmatpush1.msra.mxu0 0.0
    %1132 = vmatprep.subr.mxu0 0.0
    %1133 = vmatpush1.msra.mxu0 0.0
    %1134 = vmatprep.subr.mxu0 0.0
    %1135 = vmatpush1.msra.mxu0 0.0
    %1136 = vmatprep.subr.mxu0 0.0
    %1137 = vmatpush1.msra.mxu0 0.0
    %1138 = vmatprep.subr.mxu0 0.0
    %1139 = vmatpush1.msra.mxu0 0.0
    %1140 = vmatprep.subr.mxu0 0.0
    %1141 = vmatpush1.msra.mxu0 0.0
    %1142 = vmatprep.mubr.f32.mxu0 0.0
    %1143 = vmatmul.mubr.f32.gmra.mrb[0].mxu0 %v1073
    %v1144 = vpop.f32.mrb[0].mxu0
    %v1145 = vadd.f32 0.0, %v1144
    %v1146 = vpop.f32.mrb[0].mxu0
    %1147 = vmatprep.mubr.f32.mxu0 0.0
    %1148 = vmatmul.mubr.f32.gmra.mrb[0].mxu0 %v1076
    %v1149 = vpop.f32.mrb[0].mxu0
    %v1150 = vadd.f32 0.0, %v1149
    %v1151 = vpop.f32.mrb[0].mxu0
    %1152 = vdwg.mxu0
    %1153 = vset.pattern.permute.xlu0 0
    %1154 = vperm.xlu0 %1153, %v960
    %v1155 = vpop.permute.xlu0 %1154
    %1157 = vset.pattern.permute.xlu0 0
    %1158 = vperm.xlu0 %1157, %v961
    %v1159 = vpop.permute.xlu0 %1158
    %v1161 = vmul.f32 %v1155, %v1145
    %v1162 = vmul.f32 %v1159, %v1150
    %v1163 = vadd.f32 %v1161, 0.0
    %v1164 = vadd.f32 %v1162, 0.0
    %1165 = vset.pattern.permute.xlu0 1
    %1166 = vperm.xlu0 %1165, %v960
    %v1167 = vpop.permute.xlu0 %1166
    %1169 = vset.pattern.permute.xlu0 1
    %1170 = vperm.xlu0 %1169, %v961
    %v1171 = vpop.permute.xlu0 %1170
    %v1173 = vmul.f32 %v1167, %v1145
    %v1174 = vmul.f32 %v1171, %v1150
    %1177 = vrot.lane.b32.xlu0 %v1173, 96
    %v1178 = vpop.permute.xlu0 %1177
    %1179 = vrot.lane.b32.xlu0 %v1174, 96
    %v1180 = vpop.permute.xlu0 %1179
    %v1183 = vadd.f32 %v1163, %v1178
    %v1184 = vadd.f32 %v1164, %v1180
    %1185 = vset.pattern.permute.xlu0 2
    %1186 = vperm.xlu0 %1185, %v960
    %v1187 = vpop.permute.xlu0 %1186
    %1189 = vset.pattern.permute.xlu0 2
    %1190 = vperm.xlu0 %1189, %v961
    %v1191 = vpop.permute.xlu0 %1190
    %v1193 = vmul.f32 %v1187, %v1145
    %v1194 = vmul.f32 %v1191, %v1150
    %1197 = vrot.lane.b32.xlu0 %v1193, 64
    %v1198 = vpop.permute.xlu0 %1197
    %1199 = vrot.lane.b32.xlu0 %v1194, 64
    %v1200 = vpop.permute.xlu0 %1199
    %v1203 = vadd.f32 %v1183, %v1198
    %v1204 = vadd.f32 %v1184, %v1200
    %1205 = vset.pattern.permute.xlu0 3
    %1206 = vperm.xlu0 %1205, %v960
    %v1207 = vpop.permute.xlu0 %1206
    %1209 = vset.pattern.permute.xlu0 3
    %1210 = vperm.xlu0 %1209, %v961
    %v1211 = vpop.permute.xlu0 %1210
    %v1213 = vmul.f32 %v1207, %v1145
    %v1214 = vmul.f32 %v1211, %v1150
    %1217 = vrot.lane.b32.xlu0 %v1213, 32
    %v1218 = vpop.permute.xlu0 %1217
    %1219 = vrot.lane.b32.xlu0 %v1214, 32
    %v1220 = vpop.permute.xlu0 %1219
    %v1223 = vadd.f32 %v1203, %v1218
    %v1224 = vadd.f32 %v1204, %v1220
    %v1225 = vmul.f32 %v1223, 0.17677669
    %v1226 = vmul.f32 %v1224, 0.17677669
    %v1227 = vld [vmem:[%s7] sm:$0xff]
    %v1228 = vld [vmem:[%s7 + $0x8] sm:$0xff]
    %v1229 = vld [vmem:[%s7 + $0x10] sm:$0xff]
    %v1230 = vld [vmem:[%s7 + $0x18] sm:$0xff]
    %1231 = vmatprep.subr.mxu0 0.0
    %1232 = vmatpush1.msra.mxu0 %v1227
    %1233 = vmatprep.subr.mxu0 0.0
    %1234 = vmatpush1.msra.mxu0 %v1228
    %1235 = vmatprep.subr.mxu0 0.0
    %1236 = vmatpush1.msra.mxu0 %v1229
    %1237 = vmatprep.subr.mxu0 0.0
    %1238 = vmatpush1.msra.mxu0 %v1230
    %1239 = vmatprep.subr.mxu0 0.0
    %1240 = vmatpush1.msra.mxu0 0.0
    %1241 = vmatprep.subr.mxu0 0.0
    %1242 = vmatpush1.msra.mxu0 0.0
    %1243 = vmatprep.subr.mxu0 0.0
    %1244 = vmatpush1.msra.mxu0 0.0
    %1245 = vmatprep.subr.mxu0 0.0
    %1246 = vmatpush1.msra.mxu0 0.0
    %1247 = vmatprep.subr.mxu0 0.0
    %1248 = vmatpush1.msra.mxu0 0.0
    %1249 = vmatprep.subr.mxu0 0.0
    %1250 = vmatpush1.msra.mxu0 0.0
    %1251 = vmatprep.subr.mxu0 0.0
    %1252 = vmatpush1.msra.mxu0 0.0
    %1253 = vmatprep.subr.mxu0 0.0
    %1254 = vmatpush1.msra.mxu0 0.0
    %1255 = vmatprep.subr.mxu0 0.0
    %1256 = vmatpush1.msra.mxu0 0.0
    %1257 = vmatprep.subr.mxu0 0.0
    %1258 = vmatpush1.msra.mxu0 0.0
    %1259 = vmatprep.subr.mxu0 0.0
    %1260 = vmatpush1.msra.mxu0 0.0
    %1261 = vmatprep.subr.mxu0 0.0
    %1262 = vmatpush1.msra.mxu0 0.0
    %1263 = vmatprep.subr.mxu0 0.0
    %1264 = vmatpush1.msra.mxu0 0.0
    %1265 = vmatprep.subr.mxu0 0.0
    %1266 = vmatpush1.msra.mxu0 0.0
    %1267 = vmatprep.subr.mxu0 0.0
    %1268 = vmatpush1.msra.mxu0 0.0
    %1269 = vmatprep.subr.mxu0 0.0
    %1270 = vmatpush1.msra.mxu0 0.0
    %1271 = vmatprep.subr.mxu0 0.0
    %1272 = vmatpush1.msra.mxu0 0.0
    %1273 = vmatprep.subr.mxu0 0.0
    %1274 = vmatpush1.msra.mxu0 0.0
    %1275 = vmatprep.subr.mxu0 0.0
    %1276 = vmatpush1.msra.mxu0 0.0
    %1277 = vmatprep.subr.mxu0 0.0
    %1278 = vmatpush1.msra.mxu0 0.0
    %1279 = vmatprep.subr.mxu0 0.0
    %1280 = vmatpush1.msra.mxu0 0.0
    %1281 = vmatprep.subr.mxu0 0.0
    %1282 = vmatpush1.msra.mxu0 0.0
    %1283 = vmatprep.subr.mxu0 0.0
    %1284 = vmatpush1.msra.mxu0 0.0
    %1285 = vmatprep.subr.mxu0 0.0
    %1286 = vmatpush1.msra.mxu0 0.0
    %1287 = vmatprep.subr.mxu0 0.0
    %1288 = vmatpush1.msra.mxu0 0.0
    %1289 = vmatprep.subr.mxu0 0.0
    %1290 = vmatpush1.msra.mxu0 0.0
    %1291 = vmatprep.subr.mxu0 0.0
    %1292 = vmatpush1.msra.mxu0 0.0
    %1293 = vmatprep.subr.mxu0 0.0
    %1294 = vmatpush1.msra.mxu0 0.0
    %1295 = vmatprep.mubr.f32.mxu0 0.0
    %1296 = vmatmul.mubr.f32.gmra.mrb[0].mxu0 %v1073
    %v1297 = vpop.f32.mrb[0].mxu0
    %v1298 = vadd.f32 0.0, %v1297
    %v1299 = vpop.f32.mrb[0].mxu0
    %1300 = vmatprep.mubr.f32.mxu0 0.0
    %1301 = vmatmul.mubr.f32.gmra.mrb[0].mxu0 %v1076
    %v1302 = vpop.f32.mrb[0].mxu0
    %v1303 = vadd.f32 0.0, %v1302
    %v1304 = vpop.f32.mrb[0].mxu0
    %1305 = vdwg.mxu0
    %v1306 = vmul.f32 %v1298, 0.35355338
    %v1307 = vmul.f32 %v1303, 0.35355338
    %v1309 = vsel %vm1054, %v1060, 0
    %v1312 = vsel %vm1054, %v1061, 0
    %v1315 = vsel %vm1054, %v1062, 0
    %v1318 = vsel %vm1054, %v1063, 0
    %v1321 = vsel %vm1054, %v1064, 0
    %1323 = vmatprep.subr.mxu0 0.0
    %1324 = vmatpush1.msra.mxu0 %v1306
    %1325 = vmatprep.subr.mxu0 0.0
    %1326 = vmatpush1.msra.mxu0 %v1307
    %1327 = vmatprep.subr.mxu0 0.0
    %1328 = vmatpush1.msra.mxu0 0.0
    %1329 = vmatprep.subr.mxu0 0.0
    %1330 = vmatpush1.msra.mxu0 0.0
    %1331 = vmatprep.subr.mxu0 0.0
    %1332 = vmatpush1.msra.mxu0 0.0
    %1333 = vmatprep.subr.mxu0 0.0
    %1334 = vmatpush1.msra.mxu0 0.0
    %1335 = vmatprep.subr.mxu0 0.0
    %1336 = vmatpush1.msra.mxu0 0.0
    %1337 = vmatprep.subr.mxu0 0.0
    %1338 = vmatpush1.msra.mxu0 0.0
    %1339 = vmatprep.subr.mxu0 0.0
    %1340 = vmatpush1.msra.mxu0 0.0
    %1341 = vmatprep.subr.mxu0 0.0
    %1342 = vmatpush1.msra.mxu0 0.0
    %1343 = vmatprep.subr.mxu0 0.0
    %1344 = vmatpush1.msra.mxu0 0.0
    %1345 = vmatprep.subr.mxu0 0.0
    %1346 = vmatpush1.msra.mxu0 0.0
    %1347 = vmatprep.subr.mxu0 0.0
    %1348 = vmatpush1.msra.mxu0 0.0
    %1349 = vmatprep.subr.mxu0 0.0
    %1350 = vmatpush1.msra.mxu0 0.0
    %1351 = vmatprep.subr.mxu0 0.0
    %1352 = vmatpush1.msra.mxu0 0.0
    %1353 = vmatprep.subr.mxu0 0.0
    %1354 = vmatpush1.msra.mxu0 0.0
    %1355 = vmatprep.subr.mxu0 0.0
    %1356 = vmatpush1.msra.mxu0 0.0
    %1357 = vmatprep.subr.mxu0 0.0
    %1358 = vmatpush1.msra.mxu0 0.0
    %1359 = vmatprep.subr.mxu0 0.0
    %1360 = vmatpush1.msra.mxu0 0.0
    %1361 = vmatprep.subr.mxu0 0.0
    %1362 = vmatpush1.msra.mxu0 0.0
    %1363 = vmatprep.subr.mxu0 0.0
    %1364 = vmatpush1.msra.mxu0 0.0
    %1365 = vmatprep.subr.mxu0 0.0
    %1366 = vmatpush1.msra.mxu0 0.0
    %1367 = vmatprep.subr.mxu0 0.0
    %1368 = vmatpush1.msra.mxu0 0.0
    %1369 = vmatprep.subr.mxu0 0.0
    %1370 = vmatpush1.msra.mxu0 0.0
    %1371 = vmatprep.subr.mxu0 0.0
    %1372 = vmatpush1.msra.mxu0 0.0
    %1373 = vmatprep.subr.mxu0 0.0
    %1374 = vmatpush1.msra.mxu0 0.0
    %1375 = vmatprep.subr.mxu0 0.0
    %1376 = vmatpush1.msra.mxu0 0.0
    %1377 = vmatprep.subr.mxu0 0.0
    %1378 = vmatpush1.msra.mxu0 0.0
    %1379 = vmatprep.subr.mxu0 0.0
    %1380 = vmatpush1.msra.mxu0 0.0
    %1381 = vmatprep.subr.mxu0 0.0
    %1382 = vmatpush1.msra.mxu0 0.0
    %1383 = vmatprep.subr.mxu0 0.0
    %1384 = vmatpush1.msra.mxu0 0.0
    %1385 = vmatprep.subr.mxu0 0.0
    %1386 = vmatpush1.msra.mxu0 0.0
    %1387 = vmatprep.mubr.f32.mxu0 0.0
    %1388 = vmatmul.mubr.f32.gmra.mrb[0].mxu0 %v1309
    %v1389 = vpop.f32.mrb[0].mxu0
    %v1390 = vadd.f32 0.0, %v1389
    %v1391 = vpop.f32.mrb[0].mxu0
    %1392 = vmatprep.mubr.f32.mxu0 0.0
    %1393 = vmatmul.mubr.f32.gmra.mrb[0].mxu0 %v1312
    %v1394 = vpop.f32.mrb[0].mxu0
    %v1395 = vadd.f32 0.0, %v1394
    %v1396 = vpop.f32.mrb[0].mxu0
    %1397 = vmatprep.mubr.f32.mxu0 0.0
    %1398 = vmatmul.mubr.f32.gmra.mrb[0].mxu0 %v1315
    %v1399 = vpop.f32.mrb[0].mxu0
    %v1400 = vadd.f32 0.0, %v1399
    %v1401 = vpop.f32.mrb[0].mxu0
    %1402 = vmatprep.mubr.f32.mxu0 0.0
    %1403 = vmatmul.mubr.f32.gmra.mrb[0].mxu0 %v1318
    %v1404 = vpop.f32.mrb[0].mxu0
    %v1405 = vadd.f32 0.0, %v1404
    %v1406 = vpop.f32.mrb[0].mxu0
    %1407 = vmatprep.mubr.f32.mxu0 0.0
    %1408 = vmatmul.mubr.f32.gmra.mrb[0].mxu0 %v1321
    %v1409 = vpop.f32.mrb[0].mxu0
    %v1410 = vadd.f32 0.0, %v1409
    %v1411 = vpop.f32.mrb[0].mxu0
    %1412 = vdwg.mxu0
    %v1413 = vld [vmem:[#allocation6] sm:$0xff]
    %v1415 = vsel %vm1051, %v905, 0
    %v1418 = vsel %vm1051, %v906, 0
    %v1421 = vsel %vm1051, %v907, 0
    %v1424 = vsel %vm1051, %v908, 0
    %v1427 = vsel %vm1051, %v909, 0
    %1429 = vmatprep.subr.mxu0 0.0
    %1430 = vmatpush1.msra.mxu0 %v1413
    %1431 = vmatprep.subr.mxu0 0.0
    %1432 = vmatpush1.msra.mxu0 0.0
    %1433 = vmatprep.subr.mxu0 0.0
    %1434 = vmatpush1.msra.mxu0 0.0
    %1435 = vmatprep.subr.mxu0 0.0
    %1436 = vmatpush1.msra.mxu0 0.0
    %1437 = vmatprep.subr.mxu0 0.0
    %1438 = vmatpush1.msra.mxu0 0.0
    %1439 = vmatprep.subr.mxu0 0.0
    %1440 = vmatpush1.msra.mxu0 0.0
    %1441 = vmatprep.subr.mxu0 0.0
    %1442 = vmatpush1.msra.mxu0 0.0
    %1443 = vmatprep.subr.mxu0 0.0
    %1444 = vmatpush1.msra.mxu0 0.0
    %1445 = vmatprep.subr.mxu0 0.0
    %1446 = vmatpush1.msra.mxu0 0.0
    %1447 = vmatprep.subr.mxu0 0.0
    %1448 = vmatpush1.msra.mxu0 0.0
    %1449 = vmatprep.subr.mxu0 0.0
    %1450 = vmatpush1.msra.mxu0 0.0
    %1451 = vmatprep.subr.mxu0 0.0
    %1452 = vmatpush1.msra.mxu0 0.0
    %1453 = vmatprep.subr.mxu0 0.0
    %1454 = vmatpush1.msra.mxu0 0.0
    %1455 = vmatprep.subr.mxu0 0.0
    %1456 = vmatpush1.msra.mxu0 0.0
    %1457 = vmatprep.subr.mxu0 0.0
    %1458 = vmatpush1.msra.mxu0 0.0
    %1459 = vmatprep.subr.mxu0 0.0
    %1460 = vmatpush1.msra.mxu0 0.0
    %1461 = vmatprep.subr.mxu0 0.0
    %1462 = vmatpush1.msra.mxu0 0.0
    %1463 = vmatprep.subr.mxu0 0.0
    %1464 = vmatpush1.msra.mxu0 0.0
    %1465 = vmatprep.subr.mxu0 0.0
    %1466 = vmatpush1.msra.mxu0 0.0
    %1467 = vmatprep.subr.mxu0 0.0
    %1468 = vmatpush1.msra.mxu0 0.0
    %1469 = vmatprep.subr.mxu0 0.0
    %1470 = vmatpush1.msra.mxu0 0.0
    %1471 = vmatprep.subr.mxu0 0.0
    %1472 = vmatpush1.msra.mxu0 0.0
    %1473 = vmatprep.subr.mxu0 0.0
    %1474 = vmatpush1.msra.mxu0 0.0
    %1475 = vmatprep.subr.mxu0 0.0
    %1476 = vmatpush1.msra.mxu0 0.0
    %1477 = vmatprep.subr.mxu0 0.0
    %1478 = vmatpush1.msra.mxu0 0.0
    %1479 = vmatprep.subr.mxu0 0.0
    %1480 = vmatpush1.msra.mxu0 0.0
    %1481 = vmatprep.subr.mxu0 0.0
    %1482 = vmatpush1.msra.mxu0 0.0
    %1483 = vmatprep.subr.mxu0 0.0
    %1484 = vmatpush1.msra.mxu0 0.0
    %1485 = vmatprep.subr.mxu0 0.0
    %1486 = vmatpush1.msra.mxu0 0.0
    %1487 = vmatprep.subr.mxu0 0.0
    %1488 = vmatpush1.msra.mxu0 0.0
    %1489 = vmatprep.subr.mxu0 0.0
    %1490 = vmatpush1.msra.mxu0 0.0
    %1491 = vmatprep.subr.mxu0 0.0
    %1492 = vmatpush1.msra.mxu0 0.0
    %1493 = vmatprep.mubr.f32.mxu0 0.0
    %1494 = vmatmul.mubr.f32.gmra.mrb[0].mxu0 %v1415
    %v1495 = vpop.f32.mrb[0].mxu0
    %v1496 = vadd.f32 0.0, %v1495
    %v1497 = vpop.f32.mrb[0].mxu0
    %1498 = vmatprep.mubr.f32.mxu0 0.0
    %1499 = vmatmul.mubr.f32.gmra.mrb[0].mxu0 %v1418
    %v1500 = vpop.f32.mrb[0].mxu0
    %v1501 = vadd.f32 0.0, %v1500
    %v1502 = vpop.f32.mrb[0].mxu0
    %1503 = vmatprep.mubr.f32.mxu0 0.0
    %1504 = vmatmul.mubr.f32.gmra.mrb[0].mxu0 %v1421
    %v1505 = vpop.f32.mrb[0].mxu0
    %v1506 = vadd.f32 0.0, %v1505
    %v1507 = vpop.f32.mrb[0].mxu0
    %1508 = vmatprep.mubr.f32.mxu0 0.0
    %1509 = vmatmul.mubr.f32.gmra.mrb[0].mxu0 %v1424
    %v1510 = vpop.f32.mrb[0].mxu0
    %v1511 = vadd.f32 0.0, %v1510
    %v1512 = vpop.f32.mrb[0].mxu0
    %1513 = vmatprep.mubr.f32.mxu0 0.0
    %1514 = vmatmul.mubr.f32.gmra.mrb[0].mxu0 %v1427
    %v1515 = vpop.f32.mrb[0].mxu0
    %v1516 = vadd.f32 0.0, %v1515
    %v1517 = vpop.f32.mrb[0].mxu0
    %1518 = vdwg.mxu0
    %v1519 = vmul.f32 %v1496, 0.35355338
    %v1520 = vmul.f32 %v1501, 0.35355338
    %v1521 = vmul.f32 %v1506, 0.35355338
    %v1522 = vmul.f32 %v1511, 0.35355338
    %v1523 = vmul.f32 %v1516, 0.35355338
    %v1524 = vxor.u32 %v1519, 2147483648
    %v1525 = vxor.u32 %v1520, 2147483648
    %v1526 = vxor.u32 %v1521, 2147483648
    %v1527 = vxor.u32 %v1522, 2147483648
    %v1528 = vxor.u32 %v1523, 2147483648
    %v1529 = vmul.f32 %v1524, 1.442695
    %v1530 = vpow.pop %v1529
    %v1531 = vmul.f32 %v1525, 1.442695
    %v1532 = vpow.pop %v1531
    %v1533 = vmul.f32 %v1526, 1.442695
    %v1534 = vpow.pop %v1533
    %v1535 = vmul.f32 %v1527, 1.442695
    %v1536 = vpow.pop %v1535
    %v1537 = vmul.f32 %v1528, 1.442695
    %v1538 = vpow.pop %v1537
    %v1539 = vadd.f32 %v1530, 1.0
    %v1540 = vadd.f32 %v1532, 1.0
    %v1541 = vadd.f32 %v1534, 1.0
    %v1542 = vadd.f32 %v1536, 1.0
    %v1543 = vadd.f32 %v1538, 1.0
    %v1544 = vrcp.pop %v1539
    %v1545 = vmul.f32 1.0, %v1544
    %v1546 = vrcp.pop %v1540
    %v1547 = vmul.f32 1.0, %v1546
    %v1548 = vrcp.pop %v1541
    %v1549 = vmul.f32 1.0, %v1548
    %v1550 = vrcp.pop %v1542
    %v1551 = vmul.f32 1.0, %v1550
    %v1552 = vrcp.pop %v1543
    %v1553 = vmul.f32 1.0, %v1552
    %v1554 = vmul.f32 %v1519, %v1545
    %v1555 = vmul.f32 %v1520, %v1547
    %v1556 = vmul.f32 %v1521, %v1549
    %v1557 = vmul.f32 %v1522, %v1551
    %v1558 = vmul.f32 %v1523, %v1553
    %v1559 = vld [vmem:[%s9] sm:$0xff]
    %v1560 = vld [vmem:[%s9 + $0x8] sm:$0xff]
    %v1562 = vsel %vm1054, %v1554, 0
    %v1565 = vsel %vm1054, %v1555, 0
    %v1568 = vsel %vm1054, %v1556, 0
    %v1571 = vsel %vm1054, %v1557, 0
    %v1574 = vsel %vm1054, %v1558, 0
    %1576 = vmatprep.subr.mxu0 0.0
    %1577 = vmatpush1.msra.mxu0 %v1559
    %1578 = vmatprep.subr.mxu0 0.0
    %1579 = vmatpush1.msra.mxu0 %v1560
    %1580 = vmatprep.subr.mxu0 0.0
    %1581 = vmatpush1.msra.mxu0 0.0
    %1582 = vmatprep.subr.mxu0 0.0
    %1583 = vmatpush1.msra.mxu0 0.0
    %1584 = vmatprep.subr.mxu0 0.0
    %1585 = vmatpush1.msra.mxu0 0.0
    %1586 = vmatprep.subr.mxu0 0.0
    %1587 = vmatpush1.msra.mxu0 0.0
    %1588 = vmatprep.subr.mxu0 0.0
    %1589 = vmatpush1.msra.mxu0 0.0
    %1590 = vmatprep.subr.mxu0 0.0
    %1591 = vmatpush1.msra.mxu0 0.0
    %1592 = vmatprep.subr.mxu0 0.0
    %1593 = vmatpush1.msra.mxu0 0.0
    %1594 = vmatprep.subr.mxu0 0.0
    %1595 = vmatpush1.msra.mxu0 0.0
    %1596 = vmatprep.subr.mxu0 0.0
    %1597 = vmatpush1.msra.mxu0 0.0
    %1598 = vmatprep.subr.mxu0 0.0
    %1599 = vmatpush1.msra.mxu0 0.0
    %1600 = vmatprep.subr.mxu0 0.0
    %1601 = vmatpush1.msra.mxu0 0.0
    %1602 = vmatprep.subr.mxu0 0.0
    %1603 = vmatpush1.msra.mxu0 0.0
    %1604 = vmatprep.subr.mxu0 0.0
    %1605 = vmatpush1.msra.mxu0 0.0
    %1606 = vmatprep.subr.mxu0 0.0
    %1607 = vmatpush1.msra.mxu0 0.0
    %1608 = vmatprep.subr.mxu0 0.0
    %1609 = vmatpush1.msra.mxu0 0.0
    %1610 = vmatprep.subr.mxu0 0.0
    %1611 = vmatpush1.msra.mxu0 0.0
    %1612 = vmatprep.subr.mxu0 0.0
    %1613 = vmatpush1.msra.mxu0 0.0
    %1614 = vmatprep.subr.mxu0 0.0
    %1615 = vmatpush1.msra.mxu0 0.0
    %1616 = vmatprep.subr.mxu0 0.0
    %1617 = vmatpush1.msra.mxu0 0.0
    %1618 = vmatprep.subr.mxu0 0.0
    %1619 = vmatpush1.msra.mxu0 0.0
    %1620 = vmatprep.subr.mxu0 0.0
    %1621 = vmatpush1.msra.mxu0 0.0
    %1622 = vmatprep.subr.mxu0 0.0
    %1623 = vmatpush1.msra.mxu0 0.0
    %1624 = vmatprep.subr.mxu0 0.0
    %1625 = vmatpush1.msra.mxu0 0.0
    %1626 = vmatprep.subr.mxu0 0.0
    %1627 = vmatpush1.msra.mxu0 0.0
    %1628 = vmatprep.subr.mxu0 0.0
    %1629 = vmatpush1.msra.mxu0 0.0
    %1630 = vmatprep.subr.mxu0 0.0
    %1631 = vmatpush1.msra.mxu0 0.0
    %1632 = vmatprep.subr.mxu0 0.0
    %1633 = vmatpush1.msra.mxu0 0.0
    %1634 = vmatprep.subr.mxu0 0.0
    %1635 = vmatpush1.msra.mxu0 0.0
    %1636 = vmatprep.subr.mxu0 0.0
    %1637 = vmatpush1.msra.mxu0 0.0
    %1638 = vmatprep.subr.mxu0 0.0
    %1639 = vmatpush1.msra.mxu0 0.0
    %1640 = vmatprep.mubr.f32.mxu0 0.0
    %1641 = vmatmul.mubr.f32.gmra.mrb[0].mxu0 %v1562
    %v1642 = vpop.f32.mrb[0].mxu0
    %v1643 = vadd.f32 0.0, %v1642
    %v1644 = vpop.f32.mrb[0].mxu0
    %1645 = vmatprep.mubr.f32.mxu0 0.0
    %1646 = vmatmul.mubr.f32.gmra.mrb[0].mxu0 %v1565
    %v1647 = vpop.f32.mrb[0].mxu0
    %v1648 = vadd.f32 0.0, %v1647
    %v1649 = vpop.f32.mrb[0].mxu0
    %1650 = vmatprep.mubr.f32.mxu0 0.0
    %1651 = vmatmul.mubr.f32.gmra.mrb[0].mxu0 %v1568
    %v1652 = vpop.f32.mrb[0].mxu0
    %v1653 = vadd.f32 0.0, %v1652
    %v1654 = vpop.f32.mrb[0].mxu0
    %1655 = vmatprep.mubr.f32.mxu0 0.0
    %1656 = vmatmul.mubr.f32.gmra.mrb[0].mxu0 %v1571
    %v1657 = vpop.f32.mrb[0].mxu0
    %v1658 = vadd.f32 0.0, %v1657
    %v1659 = vpop.f32.mrb[0].mxu0
    %1660 = vmatprep.mubr.f32.mxu0 0.0
    %1661 = vmatmul.mubr.f32.gmra.mrb[0].mxu0 %v1574
    %v1662 = vpop.f32.mrb[0].mxu0
    %v1663 = vadd.f32 0.0, %v1662
    %v1664 = vpop.f32.mrb[0].mxu0
    %1665 = vdwg.mxu0
    %v1666 = vmul.f32 %v1643, 0.25
    %v1667 = vmul.f32 %v1648, 0.25
    %v1668 = vmul.f32 %v1653, 0.25
    %v1669 = vmul.f32 %v1658, 0.25
    %v1670 = vmul.f32 %v1663, 0.25
    %v1671 = vxor.u32 %v1666, 2147483648
    %v1672 = vxor.u32 %v1667, 2147483648
    %v1673 = vxor.u32 %v1668, 2147483648
    %v1674 = vxor.u32 %v1669, 2147483648
    %v1675 = vxor.u32 %v1670, 2147483648
    %v1676 = vmul.f32 %v1671, 1.442695
    %v1677 = vpow.pop %v1676
    %v1678 = vmul.f32 %v1672, 1.442695
    %v1679 = vpow.pop %v1678
    %v1680 = vmul.f32 %v1673, 1.442695
    %v1681 = vpow.pop %v1680
    %v1682 = vmul.f32 %v1674, 1.442695
    %v1683 = vpow.pop %v1682
    %v1684 = vmul.f32 %v1675, 1.442695
    %v1685 = vpow.pop %v1684
    %v1686 = vadd.f32 %v1677, 1.0
    %v1687 = vadd.f32 %v1679, 1.0
    %v1688 = vadd.f32 %v1681, 1.0
    %v1689 = vadd.f32 %v1683, 1.0
    %v1690 = vadd.f32 %v1685, 1.0
    %v1691 = vrcp.pop %v1686
    %v1692 = vmul.f32 1.0, %v1691
    %v1693 = vrcp.pop %v1687
    %v1694 = vmul.f32 1.0, %v1693
    %v1695 = vrcp.pop %v1688
    %v1696 = vmul.f32 1.0, %v1695
    %v1697 = vrcp.pop %v1689
    %v1698 = vmul.f32 1.0, %v1697
    %v1699 = vrcp.pop %v1690
    %v1700 = vmul.f32 1.0, %v1699
    %v1701 = vmul.f32 %v1666, %v1692
    %v1702 = vmul.f32 %v1667, %v1694
    %v1703 = vmul.f32 %v1668, %v1696
    %v1704 = vmul.f32 %v1669, %v1698
    %v1705 = vmul.f32 %v1670, %v1700
    %v1706 = vld [vmem:[#allocation7] sm:$0xff]
    %v1707 = vld [vmem:[#allocation7 + $0x8] sm:$0xff]
    %v1709 = vsel %vm1054, %v1701, 0
    %v1712 = vsel %vm1054, %v1702, 0
    %v1715 = vsel %vm1054, %v1703, 0
    %v1718 = vsel %vm1054, %v1704, 0
    %v1721 = vsel %vm1054, %v1705, 0
    %1723 = vmatprep.subr.mxu0 0.0
    %1724 = vmatpush1.msra.mxu0 %v1706
    %1725 = vmatprep.subr.mxu0 0.0
    %1726 = vmatpush1.msra.mxu0 %v1707
    %1727 = vmatprep.subr.mxu0 0.0
    %1728 = vmatpush1.msra.mxu0 0.0
    %1729 = vmatprep.subr.mxu0 0.0
    %1730 = vmatpush1.msra.mxu0 0.0
    %1731 = vmatprep.subr.mxu0 0.0
    %1732 = vmatpush1.msra.mxu0 0.0
    %1733 = vmatprep.subr.mxu0 0.0
    %1734 = vmatpush1.msra.mxu0 0.0
    %1735 = vmatprep.subr.mxu0 0.0
    %1736 = vmatpush1.msra.mxu0 0.0
    %1737 = vmatprep.subr.mxu0 0.0
    %1738 = vmatpush1.msra.mxu0 0.0
    %1739 = vmatprep.subr.mxu0 0.0
    %1740 = vmatpush1.msra.mxu0 0.0
    %1741 = vmatprep.subr.mxu0 0.0
    %1742 = vmatpush1.msra.mxu0 0.0
    %1743 = vmatprep.subr.mxu0 0.0
    %1744 = vmatpush1.msra.mxu0 0.0
    %1745 = vmatprep.subr.mxu0 0.0
    %1746 = vmatpush1.msra.mxu0 0.0
    %1747 = vmatprep.subr.mxu0 0.0
    %1748 = vmatpush1.msra.mxu0 0.0
    %1749 = vmatprep.subr.mxu0 0.0
    %1750 = vmatpush1.msra.mxu0 0.0
    %1751 = vmatprep.subr.mxu0 0.0
    %1752 = vmatpush1.msra.mxu0 0.0
    %1753 = vmatprep.subr.mxu0 0.0
    %1754 = vmatpush1.msra.mxu0 0.0
    %1755 = vmatprep.subr.mxu0 0.0
    %1756 = vmatpush1.msra.mxu0 0.0
    %1757 = vmatprep.subr.mxu0 0.0
    %1758 = vmatpush1.msra.mxu0 0.0
    %1759 = vmatprep.subr.mxu0 0.0
    %1760 = vmatpush1.msra.mxu0 0.0
    %1761 = vmatprep.subr.mxu0 0.0
    %1762 = vmatpush1.msra.mxu0 0.0
    %1763 = vmatprep.subr.mxu0 0.0
    %1764 = vmatpush1.msra.mxu0 0.0
    %1765 = vmatprep.subr.mxu0 0.0
    %1766 = vmatpush1.msra.mxu0 0.0
    %1767 = vmatprep.subr.mxu0 0.0
    %1768 = vmatpush1.msra.mxu0 0.0
    %1769 = vmatprep.subr.mxu0 0.0
    %1770 = vmatpush1.msra.mxu0 0.0
    %1771 = vmatprep.subr.mxu0 0.0
    %1772 = vmatpush1.msra.mxu0 0.0
    %1773 = vmatprep.subr.mxu0 0.0
    %1774 = vmatpush1.msra.mxu0 0.0
    %1775 = vmatprep.subr.mxu0 0.0
    %1776 = vmatpush1.msra.mxu0 0.0
    %1777 = vmatprep.subr.mxu0 0.0
    %1778 = vmatpush1.msra.mxu0 0.0
    %1779 = vmatprep.subr.mxu0 0.0
    %1780 = vmatpush1.msra.mxu0 0.0
    %1781 = vmatprep.subr.mxu0 0.0
    %1782 = vmatpush1.msra.mxu0 0.0
    %1783 = vmatprep.subr.mxu0 0.0
    %1784 = vmatpush1.msra.mxu0 0.0
    %1785 = vmatprep.subr.mxu0 0.0
    %1786 = vmatpush1.msra.mxu0 0.0
    %1787 = vmatprep.mubr.f32.mxu0 0.0
    %1788 = vmatmul.mubr.f32.gmra.mrb[0].mxu0 %v1709
    %v1789 = vpop.f32.mrb[0].mxu0
    %v1790 = vadd.f32 0.0, %v1789
    %v1791 = vpop.f32.mrb[0].mxu0
    %1792 = vmatprep.mubr.f32.mxu0 0.0
    %1793 = vmatmul.mubr.f32.gmra.mrb[0].mxu0 %v1712
    %v1794 = vpop.f32.mrb[0].mxu0
    %v1795 = vadd.f32 0.0, %v1794
    %v1796 = vpop.f32.mrb[0].mxu0
    %1797 = vmatprep.mubr.f32.mxu0 0.0
    %1798 = vmatmul.mubr.f32.gmra.mrb[0].mxu0 %v1715
    %v1799 = vpop.f32.mrb[0].mxu0
    %v1800 = vadd.f32 0.0, %v1799
    %v1801 = vpop.f32.mrb[0].mxu0
    %1802 = vmatprep.mubr.f32.mxu0 0.0
    %1803 = vmatmul.mubr.f32.gmra.mrb[0].mxu0 %v1718
    %v1804 = vpop.f32.mrb[0].mxu0
    %v1805 = vadd.f32 0.0, %v1804
    %v1806 = vpop.f32.mrb[0].mxu0
    %1807 = vmatprep.mubr.f32.mxu0 0.0
    %1808 = vmatmul.mubr.f32.gmra.mrb[0].mxu0 %v1721
    %v1809 = vpop.f32.mrb[0].mxu0
    %v1810 = vadd.f32 0.0, %v1809
    %v1811 = vpop.f32.mrb[0].mxu0
    %1812 = vdwg.mxu0
    %v1813 = vmul.f32 %v1790, 0.25
    %v1814 = vmul.f32 %v1795, 0.25
    %v1815 = vmul.f32 %v1800, 0.25
    %v1816 = vmul.f32 %v1805, 0.25
    %v1817 = vmul.f32 %v1810, 0.25
    %1819 = vset.pattern.permute.xlu0 0
    %1820 = vperm.xlu0 %1819, %v915
    %v1821 = vpop.permute.xlu0 %1820
    %1824 = vset.pattern.permute.xlu0 0
    %1825 = vperm.xlu0 %1824, %v916
    %v1826 = vpop.permute.xlu0 %1825
    %1829 = vset.pattern.permute.xlu0 0
    %1830 = vperm.xlu0 %1829, %v917
    %v1831 = vpop.permute.xlu0 %1830
    %1834 = vset.pattern.permute.xlu0 0
    %1835 = vperm.xlu0 %1834, %v918
    %v1836 = vpop.permute.xlu0 %1835
    %1839 = vset.pattern.permute.xlu0 0
    %1840 = vperm.xlu0 %1839, %v919
    %v1841 = vpop.permute.xlu0 %1840
    %v1843 = vmul.f32 %v1390, %v1821
    %v1844 = vmul.f32 %v1395, %v1826
    %v1845 = vmul.f32 %v1400, %v1831
    %v1846 = vmul.f32 %v1405, %v1836
    %v1847 = vmul.f32 %v1410, %v1841
    %1849 = vset.pattern.permute.xlu0 1
    %1850 = vperm.xlu0 %1849, %v935
    %v1851 = vpop.permute.xlu0 %1850
    %1854 = vset.pattern.permute.xlu0 1
    %1855 = vperm.xlu0 %1854, %v936
    %v1856 = vpop.permute.xlu0 %1855
    %1859 = vset.pattern.permute.xlu0 1
    %1860 = vperm.xlu0 %1859, %v937
    %v1861 = vpop.permute.xlu0 %1860
    %1864 = vset.pattern.permute.xlu0 1
    %1865 = vperm.xlu0 %1864, %v938
    %v1866 = vpop.permute.xlu0 %1865
    %1869 = vset.pattern.permute.xlu0 1
    %1870 = vperm.xlu0 %1869, %v939
    %v1871 = vpop.permute.xlu0 %1870
    %v1873 = vmul.f32 %v1390, %v1851
    %v1874 = vmul.f32 %v1395, %v1856
    %v1875 = vmul.f32 %v1400, %v1861
    %v1876 = vmul.f32 %v1405, %v1866
    %v1877 = vmul.f32 %v1410, %v1871
    %1883 = vrot.lane.b32.xlu0 %v1873, 120
    %v1884 = vpop.permute.xlu0 %1883
    %1885 = vrot.lane.b32.xlu0 %v1874, 120
    %v1886 = vpop.permute.xlu0 %1885
    %1887 = vrot.lane.b32.xlu0 %v1875, 120
    %v1888 = vpop.permute.xlu0 %1887
    %1889 = vrot.lane.b32.xlu0 %v1876, 120
    %v1890 = vpop.permute.xlu0 %1889
    %1891 = vrot.lane.b32.xlu0 %v1877, 120
    %v1892 = vpop.permute.xlu0 %1891
    %v1898 = vadd.f32 %v1843, %v1884
    %v1899 = vadd.f32 %v1844, %v1886
    %v1900 = vadd.f32 %v1845, %v1888
    %v1901 = vadd.f32 %v1846, %v1890
    %v1902 = vadd.f32 %v1847, %v1892
    %1904 = vset.pattern.permute.xlu0 2
    %1905 = vperm.xlu0 %1904, %v955
    %v1906 = vpop.permute.xlu0 %1905
    %1909 = vset.pattern.permute.xlu0 2
    %1910 = vperm.xlu0 %1909, %v956
    %v1911 = vpop.permute.xlu0 %1910
    %1914 = vset.pattern.permute.xlu0 2
    %1915 = vperm.xlu0 %1914, %v957
    %v1916 = vpop.permute.xlu0 %1915
    %1919 = vset.pattern.permute.xlu0 2
    %1920 = vperm.xlu0 %1919, %v958
    %v1921 = vpop.permute.xlu0 %1920
    %1924 = vset.pattern.permute.xlu0 2
    %1925 = vperm.xlu0 %1924, %v959
    %v1926 = vpop.permute.xlu0 %1925
    %v1928 = vmul.f32 %v1390, %v1906
    %v1929 = vmul.f32 %v1395, %v1911
    %v1930 = vmul.f32 %v1400, %v1916
    %v1931 = vmul.f32 %v1405, %v1921
    %v1932 = vmul.f32 %v1410, %v1926
    %1938 = vrot.lane.b32.xlu0 %v1928, 112
    %v1939 = vpop.permute.xlu0 %1938
    %1940 = vrot.lane.b32.xlu0 %v1929, 112
    %v1941 = vpop.permute.xlu0 %1940
    %1942 = vrot.lane.b32.xlu0 %v1930, 112
    %v1943 = vpop.permute.xlu0 %1942
    %1944 = vrot.lane.b32.xlu0 %v1931, 112
    %v1945 = vpop.permute.xlu0 %1944
    %1946 = vrot.lane.b32.xlu0 %v1932, 112
    %v1947 = vpop.permute.xlu0 %1946
    %v1953 = vadd.f32 %v1898, %v1939
    %v1954 = vadd.f32 %v1899, %v1941
    %v1955 = vadd.f32 %v1900, %v1943
    %v1956 = vadd.f32 %v1901, %v1945
    %v1957 = vadd.f32 %v1902, %v1947
    %v1958 = vmul.f32 %v1813, %v1390
    %v1959 = vmul.f32 %v1814, %v1395
    %v1960 = vmul.f32 %v1815, %v1400
    %v1961 = vmul.f32 %v1816, %v1405
    %v1962 = vmul.f32 %v1817, %v1410
    %v1963 = vmul.f32 %v1813, %v1953
    %v1964 = vmul.f32 %v1814, %v1954
    %v1965 = vmul.f32 %v1815, %v1955
    %v1966 = vmul.f32 %v1816, %v1956
    %v1967 = vmul.f32 %v1817, %v1957
    %v1968 = vmul.f32 %v1963, 0.57735026
    %v1969 = vmul.f32 %v1964, 0.57735026
    %v1970 = vmul.f32 %v1965, 0.57735026
    %v1971 = vmul.f32 %v1966, 0.57735026
    %v1972 = vmul.f32 %v1967, 0.57735026
    %1978 = vrot.lane.b32.xlu0 %v1968, 120
    %v1979 = vpop.permute.xlu0 %1978
    %1980 = vrot.lane.b32.xlu0 %v1969, 120
    %v1981 = vpop.permute.xlu0 %1980
    %1982 = vrot.lane.b32.xlu0 %v1970, 120
    %v1983 = vpop.permute.xlu0 %1982
    %1984 = vrot.lane.b32.xlu0 %v1971, 120
    %v1985 = vpop.permute.xlu0 %1984
    %1986 = vrot.lane.b32.xlu0 %v1972, 120
    %v1987 = vpop.permute.xlu0 %1986
    %v1993 = vadd.f32 %v1958, %v1979
    %v1994 = vadd.f32 %v1959, %v1981
    %v1995 = vadd.f32 %v1960, %v1983
    %v1996 = vadd.f32 %v1961, %v1985
    %v1997 = vadd.f32 %v1962, %v1987
    %v1998 = vsub.f32 %v1928, %v1884
    %v1999 = vsub.f32 %v1929, %v1886
    %v2000 = vsub.f32 %v1930, %v1888
    %v2001 = vsub.f32 %v1931, %v1890
    %v2002 = vsub.f32 %v1932, %v1892
    %2003 = vrot.lane.b32.xlu0 %v1928, 16
    %v2004 = vpop.permute.xlu0 %2003
    %2005 = vrot.lane.b32.xlu0 %v1929, 16
    %v2006 = vpop.permute.xlu0 %2005
    %2007 = vrot.lane.b32.xlu0 %v1930, 16
    %v2008 = vpop.permute.xlu0 %2007
    %2009 = vrot.lane.b32.xlu0 %v1931, 16
    %v2010 = vpop.permute.xlu0 %2009
    %2011 = vrot.lane.b32.xlu0 %v1932, 16
    %v2012 = vpop.permute.xlu0 %2011
    %v2018 = vsub.f32 %v1843, %v2004
    %v2019 = vsub.f32 %v1844, %v2006
    %v2020 = vsub.f32 %v1845, %v2008
    %v2021 = vsub.f32 %v1846, %v2010
    %v2022 = vsub.f32 %v1847, %v2012
    %2028 = vrot.lane.b32.xlu0 %v1843, 120
    %v2029 = vpop.permute.xlu0 %2028
    %2030 = vrot.lane.b32.xlu0 %v1844, 120
    %v2031 = vpop.permute.xlu0 %2030
    %2032 = vrot.lane.b32.xlu0 %v1845, 120
    %v2033 = vpop.permute.xlu0 %2032
    %2034 = vrot.lane.b32.xlu0 %v1846, 120
    %v2035 = vpop.permute.xlu0 %2034
    %2036 = vrot.lane.b32.xlu0 %v1847, 120
    %v2037 = vpop.permute.xlu0 %2036
    %v2043 = vsub.f32 %v1873, %v2029
    %v2044 = vsub.f32 %v1874, %v2031
    %v2045 = vsub.f32 %v1875, %v2033
    %v2046 = vsub.f32 %v1876, %v2035
    %v2047 = vsub.f32 %v1877, %v2037
    %2053 = vrot.lane.b32.xlu0 %v1390, 16
    %v2054 = vpop.permute.xlu0 %2053
    %2055 = vrot.lane.b32.xlu0 %v1395, 16
    %v2056 = vpop.permute.xlu0 %2055
    %2057 = vrot.lane.b32.xlu0 %v1400, 16
    %v2058 = vpop.permute.xlu0 %2057
    %2059 = vrot.lane.b32.xlu0 %v1405, 16
    %v2060 = vpop.permute.xlu0 %2059
    %2061 = vrot.lane.b32.xlu0 %v1410, 16
    %v2062 = vpop.permute.xlu0 %2061
    %v2068 = vmul.f32 %v1813, %v2054
    %v2069 = vmul.f32 %v1814, %v2056
    %v2070 = vmul.f32 %v1815, %v2058
    %v2071 = vmul.f32 %v1816, %v2060
    %v2072 = vmul.f32 %v1817, %v2062
    %v2073 = vmul.f32 %v2068, %v1821
    %v2074 = vmul.f32 %v2069, %v1826
    %v2075 = vmul.f32 %v2070, %v1831
    %v2076 = vmul.f32 %v2071, %v1836
    %v2077 = vmul.f32 %v2072, %v1841
    %2083 = vrot.lane.b32.xlu0 %v2068, 120
    %v2084 = vpop.permute.xlu0 %2083
    %2085 = vrot.lane.b32.xlu0 %v2069, 120
    %v2086 = vpop.permute.xlu0 %2085
    %2087 = vrot.lane.b32.xlu0 %v2070, 120
    %v2088 = vpop.permute.xlu0 %2087
    %2089 = vrot.lane.b32.xlu0 %v2071, 120
    %v2090 = vpop.permute.xlu0 %2089
    %2091 = vrot.lane.b32.xlu0 %v2072, 120
    %v2092 = vpop.permute.xlu0 %2091
    %v2098 = vadd.f32 %v2073, %v2084
    %v2099 = vadd.f32 %v2074, %v2086
    %v2100 = vadd.f32 %v2075, %v2088
    %v2101 = vadd.f32 %v2076, %v2090
    %v2102 = vadd.f32 %v2077, %v2092
    %2108 = vrot.lane.b32.xlu0 %v1998, 16
    %v2109 = vpop.permute.xlu0 %2108
    %2110 = vrot.lane.b32.xlu0 %v1999, 16
    %v2111 = vpop.permute.xlu0 %2110
    %2112 = vrot.lane.b32.xlu0 %v2000, 16
    %v2113 = vpop.permute.xlu0 %2112
    %2114 = vrot.lane.b32.xlu0 %v2001, 16
    %v2115 = vpop.permute.xlu0 %2114
    %2116 = vrot.lane.b32.xlu0 %v2002, 16
    %v2117 = vpop.permute.xlu0 %2116
    %v2123 = vmul.f32 %v1813, %v2109
    %v2124 = vmul.f32 %v1814, %v2111
    %v2125 = vmul.f32 %v1815, %v2113
    %v2126 = vmul.f32 %v1816, %v2115
    %v2127 = vmul.f32 %v1817, %v2117
    %v2128 = vmul.f32 %v2123, 0.70710677
    %v2129 = vmul.f32 %v2124, 0.70710677
    %v2130 = vmul.f32 %v2125, 0.70710677
    %v2131 = vmul.f32 %v2126, 0.70710677
    %v2132 = vmul.f32 %v2127, 0.70710677
    %2138 = vrot.lane.b32.xlu0 %v2128, 112
    %v2139 = vpop.permute.xlu0 %2138
    %2140 = vrot.lane.b32.xlu0 %v2129, 112
    %v2141 = vpop.permute.xlu0 %2140
    %2142 = vrot.lane.b32.xlu0 %v2130, 112
    %v2143 = vpop.permute.xlu0 %2142
    %2144 = vrot.lane.b32.xlu0 %v2131, 112
    %v2145 = vpop.permute.xlu0 %2144
    %2146 = vrot.lane.b32.xlu0 %v2132, 112
    %v2147 = vpop.permute.xlu0 %2146
    %v2153 = vadd.f32 %v2098, %v2139
    %v2154 = vadd.f32 %v2099, %v2141
    %v2155 = vadd.f32 %v2100, %v2143
    %v2156 = vadd.f32 %v2101, %v2145
    %v2157 = vadd.f32 %v2102, %v2147
    %v2158 = vmul.f32 %v2068, %v1851
    %v2159 = vmul.f32 %v2069, %v1856
    %v2160 = vmul.f32 %v2070, %v1861
    %v2161 = vmul.f32 %v2071, %v1866
    %v2162 = vmul.f32 %v2072, %v1871
    %2163 = vrot.lane.b32.xlu0 %v1390, 8
    %v2164 = vpop.permute.xlu0 %2163
    %2165 = vrot.lane.b32.xlu0 %v1395, 8
    %v2166 = vpop.permute.xlu0 %2165
    %2167 = vrot.lane.b32.xlu0 %v1400, 8
    %v2168 = vpop.permute.xlu0 %2167
    %2169 = vrot.lane.b32.xlu0 %v1405, 8
    %v2170 = vpop.permute.xlu0 %2169
    %2171 = vrot.lane.b32.xlu0 %v1410, 8
    %v2172 = vpop.permute.xlu0 %2171
    %v2178 = vmul.f32 %v1813, %v2164
    %v2179 = vmul.f32 %v1814, %v2166
    %v2180 = vmul.f32 %v1815, %v2168
    %v2181 = vmul.f32 %v1816, %v2170
    %v2182 = vmul.f32 %v1817, %v2172
    %2188 = vrot.lane.b32.xlu0 %v2178, 120
    %v2189 = vpop.permute.xlu0 %2188
    %2190 = vrot.lane.b32.xlu0 %v2179, 120
    %v2191 = vpop.permute.xlu0 %2190
    %2192 = vrot.lane.b32.xlu0 %v2180, 120
    %v2193 = vpop.permute.xlu0 %2192
    %2194 = vrot.lane.b32.xlu0 %v2181, 120
    %v2195 = vpop.permute.xlu0 %2194
    %2196 = vrot.lane.b32.xlu0 %v2182, 120
    %v2197 = vpop.permute.xlu0 %2196
    %v2203 = vadd.f32 %v2158, %v2189
    %v2204 = vadd.f32 %v2159, %v2191
    %v2205 = vadd.f32 %v2160, %v2193
    %v2206 = vadd.f32 %v2161, %v2195
    %v2207 = vadd.f32 %v2162, %v2197
    %2213 = vrot.lane.b32.xlu0 %v2018, 8
    %v2214 = vpop.permute.xlu0 %2213
    %2215 = vrot.lane.b32.xlu0 %v2019, 8
    %v2216 = vpop.permute.xlu0 %2215
    %2217 = vrot.lane.b32.xlu0 %v2020, 8
    %v2218 = vpop.permute.xlu0 %2217
    %2219 = vrot.lane.b32.xlu0 %v2021, 8
    %v2220 = vpop.permute.xlu0 %2219
    %2221 = vrot.lane.b32.xlu0 %v2022, 8
    %v2222 = vpop.permute.xlu0 %2221
    %v2228 = vmul.f32 %v1813, %v2214
    %v2229 = vmul.f32 %v1814, %v2216
    %v2230 = vmul.f32 %v1815, %v2218
    %v2231 = vmul.f32 %v1816, %v2220
    %v2232 = vmul.f32 %v1817, %v2222
    %v2233 = vmul.f32 %v2228, 0.70710677
    %v2234 = vmul.f32 %v2229, 0.70710677
    %v2235 = vmul.f32 %v2230, 0.70710677
    %v2236 = vmul.f32 %v2231, 0.70710677
    %v2237 = vmul.f32 %v2232, 0.70710677
    %2243 = vrot.lane.b32.xlu0 %v2233, 112
    %v2244 = vpop.permute.xlu0 %2243
    %2245 = vrot.lane.b32.xlu0 %v2234, 112
    %v2246 = vpop.permute.xlu0 %2245
    %2247 = vrot.lane.b32.xlu0 %v2235, 112
    %v2248 = vpop.permute.xlu0 %2247
    %2249 = vrot.lane.b32.xlu0 %v2236, 112
    %v2250 = vpop.permute.xlu0 %2249
    %2251 = vrot.lane.b32.xlu0 %v2237, 112
    %v2252 = vpop.permute.xlu0 %2251
    %v2258 = vadd.f32 %v2203, %v2244
    %v2259 = vadd.f32 %v2204, %v2246
    %v2260 = vadd.f32 %v2205, %v2248
    %v2261 = vadd.f32 %v2206, %v2250
    %v2262 = vadd.f32 %v2207, %v2252
    %v2263 = vmul.f32 %v2068, %v1906
    %v2264 = vmul.f32 %v2069, %v1911
    %v2265 = vmul.f32 %v2070, %v1916
    %v2266 = vmul.f32 %v2071, %v1921
    %v2267 = vmul.f32 %v2072, %v1926
    %2273 = vrot.lane.b32.xlu0 %v1958, 120
    %v2274 = vpop.permute.xlu0 %2273
    %2275 = vrot.lane.b32.xlu0 %v1959, 120
    %v2276 = vpop.permute.xlu0 %2275
    %2277 = vrot.lane.b32.xlu0 %v1960, 120
    %v2278 = vpop.permute.xlu0 %2277
    %2279 = vrot.lane.b32.xlu0 %v1961, 120
    %v2280 = vpop.permute.xlu0 %2279
    %2281 = vrot.lane.b32.xlu0 %v1962, 120
    %v2282 = vpop.permute.xlu0 %2281
    %v2288 = vadd.f32 %v2263, %v2274
    %v2289 = vadd.f32 %v2264, %v2276
    %v2290 = vadd.f32 %v2265, %v2278
    %v2291 = vadd.f32 %v2266, %v2280
    %v2292 = vadd.f32 %v2267, %v2282
    %2298 = vrot.lane.b32.xlu0 %v2043, 24
    %v2299 = vpop.permute.xlu0 %2298
    %2300 = vrot.lane.b32.xlu0 %v2044, 24
    %v2301 = vpop.permute.xlu0 %2300
    %2302 = vrot.lane.b32.xlu0 %v2045, 24
    %v2303 = vpop.permute.xlu0 %2302
    %2304 = vrot.lane.b32.xlu0 %v2046, 24
    %v2305 = vpop.permute.xlu0 %2304
    %2306 = vrot.lane.b32.xlu0 %v2047, 24
    %v2307 = vpop.permute.xlu0 %2306
    %v2313 = vmul.f32 %v1813, %v2299
    %v2314 = vmul.f32 %v1814, %v2301
    %v2315 = vmul.f32 %v1815, %v2303
    %v2316 = vmul.f32 %v1816, %v2305
    %v2317 = vmul.f32 %v1817, %v2307
    %v2318 = vmul.f32 %v2313, 0.70710677
    %v2319 = vmul.f32 %v2314, 0.70710677
    %v2320 = vmul.f32 %v2315, 0.70710677
    %v2321 = vmul.f32 %v2316, 0.70710677
    %v2322 = vmul.f32 %v2317, 0.70710677
    %2328 = vrot.lane.b32.xlu0 %v2318, 112
    %v2329 = vpop.permute.xlu0 %2328
    %2330 = vrot.lane.b32.xlu0 %v2319, 112
    %v2331 = vpop.permute.xlu0 %2330
    %2332 = vrot.lane.b32.xlu0 %v2320, 112
    %v2333 = vpop.permute.xlu0 %2332
    %2334 = vrot.lane.b32.xlu0 %v2321, 112
    %v2335 = vpop.permute.xlu0 %2334
    %2336 = vrot.lane.b32.xlu0 %v2322, 112
    %v2337 = vpop.permute.xlu0 %2336
    %v2343 = vadd.f32 %v2288, %v2329
    %v2344 = vadd.f32 %v2289, %v2331
    %v2345 = vadd.f32 %v2290, %v2333
    %v2346 = vadd.f32 %v2291, %v2335
    %v2347 = vadd.f32 %v2292, %v2337
    %2353 = vrot.lane.b32.xlu0 %v2153, 120
    %v2354 = vpop.permute.xlu0 %2353
    %2355 = vrot.lane.b32.xlu0 %v2154, 120
    %v2356 = vpop.permute.xlu0 %2355
    %2357 = vrot.lane.b32.xlu0 %v2155, 120
    %v2358 = vpop.permute.xlu0 %2357
    %2359 = vrot.lane.b32.xlu0 %v2156, 120
    %v2360 = vpop.permute.xlu0 %2359
    %2361 = vrot.lane.b32.xlu0 %v2157, 120
    %v2362 = vpop.permute.xlu0 %2361
    %2373 = vrot.lane.b32.xlu0 %v2343, 8
    %v2374 = vpop.permute.xlu0 %2373
    %2375 = vrot.lane.b32.xlu0 %v2344, 8
    %v2376 = vpop.permute.xlu0 %2375
    %2377 = vrot.lane.b32.xlu0 %v2345, 8
    %v2378 = vpop.permute.xlu0 %2377
    %2379 = vrot.lane.b32.xlu0 %v2346, 8
    %v2380 = vpop.permute.xlu0 %2379
    %2381 = vrot.lane.b32.xlu0 %v2347, 8
    %v2382 = vpop.permute.xlu0 %2381
    %v2388 = vsel %vm1051, %v1993, %v2354
    %v2389 = vsel %vm1051, %v1994, %v2356
    %v2390 = vsel %vm1051, %v1995, %v2358
    %v2391 = vsel %vm1051, %v1996, %v2360
    %v2392 = vsel %vm1051, %v1997, %v2362
    %v2393 = vsel %vm1054, %v2388, %v2258
    %v2394 = vsel %vm1054, %v2389, %v2259
    %v2395 = vsel %vm1054, %v2390, %v2260
    %v2396 = vsel %vm1054, %v2391, %v2261
    %v2397 = vsel %vm1054, %v2392, %v2262
    %v2398 = vsel %vm1057, %v2393, %v2374
    %v2399 = vsel %vm1057, %v2394, %v2376
    %v2400 = vsel %vm1057, %v2395, %v2378
    %v2401 = vsel %vm1057, %v2396, %v2380
    %v2402 = vsel %vm1057, %v2397, %v2382
    %vm2403 = vcmask 326656
    %v2405 = vsel %vm2403, %v1065, 0
    %v2408 = vsel %vm2403, %v1066, 0
    %2410 = vmatprep.subr.mxu0 0.0
    %2411 = vmatpush1.msra.mxu0 %v2398
    %2412 = vmatprep.subr.mxu0 0.0
    %2413 = vmatpush1.msra.mxu0 %v2399
    %2414 = vmatprep.subr.mxu0 0.0
    %2415 = vmatpush1.msra.mxu0 %v2400
    %2416 = vmatprep.subr.mxu0 0.0
    %2417 = vmatpush1.msra.mxu0 %v2401
    %2418 = vmatprep.subr.mxu0 0.0
    %2419 = vmatpush1.msra.mxu0 %v2402
    %2420 = vmatprep.subr.mxu0 0.0
    %2421 = vmatpush1.msra.mxu0 0.0
    %2422 = vmatprep.subr.mxu0 0.0
    %2423 = vmatpush1.msra.mxu0 0.0
    %2424 = vmatprep.subr.mxu0 0.0
    %2425 = vmatpush1.msra.mxu0 0.0
    %2426 = vmatprep.subr.mxu0 0.0
    %2427 = vmatpush1.msra.mxu0 0.0
    %2428 = vmatprep.subr.mxu0 0.0
    %2429 = vmatpush1.msra.mxu0 0.0
    %2430 = vmatprep.subr.mxu0 0.0
    %2431 = vmatpush1.msra.mxu0 0.0
    %2432 = vmatprep.subr.mxu0 0.0
    %2433 = vmatpush1.msra.mxu0 0.0
    %2434 = vmatprep.subr.mxu0 0.0
    %2435 = vmatpush1.msra.mxu0 0.0
    %2436 = vmatprep.subr.mxu0 0.0
    %2437 = vmatpush1.msra.mxu0 0.0
    %2438 = vmatprep.subr.mxu0 0.0
    %2439 = vmatpush1.msra.mxu0 0.0
    %2440 = vmatprep.subr.mxu0 0.0
    %2441 = vmatpush1.msra.mxu0 0.0
    %2442 = vmatprep.subr.mxu0 0.0
    %2443 = vmatpush1.msra.mxu0 0.0
    %2444 = vmatprep.subr.mxu0 0.0
    %2445 = vmatpush1.msra.mxu0 0.0
    %2446 = vmatprep.subr.mxu0 0.0
    %2447 = vmatpush1.msra.mxu0 0.0
    %2448 = vmatprep.subr.mxu0 0.0
    %2449 = vmatpush1.msra.mxu0 0.0
    %2450 = vmatprep.subr.mxu0 0.0
    %2451 = vmatpush1.msra.mxu0 0.0
    %2452 = vmatprep.subr.mxu0 0.0
    %2453 = vmatpush1.msra.mxu0 0.0
    %2454 = vmatprep.subr.mxu0 0.0
    %2455 = vmatpush1.msra.mxu0 0.0
    %2456 = vmatprep.subr.mxu0 0.0
    %2457 = vmatpush1.msra.mxu0 0.0
    %2458 = vmatprep.subr.mxu0 0.0
    %2459 = vmatpush1.msra.mxu0 0.0
    %2460 = vmatprep.subr.mxu0 0.0
    %2461 = vmatpush1.msra.mxu0 0.0
    %2462 = vmatprep.subr.mxu0 0.0
    %2463 = vmatpush1.msra.mxu0 0.0
    %2464 = vmatprep.subr.mxu0 0.0
    %2465 = vmatpush1.msra.mxu0 0.0
    %2466 = vmatprep.subr.mxu0 0.0
    %2467 = vmatpush1.msra.mxu0 0.0
    %2468 = vmatprep.subr.mxu0 0.0
    %2469 = vmatpush1.msra.mxu0 0.0
    %2470 = vmatprep.subr.mxu0 0.0
    %2471 = vmatpush1.msra.mxu0 0.0
    %2472 = vmatprep.subr.mxu0 0.0
    %2473 = vmatpush1.msra.mxu0 0.0
    %2474 = vmatprep.mubr.f32.mxu0 0.0
    %2475 = vmatmul.mubr.f32.gmra.mrb[0].mxu0 %v2405
    %v2476 = vpop.f32.mrb[0].mxu0
    %v2477 = vadd.f32 0.0, %v2476
    %v2478 = vpop.f32.mrb[0].mxu0
    %2479 = vmatprep.mubr.f32.mxu0 0.0
    %2480 = vmatmul.mubr.f32.gmra.mrb[0].mxu0 %v2408
    %v2481 = vpop.f32.mrb[0].mxu0
    %v2482 = vadd.f32 0.0, %v2481
    %v2483 = vpop.f32.mrb[0].mxu0
    %2484 = vdwg.mxu0
    %v2485 = vmul.f32 %v2477, 0.57735026
    %v2486 = vmul.f32 %v2482, 0.57735026
    %v2487 = vld [vmem:[#allocation9] sm:$0xff]
    %v2488 = vld [vmem:[#allocation9 + $0x8] sm:$0xff]
    %v2489 = vld [vmem:[#allocation9 + $0x10] sm:$0xff]
    %v2490 = vld [vmem:[#allocation9 + $0x18] sm:$0xff]
    %v2492 = vsel %vm1071, %v2485, 0
    %v2495 = vsel %vm1071, %v2486, 0
    %2497 = vmatprep.subr.mxu0 0.0
    %2498 = vmatpush1.msra.mxu0 %v2487
    %2499 = vmatprep.subr.mxu0 0.0
    %2500 = vmatpush1.msra.mxu0 %v2488
    %2501 = vmatprep.subr.mxu0 0.0
    %2502 = vmatpush1.msra.mxu0 %v2489
    %2503 = vmatprep.subr.mxu0 0.0
    %2504 = vmatpush1.msra.mxu0 %v2490
    %2505 = vmatprep.subr.mxu0 0.0
    %2506 = vmatpush1.msra.mxu0 0.0
    %2507 = vmatprep.subr.mxu0 0.0
    %2508 = vmatpush1.msra.mxu0 0.0
    %2509 = vmatprep.subr.mxu0 0.0
    %2510 = vmatpush1.msra.mxu0 0.0
    %2511 = vmatprep.subr.mxu0 0.0
    %2512 = vmatpush1.msra.mxu0 0.0
    %2513 = vmatprep.subr.mxu0 0.0
    %2514 = vmatpush1.msra.mxu0 0.0
    %2515 = vmatprep.subr.mxu0 0.0
    %2516 = vmatpush1.msra.mxu0 0.0
    %2517 = vmatprep.subr.mxu0 0.0
    %2518 = vmatpush1.msra.mxu0 0.0
    %2519 = vmatprep.subr.mxu0 0.0
    %2520 = vmatpush1.msra.mxu0 0.0
    %2521 = vmatprep.subr.mxu0 0.0
    %2522 = vmatpush1.msra.mxu0 0.0
    %2523 = vmatprep.subr.mxu0 0.0
    %2524 = vmatpush1.msra.mxu0 0.0
    %2525 = vmatprep.subr.mxu0 0.0
    %2526 = vmatpush1.msra.mxu0 0.0
    %2527 = vmatprep.subr.mxu0 0.0
    %2528 = vmatpush1.msra.mxu0 0.0
    %2529 = vmatprep.subr.mxu0 0.0
    %2530 = vmatpush1.msra.mxu0 0.0
    %2531 = vmatprep.subr.mxu0 0.0
    %2532 = vmatpush1.msra.mxu0 0.0
    %2533 = vmatprep.subr.mxu0 0.0
    %2534 = vmatpush1.msra.mxu0 0.0
    %2535 = vmatprep.subr.mxu0 0.0
    %2536 = vmatpush1.msra.mxu0 0.0
    %2537 = vmatprep.subr.mxu0 0.0
    %2538 = vmatpush1.msra.mxu0 0.0
    %2539 = vmatprep.subr.mxu0 0.0
    %2540 = vmatpush1.msra.mxu0 0.0
    %2541 = vmatprep.subr.mxu0 0.0
    %2542 = vmatpush1.msra.mxu0 0.0
    %2543 = vmatprep.subr.mxu0 0.0
    %2544 = vmatpush1.msra.mxu0 0.0
    %2545 = vmatprep.subr.mxu0 0.0
    %2546 = vmatpush1.msra.mxu0 0.0
    %2547 = vmatprep.subr.mxu0 0.0
    %2548 = vmatpush1.msra.mxu0 0.0
    %2549 = vmatprep.subr.mxu0 0.0
    %2550 = vmatpush1.msra.mxu0 0.0
    %2551 = vmatprep.subr.mxu0 0.0
    %2552 = vmatpush1.msra.mxu0 0.0
    %2553 = vmatprep.subr.mxu0 0.0
    %2554 = vmatpush1.msra.mxu0 0.0
    %2555 = vmatprep.subr.mxu0 0.0
    %2556 = vmatpush1.msra.mxu0 0.0
    %2557 = vmatprep.subr.mxu0 0.0
    %2558 = vmatpush1.msra.mxu0 0.0
    %2559 = vmatprep.subr.mxu0 0.0
    %2560 = vmatpush1.msra.mxu0 0.0
    %2561 = vmatprep.mubr.f32.mxu0 0.0
    %2562 = vmatmul.mubr.f32.gmra.mrb[0].mxu0 %v2492
    %v2563 = vpop.f32.mrb[0].mxu0
    %v2564 = vadd.f32 0.0, %v2563
    %v2565 = vpop.f32.mrb[0].mxu0
    %2566 = vmatprep.mubr.f32.mxu0 0.0
    %2567 = vmatmul.mubr.f32.gmra.mrb[0].mxu0 %v2495
    %v2568 = vpop.f32.mrb[0].mxu0
    %v2569 = vadd.f32 0.0, %v2568
    %v2570 = vpop.f32.mrb[0].mxu0
    %2571 = vdwg.mxu0
    %v2572 = vmul.f32 %v2564, 0.35355338
    %v2573 = vmul.f32 %v2569, 0.35355338
    %v2574 = vadd.f32 %v2572, %v1225
    %v2575 = vadd.f32 %v2573, %v1226
    %v2576 = vxor.u32 %v2574, 2147483648
    %v2577 = vxor.u32 %v2575, 2147483648
    %v2578 = vmul.f32 %v2576, 1.442695
    %v2579 = vpow.pop %v2578
    %v2580 = vmul.f32 %v2577, 1.442695
    %v2581 = vpow.pop %v2580
    %v2582 = vadd.f32 %v2579, 1.0
    %v2583 = vadd.f32 %v2581, 1.0
    %v2584 = vrcp.pop %v2582
    %v2585 = vmul.f32 1.0, %v2584
    %v2586 = vrcp.pop %v2583
    %v2587 = vmul.f32 1.0, %v2586
    %2590 = vrot.lane.b32.xlu0 %v2585, 8
    %v2591 = vpop.permute.xlu0 %2590
    %2592 = vrot.lane.b32.xlu0 %v2587, 8
    %v2593 = vpop.permute.xlu0 %2592
    %2596 = vrot.lane.b32.xlu0 %v2585, 16
    %v2597 = vpop.permute.xlu0 %2596
    %2598 = vrot.lane.b32.xlu0 %v2587, 16
    %v2599 = vpop.permute.xlu0 %2598
    %2602 = vrot.lane.b32.xlu0 %v2585, 24
    %v2603 = vpop.permute.xlu0 %2602
    %2604 = vrot.lane.b32.xlu0 %v2587, 24
    %v2605 = vpop.permute.xlu0 %2604
    %v2608 = vsel %vm1051, %v2585, %v2591
    %v2609 = vsel %vm1051, %v2587, %v2593
    %v2610 = vsel %vm1054, %v2608, %v2597
    %v2611 = vsel %vm1054, %v2609, %v2599
    %v2612 = vsel %vm1057, %v2610, %v2603
    %v2613 = vsel %vm1057, %v2611, %v2605
    %v2614 = vmul.f32 %v2574, %v2612
    %v2615 = vmul.f32 %v2575, %v2613
    %s2616 = scalar_lea.vmem %s6, 32
    %v2617 = vld [vmem:[%s2616] sm:$0xff]
    %v2618 = vld [vmem:[%s2616 + $0x8] sm:$0xff]
    %v2619 = vld [vmem:[%s2616 + $0x10] sm:$0xff]
    %v2620 = vld [vmem:[%s2616 + $0x18] sm:$0xff]
    %v2622 = vsel %vm1071, %v2614, 0
    %v2625 = vsel %vm1071, %v2615, 0
    %2627 = vmatprep.subr.mxu0 0.0
    %2628 = vmatpush1.msra.mxu0 %v2617
    %2629 = vmatprep.subr.mxu0 0.0
    %2630 = vmatpush1.msra.mxu0 %v2618
    %2631 = vmatprep.subr.mxu0 0.0
    %2632 = vmatpush1.msra.mxu0 %v2619
    %2633 = vmatprep.subr.mxu0 0.0
    %2634 = vmatpush1.msra.mxu0 %v2620
    %2635 = vmatprep.subr.mxu0 0.0
    %2636 = vmatpush1.msra.mxu0 0.0
    %2637 = vmatprep.subr.mxu0 0.0
    %2638 = vmatpush1.msra.mxu0 0.0
    %2639 = vmatprep.subr.mxu0 0.0
    %2640 = vmatpush1.msra.mxu0 0.0
    %2641 = vmatprep.subr.mxu0 0.0
    %2642 = vmatpush1.msra.mxu0 0.0
    %2643 = vmatprep.subr.mxu0 0.0
    %2644 = vmatpush1.msra.mxu0 0.0
    %2645 = vmatprep.subr.mxu0 0.0
    %2646 = vmatpush1.msra.mxu0 0.0
    %2647 = vmatprep.subr.mxu0 0.0
    %2648 = vmatpush1.msra.mxu0 0.0
    %2649 = vmatprep.subr.mxu0 0.0
    %2650 = vmatpush1.msra.mxu0 0.0
    %2651 = vmatprep.subr.mxu0 0.0
    %2652 = vmatpush1.msra.mxu0 0.0
    %2653 = vmatprep.subr.mxu0 0.0
    %2654 = vmatpush1.msra.mxu0 0.0
    %2655 = vmatprep.subr.mxu0 0.0
    %2656 = vmatpush1.msra.mxu0 0.0
    %2657 = vmatprep.subr.mxu0 0.0
    %2658 = vmatpush1.msra.mxu0 0.0
    %2659 = vmatprep.subr.mxu0 0.0
    %2660 = vmatpush1.msra.mxu0 0.0
    %2661 = vmatprep.subr.mxu0 0.0
    %2662 = vmatpush1.msra.mxu0 0.0
    %2663 = vmatprep.subr.mxu0 0.0
    %2664 = vmatpush1.msra.mxu0 0.0
    %2665 = vmatprep.subr.mxu0 0.0
    %2666 = vmatpush1.msra.mxu0 0.0
    %2667 = vmatprep.subr.mxu0 0.0
    %2668 = vmatpush1.msra.mxu0 0.0
    %2669 = vmatprep.subr.mxu0 0.0
    %2670 = vmatpush1.msra.mxu0 0.0
    %2671 = vmatprep.subr.mxu0 0.0
    %2672 = vmatpush1.msra.mxu0 0.0
    %2673 = vmatprep.subr.mxu0 0.0
    %2674 = vmatpush1.msra.mxu0 0.0
    %2675 = vmatprep.subr.mxu0 0.0
    %2676 = vmatpush1.msra.mxu0 0.0
    %2677 = vmatprep.subr.mxu0 0.0
    %2678 = vmatpush1.msra.mxu0 0.0
    %2679 = vmatprep.subr.mxu0 0.0
    %2680 = vmatpush1.msra.mxu0 0.0
    %2681 = vmatprep.subr.mxu0 0.0
    %2682 = vmatpush1.msra.mxu0 0.0
    %2683 = vmatprep.subr.mxu0 0.0
    %2684 = vmatpush1.msra.mxu0 0.0
    %2685 = vmatprep.subr.mxu0 0.0
    %2686 = vmatpush1.msra.mxu0 0.0
    %2687 = vmatprep.subr.mxu0 0.0
    %2688 = vmatpush1.msra.mxu0 0.0
    %2689 = vmatprep.subr.mxu0 0.0
    %2690 = vmatpush1.msra.mxu0 0.0
    %2691 = vmatprep.mubr.f32.mxu0 0.0
    %2692 = vmatmul.mubr.f32.gmra.mrb[0].mxu0 %v2622
    %v2693 = vpop.f32.mrb[0].mxu0
    %v2694 = vadd.f32 0.0, %v2693
    %v2695 = vpop.f32.mrb[0].mxu0
    %2696 = vmatprep.mubr.f32.mxu0 0.0
    %2697 = vmatmul.mubr.f32.gmra.mrb[0].mxu0 %v2625
    %v2698 = vpop.f32.mrb[0].mxu0
    %v2699 = vadd.f32 0.0, %v2698
    %v2700 = vpop.f32.mrb[0].mxu0
    %2701 = vdwg.mxu0
    %v2702 = vmul.f32 %v1155, %v2694
    %v2703 = vmul.f32 %v1159, %v2699
    %v2704 = vadd.f32 %v2702, 0.0
    %v2705 = vadd.f32 %v2703, 0.0
    %v2706 = vmul.f32 %v1167, %v2694
    %v2707 = vmul.f32 %v1171, %v2699
    %2710 = vrot.lane.b32.xlu0 %v2706, 96
    %v2711 = vpop.permute.xlu0 %2710
    %2712 = vrot.lane.b32.xlu0 %v2707, 96
    %v2713 = vpop.permute.xlu0 %2712
    %v2716 = vadd.f32 %v2704, %v2711
    %v2717 = vadd.f32 %v2705, %v2713
    %v2718 = vmul.f32 %v1187, %v2694
    %v2719 = vmul.f32 %v1191, %v2699
    %2722 = vrot.lane.b32.xlu0 %v2718, 64
    %v2723 = vpop.permute.xlu0 %2722
    %2724 = vrot.lane.b32.xlu0 %v2719, 64
    %v2725 = vpop.permute.xlu0 %2724
    %v2728 = vadd.f32 %v2716, %v2723
    %v2729 = vadd.f32 %v2717, %v2725
    %v2730 = vmul.f32 %v1207, %v2694
    %v2731 = vmul.f32 %v1211, %v2699
    %2734 = vrot.lane.b32.xlu0 %v2730, 32
    %v2735 = vpop.permute.xlu0 %2734
    %2736 = vrot.lane.b32.xlu0 %v2731, 32
    %v2737 = vpop.permute.xlu0 %2736
    %v2740 = vadd.f32 %v2728, %v2735
    %v2741 = vadd.f32 %v2729, %v2737
    %v2742 = vmul.f32 %v2740, 0.17677669
    %v2743 = vmul.f32 %v2741, 0.17677669
    %s2744 = scalar_lea.vmem %s7, 32
    %v2745 = vld [vmem:[%s2744] sm:$0xff]
    %v2746 = vld [vmem:[%s2744 + $0x8] sm:$0xff]
    %v2747 = vld [vmem:[%s2744 + $0x10] sm:$0xff]
    %v2748 = vld [vmem:[%s2744 + $0x18] sm:$0xff]
    %2749 = vmatprep.subr.mxu0 0.0
    %2750 = vmatpush1.msra.mxu0 %v2745
    %2751 = vmatprep.subr.mxu0 0.0
    %2752 = vmatpush1.msra.mxu0 %v2746
    %2753 = vmatprep.subr.mxu0 0.0
    %2754 = vmatpush1.msra.mxu0 %v2747
    %2755 = vmatprep.subr.mxu0 0.0
    %2756 = vmatpush1.msra.mxu0 %v2748
    %2757 = vmatprep.subr.mxu0 0.0
    %2758 = vmatpush1.msra.mxu0 0.0
    %2759 = vmatprep.subr.mxu0 0.0
    %2760 = vmatpush1.msra.mxu0 0.0
    %2761 = vmatprep.subr.mxu0 0.0
    %2762 = vmatpush1.msra.mxu0 0.0
    %2763 = vmatprep.subr.mxu0 0.0
    %2764 = vmatpush1.msra.mxu0 0.0
    %2765 = vmatprep.subr.mxu0 0.0
    %2766 = vmatpush1.msra.mxu0 0.0
    %2767 = vmatprep.subr.mxu0 0.0
    %2768 = vmatpush1.msra.mxu0 0.0
    %2769 = vmatprep.subr.mxu0 0.0
    %2770 = vmatpush1.msra.mxu0 0.0
    %2771 = vmatprep.subr.mxu0 0.0
    %2772 = vmatpush1.msra.mxu0 0.0
    %2773 = vmatprep.subr.mxu0 0.0
    %2774 = vmatpush1.msra.mxu0 0.0
    %2775 = vmatprep.subr.mxu0 0.0
    %2776 = vmatpush1.msra.mxu0 0.0
    %2777 = vmatprep.subr.mxu0 0.0
    %2778 = vmatpush1.msra.mxu0 0.0
    %2779 = vmatprep.subr.mxu0 0.0
    %2780 = vmatpush1.msra.mxu0 0.0
    %2781 = vmatprep.subr.mxu0 0.0
    %2782 = vmatpush1.msra.mxu0 0.0
    %2783 = vmatprep.subr.mxu0 0.0
    %2784 = vmatpush1.msra.mxu0 0.0
    %2785 = vmatprep.subr.mxu0 0.0
    %2786 = vmatpush1.msra.mxu0 0.0
    %2787 = vmatprep.subr.mxu0 0.0
    %2788 = vmatpush1.msra.mxu0 0.0
    %2789 = vmatprep.subr.mxu0 0.0
    %2790 = vmatpush1.msra.mxu0 0.0
    %2791 = vmatprep.subr.mxu0 0.0
    %2792 = vmatpush1.msra.mxu0 0.0
    %2793 = vmatprep.subr.mxu0 0.0
    %2794 = vmatpush1.msra.mxu0 0.0
    %2795 = vmatprep.subr.mxu0 0.0
    %2796 = vmatpush1.msra.mxu0 0.0
    %2797 = vmatprep.subr.mxu0 0.0
    %2798 = vmatpush1.msra.mxu0 0.0
    %2799 = vmatprep.subr.mxu0 0.0
    %2800 = vmatpush1.msra.mxu0 0.0
    %2801 = vmatprep.subr.mxu0 0.0
    %2802 = vmatpush1.msra.mxu0 0.0
    %2803 = vmatprep.subr.mxu0 0.0
    %2804 = vmatpush1.msra.mxu0 0.0
    %2805 = vmatprep.subr.mxu0 0.0
    %2806 = vmatpush1.msra.mxu0 0.0
    %2807 = vmatprep.subr.mxu0 0.0
    %2808 = vmatpush1.msra.mxu0 0.0
    %2809 = vmatprep.subr.mxu0 0.0
    %2810 = vmatpush1.msra.mxu0 0.0
    %2811 = vmatprep.subr.mxu0 0.0
    %2812 = vmatpush1.msra.mxu0 0.0
    %2813 = vmatprep.mubr.f32.mxu0 0.0
    %2814 = vmatmul.mubr.f32.gmra.mrb[0].mxu0 %v2622
    %v2815 = vpop.f32.mrb[0].mxu0
    %v2816 = vadd.f32 0.0, %v2815
    %v2817 = vpop.f32.mrb[0].mxu0
    %2818 = vmatprep.mubr.f32.mxu0 0.0
    %2819 = vmatmul.mubr.f32.gmra.mrb[0].mxu0 %v2625
    %v2820 = vpop.f32.mrb[0].mxu0
    %v2821 = vadd.f32 0.0, %v2820
    %v2822 = vpop.f32.mrb[0].mxu0
    %2823 = vdwg.mxu0
    %v2824 = vmul.f32 %v2816, 0.35355338
    %v2825 = vmul.f32 %v2821, 0.35355338
    %2826 = vmatprep.subr.mxu0 0.0
    %2827 = vmatpush1.msra.mxu0 %v2824
    %2828 = vmatprep.subr.mxu0 0.0
    %2829 = vmatpush1.msra.mxu0 %v2825
    %2830 = vmatprep.subr.mxu0 0.0
    %2831 = vmatpush1.msra.mxu0 0.0
    %2832 = vmatprep.subr.mxu0 0.0
    %2833 = vmatpush1.msra.mxu0 0.0
    %2834 = vmatprep.subr.mxu0 0.0
    %2835 = vmatpush1.msra.mxu0 0.0
    %2836 = vmatprep.subr.mxu0 0.0
    %2837 = vmatpush1.msra.mxu0 0.0
    %2838 = vmatprep.subr.mxu0 0.0
    %2839 = vmatpush1.msra.mxu0 0.0
    %2840 = vmatprep.subr.mxu0 0.0
    %2841 = vmatpush1.msra.mxu0 0.0
    %2842 = vmatprep.subr.mxu0 0.0
    %2843 = vmatpush1.msra.mxu0 0.0
    %2844 = vmatprep.subr.mxu0 0.0
    %2845 = vmatpush1.msra.mxu0 0.0
    %2846 = vmatprep.subr.mxu0 0.0
    %2847 = vmatpush1.msra.mxu0 0.0
    %2848 = vmatprep.subr.mxu0 0.0
    %2849 = vmatpush1.msra.mxu0 0.0
    %2850 = vmatprep.subr.mxu0 0.0
    %2851 = vmatpush1.msra.mxu0 0.0
    %2852 = vmatprep.subr.mxu0 0.0
    %2853 = vmatpush1.msra.mxu0 0.0
    %2854 = vmatprep.subr.mxu0 0.0
    %2855 = vmatpush1.msra.mxu0 0.0
    %2856 = vmatprep.subr.mxu0 0.0
    %2857 = vmatpush1.msra.mxu0 0.0
    %2858 = vmatprep.subr.mxu0 0.0
    %2859 = vmatpush1.msra.mxu0 0.0
    %2860 = vmatprep.subr.mxu0 0.0
    %2861 = vmatpush1.msra.mxu0 0.0
    %2862 = vmatprep.subr.mxu0 0.0
    %2863 = vmatpush1.msra.mxu0 0.0
    %2864 = vmatprep.subr.mxu0 0.0
    %2865 = vmatpush1.msra.mxu0 0.0
    %2866 = vmatprep.subr.mxu0 0.0
    %2867 = vmatpush1.msra.mxu0 0.0
    %2868 = vmatprep.subr.mxu0 0.0
    %2869 = vmatpush1.msra.mxu0 0.0
    %2870 = vmatprep.subr.mxu0 0.0
    %2871 = vmatpush1.msra.mxu0 0.0
    %2872 = vmatprep.subr.mxu0 0.0
    %2873 = vmatpush1.msra.mxu0 0.0
    %2874 = vmatprep.subr.mxu0 0.0
    %2875 = vmatpush1.msra.mxu0 0.0
    %2876 = vmatprep.subr.mxu0 0.0
    %2877 = vmatpush1.msra.mxu0 0.0
    %2878 = vmatprep.subr.mxu0 0.0
    %2879 = vmatpush1.msra.mxu0 0.0
    %2880 = vmatprep.subr.mxu0 0.0
    %2881 = vmatpush1.msra.mxu0 0.0
    %2882 = vmatprep.subr.mxu0 0.0
    %2883 = vmatpush1.msra.mxu0 0.0
    %2884 = vmatprep.subr.mxu0 0.0
    %2885 = vmatpush1.msra.mxu0 0.0
    %2886 = vmatprep.subr.mxu0 0.0
    %2887 = vmatpush1.msra.mxu0 0.0
    %2888 = vmatprep.subr.mxu0 0.0
    %2889 = vmatpush1.msra.mxu0 0.0
    %2890 = vmatprep.mubr.f32.mxu0 0.0
    %2891 = vmatmul.mubr.f32.gmra.mrb[0].mxu0 %v1309
    %v2892 = vpop.f32.mrb[0].mxu0
    %v2893 = vadd.f32 0.0, %v2892
    %v2894 = vpop.f32.mrb[0].mxu0
    %2895 = vmatprep.mubr.f32.mxu0 0.0
    %2896 = vmatmul.mubr.f32.gmra.mrb[0].mxu0 %v1312
    %v2897 = vpop.f32.mrb[0].mxu0
    %v2898 = vadd.f32 0.0, %v2897
    %v2899 = vpop.f32.mrb[0].mxu0
    %2900 = vmatprep.mubr.f32.mxu0 0.0
    %2901 = vmatmul.mubr.f32.gmra.mrb[0].mxu0 %v1315
    %v2902 = vpop.f32.mrb[0].mxu0
    %v2903 = vadd.f32 0.0, %v2902
    %v2904 = vpop.f32.mrb[0].mxu0
    %2905 = vmatprep.mubr.f32.mxu0 0.0
    %2906 = vmatmul.mubr.f32.gmra.mrb[0].mxu0 %v1318
    %v2907 = vpop.f32.mrb[0].mxu0
    %v2908 = vadd.f32 0.0, %v2907
    %v2909 = vpop.f32.mrb[0].mxu0
    %2910 = vmatprep.mubr.f32.mxu0 0.0
    %2911 = vmatmul.mubr.f32.gmra.mrb[0].mxu0 %v1321
    %v2912 = vpop.f32.mrb[0].mxu0
    %v2913 = vadd.f32 0.0, %v2912
    %v2914 = vpop.f32.mrb[0].mxu0
    %2915 = vdwg.mxu0
    %s2916 = scalar_lea.vmem [#allocation6], 8
    %v2917 = vld [vmem:[%s2916] sm:$0xff]
    %2918 = vmatprep.subr.mxu0 0.0
    %2919 = vmatpush1.msra.mxu0 %v2917
    %2920 = vmatprep.subr.mxu0 0.0
    %2921 = vmatpush1.msra.mxu0 0.0
    %2922 = vmatprep.subr.mxu0 0.0
    %2923 = vmatpush1.msra.mxu0 0.0
    %2924 = vmatprep.subr.mxu0 0.0
    %2925 = vmatpush1.msra.mxu0 0.0
    %2926 = vmatprep.subr.mxu0 0.0
    %2927 = vmatpush1.msra.mxu0 0.0
    %2928 = vmatprep.subr.mxu0 0.0
    %2929 = vmatpush1.msra.mxu0 0.0
    %2930 = vmatprep.subr.mxu0 0.0
    %2931 = vmatpush1.msra.mxu0 0.0
    %2932 = vmatprep.subr.mxu0 0.0
    %2933 = vmatpush1.msra.mxu0 0.0
    %2934 = vmatprep.subr.mxu0 0.0
    %2935 = vmatpush1.msra.mxu0 0.0
    %2936 = vmatprep.subr.mxu0 0.0
    %2937 = vmatpush1.msra.mxu0 0.0
    %2938 = vmatprep.subr.mxu0 0.0
    %2939 = vmatpush1.msra.mxu0 0.0
    %2940 = vmatprep.subr.mxu0 0.0
    %2941 = vmatpush1.msra.mxu0 0.0
    %2942 = vmatprep.subr.mxu0 0.0
    %2943 = vmatpush1.msra.mxu0 0.0
    %2944 = vmatprep.subr.mxu0 0.0
    %2945 = vmatpush1.msra.mxu0 0.0
    %2946 = vmatprep.subr.mxu0 0.0
    %2947 = vmatpush1.msra.mxu0 0.0
    %2948 = vmatprep.subr.mxu0 0.0
    %2949 = vmatpush1.msra.mxu0 0.0
    %2950 = vmatprep.subr.mxu0 0.0
    %2951 = vmatpush1.msra.mxu0 0.0
    %2952 = vmatprep.subr.mxu0 0.0
    %2953 = vmatpush1.msra.mxu0 0.0
    %2954 = vmatprep.subr.mxu0 0.0
    %2955 = vmatpush1.msra.mxu0 0.0
    %2956 = vmatprep.subr.mxu0 0.0
    %2957 = vmatpush1.msra.mxu0 0.0
    %2958 = vmatprep.subr.mxu0 0.0
    %2959 = vmatpush1.msra.mxu0 0.0
    %2960 = vmatprep.subr.mxu0 0.0
    %2961 = vmatpush1.msra.mxu0 0.0
    %2962 = vmatprep.subr.mxu0 0.0
    %2963 = vmatpush1.msra.mxu0 0.0
    %2964 = vmatprep.subr.mxu0 0.0
    %2965 = vmatpush1.msra.mxu0 0.0
    %2966 = vmatprep.subr.mxu0 0.0
    %2967 = vmatpush1.msra.mxu0 0.0
    %2968 = vmatprep.subr.mxu0 0.0
    %2969 = vmatpush1.msra.mxu0 0.0
    %2970 = vmatprep.subr.mxu0 0.0
    %2971 = vmatpush1.msra.mxu0 0.0
    %2972 = vmatprep.subr.mxu0 0.0
    %2973 = vmatpush1.msra.mxu0 0.0
    %2974 = vmatprep.subr.mxu0 0.0
    %2975 = vmatpush1.msra.mxu0 0.0
    %2976 = vmatprep.subr.mxu0 0.0
    %2977 = vmatpush1.msra.mxu0 0.0
    %2978 = vmatprep.subr.mxu0 0.0
    %2979 = vmatpush1.msra.mxu0 0.0
    %2980 = vmatprep.subr.mxu0 0.0
    %2981 = vmatpush1.msra.mxu0 0.0
    %2982 = vmatprep.mubr.f32.mxu0 0.0
    %2983 = vmatmul.mubr.f32.gmra.mrb[0].mxu0 %v1415
    %v2984 = vpop.f32.mrb[0].mxu0
    %v2985 = vadd.f32 0.0, %v2984
    %v2986 = vpop.f32.mrb[0].mxu0
    %2987 = vmatprep.mubr.f32.mxu0 0.0
    %2988 = vmatmul.mubr.f32.gmra.mrb[0].mxu0 %v1418
    %v2989 = vpop.f32.mrb[0].mxu0
    %v2990 = vadd.f32 0.0, %v2989
    %v2991 = vpop.f32.mrb[0].mxu0
    %2992 = vmatprep.mubr.f32.mxu0 0.0
    %2993 = vmatmul.mubr.f32.gmra.mrb[0].mxu0 %v1421
    %v2994 = vpop.f32.mrb[0].mxu0
    %v2995 = vadd.f32 0.0, %v2994
    %v2996 = vpop.f32.mrb[0].mxu0
    %2997 = vmatprep.mubr.f32.mxu0 0.0
    %2998 = vmatmul.mubr.f32.gmra.mrb[0].mxu0 %v1424
    %v2999 = vpop.f32.mrb[0].mxu0
    %v3000 = vadd.f32 0.0, %v2999
    %v3001 = vpop.f32.mrb[0].mxu0
    %3002 = vmatprep.mubr.f32.mxu0 0.0
    %3003 = vmatmul.mubr.f32.gmra.mrb[0].mxu0 %v1427
    %v3004 = vpop.f32.mrb[0].mxu0
    %v3005 = vadd.f32 0.0, %v3004
    %v3006 = vpop.f32.mrb[0].mxu0
    %3007 = vdwg.mxu0
    %v3008 = vmul.f32 %v2985, 0.35355338
    %v3009 = vmul.f32 %v2990, 0.35355338
    %v3010 = vmul.f32 %v2995, 0.35355338
    %v3011 = vmul.f32 %v3000, 0.35355338
    %v3012 = vmul.f32 %v3005, 0.35355338
    %v3013 = vxor.u32 %v3008, 2147483648
    %v3014 = vxor.u32 %v3009, 2147483648
    %v3015 = vxor.u32 %v3010, 2147483648
    %v3016 = vxor.u32 %v3011, 2147483648
    %v3017 = vxor.u32 %v3012, 2147483648
    %v3018 = vmul.f32 %v3013, 1.442695
    %v3019 = vpow.pop %v3018
    %v3020 = vmul.f32 %v3014, 1.442695
    %v3021 = vpow.pop %v3020
    %v3022 = vmul.f32 %v3015, 1.442695
    %v3023 = vpow.pop %v3022
    %v3024 = vmul.f32 %v3016, 1.442695
    %v3025 = vpow.pop %v3024
    %v3026 = vmul.f32 %v3017, 1.442695
    %v3027 = vpow.pop %v3026
    %v3028 = vadd.f32 %v3019, 1.0
    %v3029 = vadd.f32 %v3021, 1.0
    %v3030 = vadd.f32 %v3023, 1.0
    %v3031 = vadd.f32 %v3025, 1.0
    %v3032 = vadd.f32 %v3027, 1.0
    %v3033 = vrcp.pop %v3028
    %v3034 = vmul.f32 1.0, %v3033
    %v3035 = vrcp.pop %v3029
    %v3036 = vmul.f32 1.0, %v3035
    %v3037 = vrcp.pop %v3030
    %v3038 = vmul.f32 1.0, %v3037
    %v3039 = vrcp.pop %v3031
    %v3040 = vmul.f32 1.0, %v3039
    %v3041 = vrcp.pop %v3032
    %v3042 = vmul.f32 1.0, %v3041
    %v3043 = vmul.f32 %v3008, %v3034
    %v3044 = vmul.f32 %v3009, %v3036
    %v3045 = vmul.f32 %v3010, %v3038
    %v3046 = vmul.f32 %v3011, %v3040
    %v3047 = vmul.f32 %v3012, %v3042
    %s3048 = scalar_lea.vmem %s9, 16
    %v3049 = vld [vmem:[%s3048] sm:$0xff]
    %v3050 = vld [vmem:[%s3048 + $0x8] sm:$0xff]
    %v3052 = vsel %vm1054, %v3043, 0
    %v3055 = vsel %vm1054, %v3044, 0
    %v3058 = vsel %vm1054, %v3045, 0
    %v3061 = vsel %vm1054, %v3046, 0
    %v3064 = vsel %vm1054, %v3047, 0
    %3066 = vmatprep.subr.mxu0 0.0
    %3067 = vmatpush1.msra.mxu0 %v3049
    %3068 = vmatprep.subr.mxu0 0.0
    %3069 = vmatpush1.msra.mxu0 %v3050
    %3070 = vmatprep.subr.mxu0 0.0
    %3071 = vmatpush1.msra.mxu0 0.0
    %3072 = vmatprep.subr.mxu0 0.0
    %3073 = vmatpush1.msra.mxu0 0.0
    %3074 = vmatprep.subr.mxu0 0.0
    %3075 = vmatpush1.msra.mxu0 0.0
    %3076 = vmatprep.subr.mxu0 0.0
    %3077 = vmatpush1.msra.mxu0 0.0
    %3078 = vmatprep.subr.mxu0 0.0
    %3079 = vmatpush1.msra.mxu0 0.0
    %3080 = vmatprep.subr.mxu0 0.0
    %3081 = vmatpush1.msra.mxu0 0.0
    %3082 = vmatprep.subr.mxu0 0.0
    %3083 = vmatpush1.msra.mxu0 0.0
    %3084 = vmatprep.subr.mxu0 0.0
    %3085 = vmatpush1.msra.mxu0 0.0
    %3086 = vmatprep.subr.mxu0 0.0
    %3087 = vmatpush1.msra.mxu0 0.0
    %3088 = vmatprep.subr.mxu0 0.0
    %3089 = vmatpush1.msra.mxu0 0.0
    %3090 = vmatprep.subr.mxu0 0.0
    %3091 = vmatpush1.msra.mxu0 0.0
    %3092 = vmatprep.subr.mxu0 0.0
    %3093 = vmatpush1.msra.mxu0 0.0
    %3094 = vmatprep.subr.mxu0 0.0
    %3095 = vmatpush1.msra.mxu0 0.0
    %3096 = vmatprep.subr.mxu0 0.0
    %3097 = vmatpush1.msra.mxu0 0.0
    %3098 = vmatprep.subr.mxu0 0.0
    %3099 = vmatpush1.msra.mxu0 0.0
    %3100 = vmatprep.subr.mxu0 0.0
    %3101 = vmatpush1.msra.mxu0 0.0
    %3102 = vmatprep.subr.mxu0 0.0
    %3103 = vmatpush1.msra.mxu0 0.0
    %3104 = vmatprep.subr.mxu0 0.0
    %3105 = vmatpush1.msra.mxu0 0.0
    %3106 = vmatprep.subr.mxu0 0.0
    %3107 = vmatpush1.msra.mxu0 0.0
    %3108 = vmatprep.subr.mxu0 0.0
    %3109 = vmatpush1.msra.mxu0 0.0
    %3110 = vmatprep.subr.mxu0 0.0
    %3111 = vmatpush1.msra.mxu0 0.0
    %3112 = vmatprep.subr.mxu0 0.0
    %3113 = vmatpush1.msra.mxu0 0.0
    %3114 = vmatprep.subr.mxu0 0.0
    %3115 = vmatpush1.msra.mxu0 0.0
    %3116 = vmatprep.subr.mxu0 0.0
    %3117 = vmatpush1.msra.mxu0 0.0
    %3118 = vmatprep.subr.mxu0 0.0
    %3119 = vmatpush1.msra.mxu0 0.0
    %3120 = vmatprep.subr.mxu0 0.0
    %3121 = vmatpush1.msra.mxu0 0.0
    %3122 = vmatprep.subr.mxu0 0.0
    %3123 = vmatpush1.msra.mxu0 0.0
    %3124 = vmatprep.subr.mxu0 0.0
    %3125 = vmatpush1.msra.mxu0 0.0
    %3126 = vmatprep.subr.mxu0 0.0
    %3127 = vmatpush1.msra.mxu0 0.0
    %3128 = vmatprep.subr.mxu0 0.0
    %3129 = vmatpush1.msra.mxu0 0.0
    %3130 = vmatprep.mubr.f32.mxu0 0.0
    %3131 = vmatmul.mubr.f32.gmra.mrb[0].mxu0 %v3052
    %v3132 = vpop.f32.mrb[0].mxu0
    %v3133 = vadd.f32 0.0, %v3132
    %v3134 = vpop.f32.mrb[0].mxu0
    %3135 = vmatprep.mubr.f32.mxu0 0.0
    %3136 = vmatmul.mubr.f32.gmra.mrb[0].mxu0 %v3055
    %v3137 = vpop.f32.mrb[0].mxu0
    %v3138 = vadd.f32 0.0, %v3137
    %v3139 = vpop.f32.mrb[0].mxu0
    %3140 = vmatprep.mubr.f32.mxu0 0.0
    %3141 = vmatmul.mubr.f32.gmra.mrb[0].mxu0 %v3058
    %v3142 = vpop.f32.mrb[0].mxu0
    %v3143 = vadd.f32 0.0, %v3142
    %v3144 = vpop.f32.mrb[0].mxu0
    %3145 = vmatprep.mubr.f32.mxu0 0.0
    %3146 = vmatmul.mubr.f32.gmra.mrb[0].mxu0 %v3061
    %v3147 = vpop.f32.mrb[0].mxu0
    %v3148 = vadd.f32 0.0, %v3147
    %v3149 = vpop.f32.mrb[0].mxu0
    %3150 = vmatprep.mubr.f32.mxu0 0.0
    %3151 = vmatmul.mubr.f32.gmra.mrb[0].mxu0 %v3064
    %v3152 = vpop.f32.mrb[0].mxu0
    %v3153 = vadd.f32 0.0, %v3152
    %v3154 = vpop.f32.mrb[0].mxu0
    %3155 = vdwg.mxu0
    %v3156 = vmul.f32 %v3133, 0.25
    %v3157 = vmul.f32 %v3138, 0.25
    %v3158 = vmul.f32 %v3143, 0.25
    %v3159 = vmul.f32 %v3148, 0.25
    %v3160 = vmul.f32 %v3153, 0.25
    %v3161 = vxor.u32 %v3156, 2147483648
    %v3162 = vxor.u32 %v3157, 2147483648
    %v3163 = vxor.u32 %v3158, 2147483648
    %v3164 = vxor.u32 %v3159, 2147483648
    %v3165 = vxor.u32 %v3160, 2147483648
    %v3166 = vmul.f32 %v3161, 1.442695
    %v3167 = vpow.pop %v3166
    %v3168 = vmul.f32 %v3162, 1.442695
    %v3169 = vpow.pop %v3168
    %v3170 = vmul.f32 %v3163, 1.442695
    %v3171 = vpow.pop %v3170
    %v3172 = vmul.f32 %v3164, 1.442695
    %v3173 = vpow.pop %v3172
    %v3174 = vmul.f32 %v3165, 1.442695
    %v3175 = vpow.pop %v3174
    %v3176 = vadd.f32 %v3167, 1.0
    %v3177 = vadd.f32 %v3169, 1.0
    %v3178 = vadd.f32 %v3171, 1.0
    %v3179 = vadd.f32 %v3173, 1.0
    %v3180 = vadd.f32 %v3175, 1.0
    %v3181 = vrcp.pop %v3176
    %v3182 = vmul.f32 1.0, %v3181
    %v3183 = vrcp.pop %v3177
    %v3184 = vmul.f32 1.0, %v3183
    %v3185 = vrcp.pop %v3178
    %v3186 = vmul.f32 1.0, %v3185
    %v3187 = vrcp.pop %v3179
    %v3188 = vmul.f32 1.0, %v3187
    %v3189 = vrcp.pop %v3180
    %v3190 = vmul.f32 1.0, %v3189
    %v3191 = vmul.f32 %v3156, %v3182
    %v3192 = vmul.f32 %v3157, %v3184
    %v3193 = vmul.f32 %v3158, %v3186
    %v3194 = vmul.f32 %v3159, %v3188
    %v3195 = vmul.f32 %v3160, %v3190
    %s3196 = scalar_lea.vmem [#allocation7], 16
    %v3197 = vld [vmem:[%s3196] sm:$0xff]
    %v3198 = vld [vmem:[%s3196 + $0x8] sm:$0xff]
    %v3200 = vsel %vm1054, %v3191, 0
    %v3203 = vsel %vm1054, %v3192, 0
    %v3206 = vsel %vm1054, %v3193, 0
    %v3209 = vsel %vm1054, %v3194, 0
    %v3212 = vsel %vm1054, %v3195, 0
    %3214 = vmatprep.subr.mxu0 0.0
    %3215 = vmatpush1.msra.mxu0 %v3197
    %3216 = vmatprep.subr.mxu0 0.0
    %3217 = vmatpush1.msra.mxu0 %v3198
    %3218 = vmatprep.subr.mxu0 0.0
    %3219 = vmatpush1.msra.mxu0 0.0
    %3220 = vmatprep.subr.mxu0 0.0
    %3221 = vmatpush1.msra.mxu0 0.0
    %3222 = vmatprep.subr.mxu0 0.0
    %3223 = vmatpush1.msra.mxu0 0.0
    %3224 = vmatprep.subr.mxu0 0.0
    %3225 = vmatpush1.msra.mxu0 0.0
    %3226 = vmatprep.subr.mxu0 0.0
    %3227 = vmatpush1.msra.mxu0 0.0
    %3228 = vmatprep.subr.mxu0 0.0
    %3229 = vmatpush1.msra.mxu0 0.0
    %3230 = vmatprep.subr.mxu0 0.0
    %3231 = vmatpush1.msra.mxu0 0.0
    %3232 = vmatprep.subr.mxu0 0.0
    %3233 = vmatpush1.msra.mxu0 0.0
    %3234 = vmatprep.subr.mxu0 0.0
    %3235 = vmatpush1.msra.mxu0 0.0
    %3236 = vmatprep.subr.mxu0 0.0
    %3237 = vmatpush1.msra.mxu0 0.0
    %3238 = vmatprep.subr.mxu0 0.0
    %3239 = vmatpush1.msra.mxu0 0.0
    %3240 = vmatprep.subr.mxu0 0.0
    %3241 = vmatpush1.msra.mxu0 0.0
    %3242 = vmatprep.subr.mxu0 0.0
    %3243 = vmatpush1.msra.mxu0 0.0
    %3244 = vmatprep.subr.mxu0 0.0
    %3245 = vmatpush1.msra.mxu0 0.0
    %3246 = vmatprep.subr.mxu0 0.0
    %3247 = vmatpush1.msra.mxu0 0.0
    %3248 = vmatprep.subr.mxu0 0.0
    %3249 = vmatpush1.msra.mxu0 0.0
    %3250 = vmatprep.subr.mxu0 0.0
    %3251 = vmatpush1.msra.mxu0 0.0
    %3252 = vmatprep.subr.mxu0 0.0
    %3253 = vmatpush1.msra.mxu0 0.0
    %3254 = vmatprep.subr.mxu0 0.0
    %3255 = vmatpush1.msra.mxu0 0.0
    %3256 = vmatprep.subr.mxu0 0.0
    %3257 = vmatpush1.msra.mxu0 0.0
    %3258 = vmatprep.subr.mxu0 0.0
    %3259 = vmatpush1.msra.mxu0 0.0
    %3260 = vmatprep.subr.mxu0 0.0
    %3261 = vmatpush1.msra.mxu0 0.0
    %3262 = vmatprep.subr.mxu0 0.0
    %3263 = vmatpush1.msra.mxu0 0.0
    %3264 = vmatprep.subr.mxu0 0.0
    %3265 = vmatpush1.msra.mxu0 0.0
    %3266 = vmatprep.subr.mxu0 0.0
    %3267 = vmatpush1.msra.mxu0 0.0
    %3268 = vmatprep.subr.mxu0 0.0
    %3269 = vmatpush1.msra.mxu0 0.0
    %3270 = vmatprep.subr.mxu0 0.0
    %3271 = vmatpush1.msra.mxu0 0.0
    %3272 = vmatprep.subr.mxu0 0.0
    %3273 = vmatpush1.msra.mxu0 0.0
    %3274 = vmatprep.subr.mxu0 0.0
    %3275 = vmatpush1.msra.mxu0 0.0
    %3276 = vmatprep.subr.mxu0 0.0
    %3277 = vmatpush1.msra.mxu0 0.0
    %3278 = vmatprep.mubr.f32.mxu0 0.0
    %3279 = vmatmul.mubr.f32.gmra.mrb[0].mxu0 %v3200
    %v3280 = vpop.f32.mrb[0].mxu0
    %v3281 = vadd.f32 0.0, %v3280
    %v3282 = vpop.f32.mrb[0].mxu0
    %3283 = vmatprep.mubr.f32.mxu0 0.0
    %3284 = vmatmul.mubr.f32.gmra.mrb[0].mxu0 %v3203
    %v3285 = vpop.f32.mrb[0].mxu0
    %v3286 = vadd.f32 0.0, %v3285
    %v3287 = vpop.f32.mrb[0].mxu0
    %3288 = vmatprep.mubr.f32.mxu0 0.0
    %3289 = vmatmul.mubr.f32.gmra.mrb[0].mxu0 %v3206
    %v3290 = vpop.f32.mrb[0].mxu0
    %v3291 = vadd.f32 0.0, %v3290
    %v3292 = vpop.f32.mrb[0].mxu0
    %3293 = vmatprep.mubr.f32.mxu0 0.0
    %3294 = vmatmul.mubr.f32.gmra.mrb[0].mxu0 %v3209
    %v3295 = vpop.f32.mrb[0].mxu0
    %v3296 = vadd.f32 0.0, %v3295
    %v3297 = vpop.f32.mrb[0].mxu0
    %3298 = vmatprep.mubr.f32.mxu0 0.0
    %3299 = vmatmul.mubr.f32.gmra.mrb[0].mxu0 %v3212
    %v3300 = vpop.f32.mrb[0].mxu0
    %v3301 = vadd.f32 0.0, %v3300
    %v3302 = vpop.f32.mrb[0].mxu0
    %3303 = vdwg.mxu0
    %v3304 = vmul.f32 %v3281, 0.25
    %v3305 = vmul.f32 %v3286, 0.25
    %v3306 = vmul.f32 %v3291, 0.25
    %v3307 = vmul.f32 %v3296, 0.25
    %v3308 = vmul.f32 %v3301, 0.25
    %v3309 = vmul.f32 %v2893, %v1821
    %v3310 = vmul.f32 %v2898, %v1826
    %v3311 = vmul.f32 %v2903, %v1831
    %v3312 = vmul.f32 %v2908, %v1836
    %v3313 = vmul.f32 %v2913, %v1841
    %v3314 = vmul.f32 %v2893, %v1851
    %v3315 = vmul.f32 %v2898, %v1856
    %v3316 = vmul.f32 %v2903, %v1861
    %v3317 = vmul.f32 %v2908, %v1866
    %v3318 = vmul.f32 %v2913, %v1871
    %3324 = vrot.lane.b32.xlu0 %v3314, 120
    %v3325 = vpop.permute.xlu0 %3324
    %3326 = vrot.lane.b32.xlu0 %v3315, 120
    %v3327 = vpop.permute.xlu0 %3326
    %3328 = vrot.lane.b32.xlu0 %v3316, 120
    %v3329 = vpop.permute.xlu0 %3328
    %3330 = vrot.lane.b32.xlu0 %v3317, 120
    %v3331 = vpop.permute.xlu0 %3330
    %3332 = vrot.lane.b32.xlu0 %v3318, 120
    %v3333 = vpop.permute.xlu0 %3332
    %v3339 = vadd.f32 %v3309, %v3325
    %v3340 = vadd.f32 %v3310, %v3327
    %v3341 = vadd.f32 %v3311, %v3329
    %v3342 = vadd.f32 %v3312, %v3331
    %v3343 = vadd.f32 %v3313, %v3333
    %v3344 = vmul.f32 %v2893, %v1906
    %v3345 = vmul.f32 %v2898, %v1911
    %v3346 = vmul.f32 %v2903, %v1916
    %v3347 = vmul.f32 %v2908, %v1921
    %v3348 = vmul.f32 %v2913, %v1926
    %3354 = vrot.lane.b32.xlu0 %v3344, 112
    %v3355 = vpop.permute.xlu0 %3354
    %3356 = vrot.lane.b32.xlu0 %v3345, 112
    %v3357 = vpop.permute.xlu0 %3356
    %3358 = vrot.lane.b32.xlu0 %v3346, 112
    %v3359 = vpop.permute.xlu0 %3358
    %3360 = vrot.lane.b32.xlu0 %v3347, 112
    %v3361 = vpop.permute.xlu0 %3360
    %3362 = vrot.lane.b32.xlu0 %v3348, 112
    %v3363 = vpop.permute.xlu0 %3362
    %v3369 = vadd.f32 %v3339, %v3355
    %v3370 = vadd.f32 %v3340, %v3357
    %v3371 = vadd.f32 %v3341, %v3359
    %v3372 = vadd.f32 %v3342, %v3361
    %v3373 = vadd.f32 %v3343, %v3363
    %v3374 = vmul.f32 %v3304, %v2893
    %v3375 = vmul.f32 %v3305, %v2898
    %v3376 = vmul.f32 %v3306, %v2903
    %v3377 = vmul.f32 %v3307, %v2908
    %v3378 = vmul.f32 %v3308, %v2913
    %v3379 = vmul.f32 %v3304, %v3369
    %v3380 = vmul.f32 %v3305, %v3370
    %v3381 = vmul.f32 %v3306, %v3371
    %v3382 = vmul.f32 %v3307, %v3372
    %v3383 = vmul.f32 %v3308, %v3373
    %v3384 = vmul.f32 %v3379, 0.57735026
    %v3385 = vmul.f32 %v3380, 0.57735026
    %v3386 = vmul.f32 %v3381, 0.57735026
    %v3387 = vmul.f32 %v3382, 0.57735026
    %v3388 = vmul.f32 %v3383, 0.57735026
    %3394 = vrot.lane.b32.xlu0 %v3384, 120
    %v3395 = vpop.permute.xlu0 %3394
    %3396 = vrot.lane.b32.xlu0 %v3385, 120
    %v3397 = vpop.permute.xlu0 %3396
    %3398 = vrot.lane.b32.xlu0 %v3386, 120
    %v3399 = vpop.permute.xlu0 %3398
    %3400 = vrot.lane.b32.xlu0 %v3387, 120
    %v3401 = vpop.permute.xlu0 %3400
    %3402 = vrot.lane.b32.xlu0 %v3388, 120
    %v3403 = vpop.permute.xlu0 %3402
    %v3409 = vadd.f32 %v3374, %v3395
    %v3410 = vadd.f32 %v3375, %v3397
    %v3411 = vadd.f32 %v3376, %v3399
    %v3412 = vadd.f32 %v3377, %v3401
    %v3413 = vadd.f32 %v3378, %v3403
    %v3414 = vsub.f32 %v3344, %v3325
    %v3415 = vsub.f32 %v3345, %v3327
    %v3416 = vsub.f32 %v3346, %v3329
    %v3417 = vsub.f32 %v3347, %v3331
    %v3418 = vsub.f32 %v3348, %v3333
    %3419 = vrot.lane.b32.xlu0 %v3344, 16
    %v3420 = vpop.permute.xlu0 %3419
    %3421 = vrot.lane.b32.xlu0 %v3345, 16
    %v3422 = vpop.permute.xlu0 %3421
    %3423 = vrot.lane.b32.xlu0 %v3346, 16
    %v3424 = vpop.permute.xlu0 %3423
    %3425 = vrot.lane.b32.xlu0 %v3347, 16
    %v3426 = vpop.permute.xlu0 %3425
    %3427 = vrot.lane.b32.xlu0 %v3348, 16
    %v3428 = vpop.permute.xlu0 %3427
    %v3434 = vsub.f32 %v3309, %v3420
    %v3435 = vsub.f32 %v3310, %v3422
    %v3436 = vsub.f32 %v3311, %v3424
    %v3437 = vsub.f32 %v3312, %v3426
    %v3438 = vsub.f32 %v3313, %v3428
    %3444 = vrot.lane.b32.xlu0 %v3309, 120
    %v3445 = vpop.permute.xlu0 %3444
    %3446 = vrot.lane.b32.xlu0 %v3310, 120
    %v3447 = vpop.permute.xlu0 %3446
    %3448 = vrot.lane.b32.xlu0 %v3311, 120
    %v3449 = vpop.permute.xlu0 %3448
    %3450 = vrot.lane.b32.xlu0 %v3312, 120
    %v3451 = vpop.permute.xlu0 %3450
    %3452 = vrot.lane.b32.xlu0 %v3313, 120
    %v3453 = vpop.permute.xlu0 %3452
    %v3459 = vsub.f32 %v3314, %v3445
    %v3460 = vsub.f32 %v3315, %v3447
    %v3461 = vsub.f32 %v3316, %v3449
    %v3462 = vsub.f32 %v3317, %v3451
    %v3463 = vsub.f32 %v3318, %v3453
    %3469 = vrot.lane.b32.xlu0 %v2893, 16
    %v3470 = vpop.permute.xlu0 %3469
    %3471 = vrot.lane.b32.xlu0 %v2898, 16
    %v3472 = vpop.permute.xlu0 %3471
    %3473 = vrot.lane.b32.xlu0 %v2903, 16
    %v3474 = vpop.permute.xlu0 %3473
    %3475 = vrot.lane.b32.xlu0 %v2908, 16
    %v3476 = vpop.permute.xlu0 %3475
    %3477 = vrot.lane.b32.xlu0 %v2913, 16
    %v3478 = vpop.permute.xlu0 %3477
    %v3484 = vmul.f32 %v3304, %v3470
    %v3485 = vmul.f32 %v3305, %v3472
    %v3486 = vmul.f32 %v3306, %v3474
    %v3487 = vmul.f32 %v3307, %v3476
    %v3488 = vmul.f32 %v3308, %v3478
    %v3489 = vmul.f32 %v3484, %v1821
    %v3490 = vmul.f32 %v3485, %v1826
    %v3491 = vmul.f32 %v3486, %v1831
    %v3492 = vmul.f32 %v3487, %v1836
    %v3493 = vmul.f32 %v3488, %v1841
    %3499 = vrot.lane.b32.xlu0 %v3484, 120
    %v3500 = vpop.permute.xlu0 %3499
    %3501 = vrot.lane.b32.xlu0 %v3485, 120
    %v3502 = vpop.permute.xlu0 %3501
    %3503 = vrot.lane.b32.xlu0 %v3486, 120
    %v3504 = vpop.permute.xlu0 %3503
    %3505 = vrot.lane.b32.xlu0 %v3487, 120
    %v3506 = vpop.permute.xlu0 %3505
    %3507 = vrot.lane.b32.xlu0 %v3488, 120
    %v3508 = vpop.permute.xlu0 %3507
    %v3514 = vadd.f32 %v3489, %v3500
    %v3515 = vadd.f32 %v3490, %v3502
    %v3516 = vadd.f32 %v3491, %v3504
    %v3517 = vadd.f32 %v3492, %v3506
    %v3518 = vadd.f32 %v3493, %v3508
    %3524 = vrot.lane.b32.xlu0 %v3414, 16
    %v3525 = vpop.permute.xlu0 %3524
    %3526 = vrot.lane.b32.xlu0 %v3415, 16
    %v3527 = vpop.permute.xlu0 %3526
    %3528 = vrot.lane.b32.xlu0 %v3416, 16
    %v3529 = vpop.permute.xlu0 %3528
    %3530 = vrot.lane.b32.xlu0 %v3417, 16
    %v3531 = vpop.permute.xlu0 %3530
    %3532 = vrot.lane.b32.xlu0 %v3418, 16
    %v3533 = vpop.permute.xlu0 %3532
    %v3539 = vmul.f32 %v3304, %v3525
    %v3540 = vmul.f32 %v3305, %v3527
    %v3541 = vmul.f32 %v3306, %v3529
    %v3542 = vmul.f32 %v3307, %v3531
    %v3543 = vmul.f32 %v3308, %v3533
    %v3544 = vmul.f32 %v3539, 0.70710677
    %v3545 = vmul.f32 %v3540, 0.70710677
    %v3546 = vmul.f32 %v3541, 0.70710677
    %v3547 = vmul.f32 %v3542, 0.70710677
    %v3548 = vmul.f32 %v3543, 0.70710677
    %3554 = vrot.lane.b32.xlu0 %v3544, 112
    %v3555 = vpop.permute.xlu0 %3554
    %3556 = vrot.lane.b32.xlu0 %v3545, 112
    %v3557 = vpop.permute.xlu0 %3556
    %3558 = vrot.lane.b32.xlu0 %v3546, 112
    %v3559 = vpop.permute.xlu0 %3558
    %3560 = vrot.lane.b32.xlu0 %v3547, 112
    %v3561 = vpop.permute.xlu0 %3560
    %3562 = vrot.lane.b32.xlu0 %v3548, 112
    %v3563 = vpop.permute.xlu0 %3562
    %v3569 = vadd.f32 %v3514, %v3555
    %v3570 = vadd.f32 %v3515, %v3557
    %v3571 = vadd.f32 %v3516, %v3559
    %v3572 = vadd.f32 %v3517, %v3561
    %v3573 = vadd.f32 %v3518, %v3563
    %v3574 = vmul.f32 %v3484, %v1851
    %v3575 = vmul.f32 %v3485, %v1856
    %v3576 = vmul.f32 %v3486, %v1861
    %v3577 = vmul.f32 %v3487, %v1866
    %v3578 = vmul.f32 %v3488, %v1871
    %3579 = vrot.lane.b32.xlu0 %v2893, 8
    %v3580 = vpop.permute.xlu0 %3579
    %3581 = vrot.lane.b32.xlu0 %v2898, 8
    %v3582 = vpop.permute.xlu0 %3581
    %3583 = vrot.lane.b32.xlu0 %v2903, 8
    %v3584 = vpop.permute.xlu0 %3583
    %3585 = vrot.lane.b32.xlu0 %v2908, 8
    %v3586 = vpop.permute.xlu0 %3585
    %3587 = vrot.lane.b32.xlu0 %v2913, 8
    %v3588 = vpop.permute.xlu0 %3587
    %v3594 = vmul.f32 %v3304, %v3580
    %v3595 = vmul.f32 %v3305, %v3582
    %v3596 = vmul.f32 %v3306, %v3584
    %v3597 = vmul.f32 %v3307, %v3586
    %v3598 = vmul.f32 %v3308, %v3588
    %3604 = vrot.lane.b32.xlu0 %v3594, 120
    %v3605 = vpop.permute.xlu0 %3604
    %3606 = vrot.lane.b32.xlu0 %v3595, 120
    %v3607 = vpop.permute.xlu0 %3606
    %3608 = vrot.lane.b32.xlu0 %v3596, 120
    %v3609 = vpop.permute.xlu0 %3608
    %3610 = vrot.lane.b32.xlu0 %v3597, 120
    %v3611 = vpop.permute.xlu0 %3610
    %3612 = vrot.lane.b32.xlu0 %v3598, 120
    %v3613 = vpop.permute.xlu0 %3612
    %v3619 = vadd.f32 %v3574, %v3605
    %v3620 = vadd.f32 %v3575, %v3607
    %v3621 = vadd.f32 %v3576, %v3609
    %v3622 = vadd.f32 %v3577, %v3611
    %v3623 = vadd.f32 %v3578, %v3613
    %3629 = vrot.lane.b32.xlu0 %v3434, 8
    %v3630 = vpop.permute.xlu0 %3629
    %3631 = vrot.lane.b32.xlu0 %v3435, 8
    %v3632 = vpop.permute.xlu0 %3631
    %3633 = vrot.lane.b32.xlu0 %v3436, 8
    %v3634 = vpop.permute.xlu0 %3633
    %3635 = vrot.lane.b32.xlu0 %v3437, 8
    %v3636 = vpop.permute.xlu0 %3635
    %3637 = vrot.lane.b32.xlu0 %v3438, 8
    %v3638 = vpop.permute.xlu0 %3637
    %v3644 = vmul.f32 %v3304, %v3630
    %v3645 = vmul.f32 %v3305, %v3632
    %v3646 = vmul.f32 %v3306, %v3634
    %v3647 = vmul.f32 %v3307, %v3636
    %v3648 = vmul.f32 %v3308, %v3638
    %v3649 = vmul.f32 %v3644, 0.70710677
    %v3650 = vmul.f32 %v3645, 0.70710677
    %v3651 = vmul.f32 %v3646, 0.70710677
    %v3652 = vmul.f32 %v3647, 0.70710677
    %v3653 = vmul.f32 %v3648, 0.70710677
    %3659 = vrot.lane.b32.xlu0 %v3649, 112
    %v3660 = vpop.permute.xlu0 %3659
    %3661 = vrot.lane.b32.xlu0 %v3650, 112
    %v3662 = vpop.permute.xlu0 %3661
    %3663 = vrot.lane.b32.xlu0 %v3651, 112
    %v3664 = vpop.permute.xlu0 %3663
    %3665 = vrot.lane.b32.xlu0 %v3652, 112
    %v3666 = vpop.permute.xlu0 %3665
    %3667 = vrot.lane.b32.xlu0 %v3653, 112
    %v3668 = vpop.permute.xlu0 %3667
    %v3674 = vadd.f32 %v3619, %v3660
    %v3675 = vadd.f32 %v3620, %v3662
    %v3676 = vadd.f32 %v3621, %v3664
    %v3677 = vadd.f32 %v3622, %v3666
    %v3678 = vadd.f32 %v3623, %v3668
    %v3679 = vmul.f32 %v3484, %v1906
    %v3680 = vmul.f32 %v3485, %v1911
    %v3681 = vmul.f32 %v3486, %v1916
    %v3682 = vmul.f32 %v3487, %v1921
    %v3683 = vmul.f32 %v3488, %v1926
    %3689 = vrot.lane.b32.xlu0 %v3374, 120
    %v3690 = vpop.permute.xlu0 %3689
    %3691 = vrot.lane.b32.xlu0 %v3375, 120
    %v3692 = vpop.permute.xlu0 %3691
    %3693 = vrot.lane.b32.xlu0 %v3376, 120
    %v3694 = vpop.permute.xlu0 %3693
    %3695 = vrot.lane.b32.xlu0 %v3377, 120
    %v3696 = vpop.permute.xlu0 %3695
    %3697 = vrot.lane.b32.xlu0 %v3378, 120
    %v3698 = vpop.permute.xlu0 %3697
    %v3704 = vadd.f32 %v3679, %v3690
    %v3705 = vadd.f32 %v3680, %v3692
    %v3706 = vadd.f32 %v3681, %v3694
    %v3707 = vadd.f32 %v3682, %v3696
    %v3708 = vadd.f32 %v3683, %v3698
    %3714 = vrot.lane.b32.xlu0 %v3459, 24
    %v3715 = vpop.permute.xlu0 %3714
    %3716 = vrot.lane.b32.xlu0 %v3460, 24
    %v3717 = vpop.permute.xlu0 %3716
    %3718 = vrot.lane.b32.xlu0 %v3461, 24
    %v3719 = vpop.permute.xlu0 %3718
    %3720 = vrot.lane.b32.xlu0 %v3462, 24
    %v3721 = vpop.permute.xlu0 %3720
    %3722 = vrot.lane.b32.xlu0 %v3463, 24
    %v3723 = vpop.permute.xlu0 %3722
    %v3729 = vmul.f32 %v3304, %v3715
    %v3730 = vmul.f32 %v3305, %v3717
    %v3731 = vmul.f32 %v3306, %v3719
    %v3732 = vmul.f32 %v3307, %v3721
    %v3733 = vmul.f32 %v3308, %v3723
    %v3734 = vmul.f32 %v3729, 0.70710677
    %v3735 = vmul.f32 %v3730, 0.70710677
    %v3736 = vmul.f32 %v3731, 0.70710677
    %v3737 = vmul.f32 %v3732, 0.70710677
    %v3738 = vmul.f32 %v3733, 0.70710677
    %3744 = vrot.lane.b32.xlu0 %v3734, 112
    %v3745 = vpop.permute.xlu0 %3744
    %3746 = vrot.lane.b32.xlu0 %v3735, 112
    %v3747 = vpop.permute.xlu0 %3746
    %3748 = vrot.lane.b32.xlu0 %v3736, 112
    %v3749 = vpop.permute.xlu0 %3748
    %3750 = vrot.lane.b32.xlu0 %v3737, 112
    %v3751 = vpop.permute.xlu0 %3750
    %3752 = vrot.lane.b32.xlu0 %v3738, 112
    %v3753 = vpop.permute.xlu0 %3752
    %v3759 = vadd.f32 %v3704, %v3745
    %v3760 = vadd.f32 %v3705, %v3747
    %v3761 = vadd.f32 %v3706, %v3749
    %v3762 = vadd.f32 %v3707, %v3751
    %v3763 = vadd.f32 %v3708, %v3753
    %3769 = vrot.lane.b32.xlu0 %v3569, 120
    %v3770 = vpop.permute.xlu0 %3769
    %3771 = vrot.lane.b32.xlu0 %v3570, 120
    %v3772 = vpop.permute.xlu0 %3771
    %3773 = vrot.lane.b32.xlu0 %v3571, 120
    %v3774 = vpop.permute.xlu0 %3773
    %3775 = vrot.lane.b32.xlu0 %v3572, 120
    %v3776 = vpop.permute.xlu0 %3775
    %3777 = vrot.lane.b32.xlu0 %v3573, 120
    %v3778 = vpop.permute.xlu0 %3777
    %3789 = vrot.lane.b32.xlu0 %v3759, 8
    %v3790 = vpop.permute.xlu0 %3789
    %3791 = vrot.lane.b32.xlu0 %v3760, 8
    %v3792 = vpop.permute.xlu0 %3791
    %3793 = vrot.lane.b32.xlu0 %v3761, 8
    %v3794 = vpop.permute.xlu0 %3793
    %3795 = vrot.lane.b32.xlu0 %v3762, 8
    %v3796 = vpop.permute.xlu0 %3795
    %3797 = vrot.lane.b32.xlu0 %v3763, 8
    %v3798 = vpop.permute.xlu0 %3797
    %v3804 = vsel %vm1051, %v3409, %v3770
    %v3805 = vsel %vm1051, %v3410, %v3772
    %v3806 = vsel %vm1051, %v3411, %v3774
    %v3807 = vsel %vm1051, %v3412, %v3776
    %v3808 = vsel %vm1051, %v3413, %v3778
    %v3809 = vsel %vm1054, %v3804, %v3674
    %v3810 = vsel %vm1054, %v3805, %v3675
    %v3811 = vsel %vm1054, %v3806, %v3676
    %v3812 = vsel %vm1054, %v3807, %v3677
    %v3813 = vsel %vm1054, %v3808, %v3678
    %v3814 = vsel %vm1057, %v3809, %v3790
    %v3815 = vsel %vm1057, %v3810, %v3792
    %v3816 = vsel %vm1057, %v3811, %v3794
    %v3817 = vsel %vm1057, %v3812, %v3796
    %v3818 = vsel %vm1057, %v3813, %v3798
    %3819 = vmatprep.subr.mxu0 0.0
    %3820 = vmatpush1.msra.mxu0 %v3814
    %3821 = vmatprep.subr.mxu0 0.0
    %3822 = vmatpush1.msra.mxu0 %v3815
    %3823 = vmatprep.subr.mxu0 0.0
    %3824 = vmatpush1.msra.mxu0 %v3816
    %3825 = vmatprep.subr.mxu0 0.0
    %3826 = vmatpush1.msra.mxu0 %v3817
    %3827 = vmatprep.subr.mxu0 0.0
    %3828 = vmatpush1.msra.mxu0 %v3818
    %3829 = vmatprep.subr.mxu0 0.0
    %3830 = vmatpush1.msra.mxu0 0.0
    %3831 = vmatprep.subr.mxu0 0.0
    %3832 = vmatpush1.msra.mxu0 0.0
    %3833 = vmatprep.subr.mxu0 0.0
    %3834 = vmatpush1.msra.mxu0 0.0
    %3835 = vmatprep.subr.mxu0 0.0
    %3836 = vmatpush1.msra.mxu0 0.0
    %3837 = vmatprep.subr.mxu0 0.0
    %3838 = vmatpush1.msra.mxu0 0.0
    %3839 = vmatprep.subr.mxu0 0.0
    %3840 = vmatpush1.msra.mxu0 0.0
    %3841 = vmatprep.subr.mxu0 0.0
    %3842 = vmatpush1.msra.mxu0 0.0
    %3843 = vmatprep.subr.mxu0 0.0
    %3844 = vmatpush1.msra.mxu0 0.0
    %3845 = vmatprep.subr.mxu0 0.0
    %3846 = vmatpush1.msra.mxu0 0.0
    %3847 = vmatprep.subr.mxu0 0.0
    %3848 = vmatpush1.msra.mxu0 0.0
    %3849 = vmatprep.subr.mxu0 0.0
    %3850 = vmatpush1.msra.mxu0 0.0
    %3851 = vmatprep.subr.mxu0 0.0
    %3852 = vmatpush1.msra.mxu0 0.0
    %3853 = vmatprep.subr.mxu0 0.0
    %3854 = vmatpush1.msra.mxu0 0.0
    %3855 = vmatprep.subr.mxu0 0.0
    %3856 = vmatpush1.msra.mxu0 0.0
    %3857 = vmatprep.subr.mxu0 0.0
    %3858 = vmatpush1.msra.mxu0 0.0
    %3859 = vmatprep.subr.mxu0 0.0
    %3860 = vmatpush1.msra.mxu0 0.0
    %3861 = vmatprep.subr.mxu0 0.0
    %3862 = vmatpush1.msra.mxu0 0.0
    %3863 = vmatprep.subr.mxu0 0.0
    %3864 = vmatpush1.msra.mxu0 0.0
    %3865 = vmatprep.subr.mxu0 0.0
    %3866 = vmatpush1.msra.mxu0 0.0
    %3867 = vmatprep.subr.mxu0 0.0
    %3868 = vmatpush1.msra.mxu0 0.0
    %3869 = vmatprep.subr.mxu0 0.0
    %3870 = vmatpush1.msra.mxu0 0.0
    %3871 = vmatprep.subr.mxu0 0.0
    %3872 = vmatpush1.msra.mxu0 0.0
    %3873 = vmatprep.subr.mxu0 0.0
    %3874 = vmatpush1.msra.mxu0 0.0
    %3875 = vmatprep.subr.mxu0 0.0
    %3876 = vmatpush1.msra.mxu0 0.0
    %3877 = vmatprep.subr.mxu0 0.0
    %3878 = vmatpush1.msra.mxu0 0.0
    %3879 = vmatprep.subr.mxu0 0.0
    %3880 = vmatpush1.msra.mxu0 0.0
    %3881 = vmatprep.subr.mxu0 0.0
    %3882 = vmatpush1.msra.mxu0 0.0
    %3883 = vmatprep.mubr.f32.mxu0 0.0
    %3884 = vmatmul.mubr.f32.gmra.mrb[0].mxu0 %v2405
    %v3885 = vpop.f32.mrb[0].mxu0
    %v3886 = vadd.f32 0.0, %v3885
    %v3887 = vpop.f32.mrb[0].mxu0
    %3888 = vmatprep.mubr.f32.mxu0 0.0
    %3889 = vmatmul.mubr.f32.gmra.mrb[0].mxu0 %v2408
    %v3890 = vpop.f32.mrb[0].mxu0
    %v3891 = vadd.f32 0.0, %v3890
    %v3892 = vpop.f32.mrb[0].mxu0
    %3893 = vdwg.mxu0
    %v3894 = vmul.f32 %v3886, 0.57735026
    %v3895 = vmul.f32 %v3891, 0.57735026
    %s3896 = scalar_lea.vmem [#allocation9], 32
    %v3897 = vld [vmem:[%s3896] sm:$0xff]
    %v3898 = vld [vmem:[%s3896 + $0x8] sm:$0xff]
    %v3899 = vld [vmem:[%s3896 + $0x10] sm:$0xff]
    %v3900 = vld [vmem:[%s3896 + $0x18] sm:$0xff]
    %v3902 = vsel %vm1071, %v3894, 0
    %v3905 = vsel %vm1071, %v3895, 0
    %3907 = vmatprep.subr.mxu0 0.0
    %3908 = vmatpush1.msra.mxu0 %v3897
    %3909 = vmatprep.subr.mxu0 0.0
    %3910 = vmatpush1.msra.mxu0 %v3898
    %3911 = vmatprep.subr.mxu0 0.0
    %3912 = vmatpush1.msra.mxu0 %v3899
    %3913 = vmatprep.subr.mxu0 0.0
    %3914 = vmatpush1.msra.mxu0 %v3900
    %3915 = vmatprep.subr.mxu0 0.0
    %3916 = vmatpush1.msra.mxu0 0.0
    %3917 = vmatprep.subr.mxu0 0.0
    %3918 = vmatpush1.msra.mxu0 0.0
    %3919 = vmatprep.subr.mxu0 0.0
    %3920 = vmatpush1.msra.mxu0 0.0
    %3921 = vmatprep.subr.mxu0 0.0
    %3922 = vmatpush1.msra.mxu0 0.0
    %3923 = vmatprep.subr.mxu0 0.0
    %3924 = vmatpush1.msra.mxu0 0.0
    %3925 = vmatprep.subr.mxu0 0.0
    %3926 = vmatpush1.msra.mxu0 0.0
    %3927 = vmatprep.subr.mxu0 0.0
    %3928 = vmatpush1.msra.mxu0 0.0
    %3929 = vmatprep.subr.mxu0 0.0
    %3930 = vmatpush1.msra.mxu0 0.0
    %3931 = vmatprep.subr.mxu0 0.0
    %3932 = vmatpush1.msra.mxu0 0.0
    %3933 = vmatprep.subr.mxu0 0.0
    %3934 = vmatpush1.msra.mxu0 0.0
    %3935 = vmatprep.subr.mxu0 0.0
    %3936 = vmatpush1.msra.mxu0 0.0
    %3937 = vmatprep.subr.mxu0 0.0
    %3938 = vmatpush1.msra.mxu0 0.0
    %3939 = vmatprep.subr.mxu0 0.0
    %3940 = vmatpush1.msra.mxu0 0.0
    %3941 = vmatprep.subr.mxu0 0.0
    %3942 = vmatpush1.msra.mxu0 0.0
    %3943 = vmatprep.subr.mxu0 0.0
    %3944 = vmatpush1.msra.mxu0 0.0
    %3945 = vmatprep.subr.mxu0 0.0
    %3946 = vmatpush1.msra.mxu0 0.0
    %3947 = vmatprep.subr.mxu0 0.0
    %3948 = vmatpush1.msra.mxu0 0.0
    %3949 = vmatprep.subr.mxu0 0.0
    %3950 = vmatpush1.msra.mxu0 0.0
    %3951 = vmatprep.subr.mxu0 0.0
    %3952 = vmatpush1.msra.mxu0 0.0
    %3953 = vmatprep.subr.mxu0 0.0
    %3954 = vmatpush1.msra.mxu0 0.0
    %3955 = vmatprep.subr.mxu0 0.0
    %3956 = vmatpush1.msra.mxu0 0.0
    %3957 = vmatprep.subr.mxu0 0.0
    %3958 = vmatpush1.msra.mxu0 0.0
    %3959 = vmatprep.subr.mxu0 0.0
    %3960 = vmatpush1.msra.mxu0 0.0
    %3961 = vmatprep.subr.mxu0 0.0
    %3962 = vmatpush1.msra.mxu0 0.0
    %3963 = vmatprep.subr.mxu0 0.0
    %3964 = vmatpush1.msra.mxu0 0.0
    %3965 = vmatprep.subr.mxu0 0.0
    %3966 = vmatpush1.msra.mxu0 0.0
    %3967 = vmatprep.subr.mxu0 0.0
    %3968 = vmatpush1.msra.mxu0 0.0
    %3969 = vmatprep.subr.mxu0 0.0
    %3970 = vmatpush1.msra.mxu0 0.0
    %3971 = vmatprep.mubr.f32.mxu0 0.0
    %3972 = vmatmul.mubr.f32.gmra.mrb[0].mxu0 %v3902
    %v3973 = vpop.f32.mrb[0].mxu0
    %v3974 = vadd.f32 0.0, %v3973
    %v3975 = vpop.f32.mrb[0].mxu0
    %3976 = vmatprep.mubr.f32.mxu0 0.0
    %3977 = vmatmul.mubr.f32.gmra.mrb[0].mxu0 %v3905
    %v3978 = vpop.f32.mrb[0].mxu0
    %v3979 = vadd.f32 0.0, %v3978
    %v3980 = vpop.f32.mrb[0].mxu0
    %3981 = vdwg.mxu0
    %v3982 = vmul.f32 %v3974, 0.35355338
    %v3983 = vmul.f32 %v3979, 0.35355338
    %v3984 = vadd.f32 %v3982, %v2742
    %v3985 = vadd.f32 %v3983, %v2743
    %v3986 = vxor.u32 %v3984, 2147483648
    %v3987 = vxor.u32 %v3985, 2147483648
    %v3988 = vmul.f32 %v3986, 1.442695
    %v3989 = vpow.pop %v3988
    %v3990 = vmul.f32 %v3987, 1.442695
    %v3991 = vpow.pop %v3990
    %v3992 = vadd.f32 %v3989, 1.0
    %v3993 = vadd.f32 %v3991, 1.0
    %v3994 = vrcp.pop %v3992
    %v3995 = vmul.f32 1.0, %v3994
    %v3996 = vrcp.pop %v3993
    %v3997 = vmul.f32 1.0, %v3996
    %4000 = vrot.lane.b32.xlu0 %v3995, 8
    %v4001 = vpop.permute.xlu0 %4000
    %4002 = vrot.lane.b32.xlu0 %v3997, 8
    %v4003 = vpop.permute.xlu0 %4002
    %4006 = vrot.lane.b32.xlu0 %v3995, 16
    %v4007 = vpop.permute.xlu0 %4006
    %4008 = vrot.lane.b32.xlu0 %v3997, 16
    %v4009 = vpop.permute.xlu0 %4008
    %4012 = vrot.lane.b32.xlu0 %v3995, 24
    %v4013 = vpop.permute.xlu0 %4012
    %4014 = vrot.lane.b32.xlu0 %v3997, 24
    %v4015 = vpop.permute.xlu0 %4014
    %v4018 = vsel %vm1051, %v3995, %v4001
    %v4019 = vsel %vm1051, %v3997, %v4003
    %v4020 = vsel %vm1054, %v4018, %v4007
    %v4021 = vsel %vm1054, %v4019, %v4009
    %v4022 = vsel %vm1057, %v4020, %v4013
    %v4023 = vsel %vm1057, %v4021, %v4015
    %v4024 = vmul.f32 %v3984, %v4022
    %v4025 = vmul.f32 %v3985, %v4023
    %v4026 = vadd.f32 %v4024, %v2614
    %v4027 = vadd.f32 %v4025, %v2615
    %v4028 = vld [vmem:[%s12] sm:$0xff]
    %v4030 = vsel %vm1051, %v4026, 0
    %v4033 = vsel %vm1051, %v4027, 0
    %4035 = vmatprep.subr.mxu0 0.0
    %4036 = vmatpush1.msra.mxu0 %v4028
    %4037 = vmatprep.subr.mxu0 0.0
    %4038 = vmatpush1.msra.mxu0 0.0
    %4039 = vmatprep.subr.mxu0 0.0
    %4040 = vmatpush1.msra.mxu0 0.0
    %4041 = vmatprep.subr.mxu0 0.0
    %4042 = vmatpush1.msra.mxu0 0.0
    %4043 = vmatprep.subr.mxu0 0.0
    %4044 = vmatpush1.msra.mxu0 0.0
    %4045 = vmatprep.subr.mxu0 0.0
    %4046 = vmatpush1.msra.mxu0 0.0
    %4047 = vmatprep.subr.mxu0 0.0
    %4048 = vmatpush1.msra.mxu0 0.0
    %4049 = vmatprep.subr.mxu0 0.0
    %4050 = vmatpush1.msra.mxu0 0.0
    %4051 = vmatprep.subr.mxu0 0.0
    %4052 = vmatpush1.msra.mxu0 0.0
    %4053 = vmatprep.subr.mxu0 0.0
    %4054 = vmatpush1.msra.mxu0 0.0
    %4055 = vmatprep.subr.mxu0 0.0
    %4056 = vmatpush1.msra.mxu0 0.0
    %4057 = vmatprep.subr.mxu0 0.0
    %4058 = vmatpush1.msra.mxu0 0.0
    %4059 = vmatprep.subr.mxu0 0.0
    %4060 = vmatpush1.msra.mxu0 0.0
    %4061 = vmatprep.subr.mxu0 0.0
    %4062 = vmatpush1.msra.mxu0 0.0
    %4063 = vmatprep.subr.mxu0 0.0
    %4064 = vmatpush1.msra.mxu0 0.0
    %4065 = vmatprep.subr.mxu0 0.0
    %4066 = vmatpush1.msra.mxu0 0.0
    %4067 = vmatprep.subr.mxu0 0.0
    %4068 = vmatpush1.msra.mxu0 0.0
    %4069 = vmatprep.subr.mxu0 0.0
    %4070 = vmatpush1.msra.mxu0 0.0
    %4071 = vmatprep.subr.mxu0 0.0
    %4072 = vmatpush1.msra.mxu0 0.0
    %4073 = vmatprep.subr.mxu0 0.0
    %4074 = vmatpush1.msra.mxu0 0.0
    %4075 = vmatprep.subr.mxu0 0.0
    %4076 = vmatpush1.msra.mxu0 0.0
    %4077 = vmatprep.subr.mxu0 0.0
    %4078 = vmatpush1.msra.mxu0 0.0
    %4079 = vmatprep.subr.mxu0 0.0
    %4080 = vmatpush1.msra.mxu0 0.0
    %4081 = vmatprep.subr.mxu0 0.0
    %4082 = vmatpush1.msra.mxu0 0.0
    %4083 = vmatprep.subr.mxu0 0.0
    %4084 = vmatpush1.msra.mxu0 0.0
    %4085 = vmatprep.subr.mxu0 0.0
    %4086 = vmatpush1.msra.mxu0 0.0
    %4087 = vmatprep.subr.mxu0 0.0
    %4088 = vmatpush1.msra.mxu0 0.0
    %4089 = vmatprep.subr.mxu0 0.0
    %4090 = vmatpush1.msra.mxu0 0.0
    %4091 = vmatprep.subr.mxu0 0.0
    %4092 = vmatpush1.msra.mxu0 0.0
    %4093 = vmatprep.subr.mxu0 0.0
    %4094 = vmatpush1.msra.mxu0 0.0
    %4095 = vmatprep.subr.mxu0 0.0
    %4096 = vmatpush1.msra.mxu0 0.0
    %4097 = vmatprep.subr.mxu0 0.0
    %4098 = vmatpush1.msra.mxu0 0.0
    %4099 = vmatprep.mubr.f32.mxu0 0.0
    %4100 = vmatmul.mubr.f32.gmra.mrb[0].mxu0 %v4030
    %v4101 = vpop.f32.mrb[0].mxu0
    %v4102 = vadd.f32 0.0, %v4101
    %v4103 = vpop.f32.mrb[0].mxu0
    %4104 = vmatprep.mubr.f32.mxu0 0.0
    %4105 = vmatmul.mubr.f32.gmra.mrb[0].mxu0 %v4033
    %v4106 = vpop.f32.mrb[0].mxu0
    %v4107 = vadd.f32 0.0, %v4106
    %v4108 = vpop.f32.mrb[0].mxu0
    %4109 = vdwg.mxu0
    %v4110 = vmul.f32 %v4102, 0.35355338
    %v4111 = vmul.f32 %v4107, 0.35355338
    %v4112 = vld [vmem:[%s13] sm:$0xf]
    %v4114 = vsel %vm963, %v4110, 0
    %v4117 = vsel %vm963, %v4111, 0
    %v4120 = vsel %vm970, %v4112, 0
    %4122 = vmatprep.subr.mxu0 0.0
    %4123 = vmatpush1.msra.mxu0 %v4120
    %4124 = vmatprep.subr.mxu0 0.0
    %4125 = vmatpush1.msra.mxu0 0.0
    %4126 = vmatprep.subr.mxu0 0.0
    %4127 = vmatpush1.msra.mxu0 0.0
    %4128 = vmatprep.subr.mxu0 0.0
    %4129 = vmatpush1.msra.mxu0 0.0
    %4130 = vmatprep.subr.mxu0 0.0
    %4131 = vmatpush1.msra.mxu0 0.0
    %4132 = vmatprep.subr.mxu0 0.0
    %4133 = vmatpush1.msra.mxu0 0.0
    %4134 = vmatprep.subr.mxu0 0.0
    %4135 = vmatpush1.msra.mxu0 0.0
    %4136 = vmatprep.subr.mxu0 0.0
    %4137 = vmatpush1.msra.mxu0 0.0
    %4138 = vmatprep.subr.mxu0 0.0
    %4139 = vmatpush1.msra.mxu0 0.0
    %4140 = vmatprep.subr.mxu0 0.0
    %4141 = vmatpush1.msra.mxu0 0.0
    %4142 = vmatprep.subr.mxu0 0.0
    %4143 = vmatpush1.msra.mxu0 0.0
    %4144 = vmatprep.subr.mxu0 0.0
    %4145 = vmatpush1.msra.mxu0 0.0
    %4146 = vmatprep.subr.mxu0 0.0
    %4147 = vmatpush1.msra.mxu0 0.0
    %4148 = vmatprep.subr.mxu0 0.0
    %4149 = vmatpush1.msra.mxu0 0.0
    %4150 = vmatprep.subr.mxu0 0.0
    %4151 = vmatpush1.msra.mxu0 0.0
    %4152 = vmatprep.subr.mxu0 0.0
    %4153 = vmatpush1.msra.mxu0 0.0
    %4154 = vmatprep.subr.mxu0 0.0
    %4155 = vmatpush1.msra.mxu0 0.0
    %4156 = vmatprep.subr.mxu0 0.0
    %4157 = vmatpush1.msra.mxu0 0.0
    %4158 = vmatprep.subr.mxu0 0.0
    %4159 = vmatpush1.msra.mxu0 0.0
    %4160 = vmatprep.subr.mxu0 0.0
    %4161 = vmatpush1.msra.mxu0 0.0
    %4162 = vmatprep.subr.mxu0 0.0
    %4163 = vmatpush1.msra.mxu0 0.0
    %4164 = vmatprep.subr.mxu0 0.0
    %4165 = vmatpush1.msra.mxu0 0.0
    %4166 = vmatprep.subr.mxu0 0.0
    %4167 = vmatpush1.msra.mxu0 0.0
    %4168 = vmatprep.subr.mxu0 0.0
    %4169 = vmatpush1.msra.mxu0 0.0
    %4170 = vmatprep.subr.mxu0 0.0
    %4171 = vmatpush1.msra.mxu0 0.0
    %4172 = vmatprep.subr.mxu0 0.0
    %4173 = vmatpush1.msra.mxu0 0.0
    %4174 = vmatprep.subr.mxu0 0.0
    %4175 = vmatpush1.msra.mxu0 0.0
    %4176 = vmatprep.subr.mxu0 0.0
    %4177 = vmatpush1.msra.mxu0 0.0
    %4178 = vmatprep.subr.mxu0 0.0
    %4179 = vmatpush1.msra.mxu0 0.0
    %4180 = vmatprep.subr.mxu0 0.0
    %4181 = vmatpush1.msra.mxu0 0.0
    %4182 = vmatprep.subr.mxu0 0.0
    %4183 = vmatpush1.msra.mxu0 0.0
    %4184 = vmatprep.subr.mxu0 0.0
    %4185 = vmatpush1.msra.mxu0 0.0
    %4186 = vmatprep.mubr.f32.mxu0 0.0
    %4187 = vmatmul.mubr.f32.gmra.mrb[0].mxu0 %v4114
    %v4188 = vpop.f32.mrb[0].mxu0
    %v4189 = vadd.f32 0.0, %v4188
    %v4190 = vpop.f32.mrb[0].mxu0
    %4191 = vmatprep.mubr.f32.mxu0 0.0
    %4192 = vmatmul.mubr.f32.gmra.mrb[0].mxu0 %v4117
    %v4193 = vpop.f32.mrb[0].mxu0
    %v4194 = vadd.f32 0.0, %v4193
    %v4195 = vpop.f32.mrb[0].mxu0
    %4196 = vdwg.mxu0
    %v4197 = vmul.f32 %v4189, 0.5
    %v4198 = vmul.f32 %v4194, 0.5
    %vm4199 = vcmask 7168
    %4200 = vst.msk [vmem:[%s14] sm:$0xff] %vm4199, %v4197
    %4201 = vst.msk [vmem:[%s14 + $0x8] sm:$0xff] %vm4199, %v4198
    %v4202 = vld [vmem:[%s4] sm:$0x3]
    %v4204 = vsel %vm1054, %v4202, 0
    %4206 = vmatprep.subr.mxu0 0.0
    %4207 = vmatpush1.msra.mxu0 %v4197
    %4208 = vmatprep.subr.mxu0 0.0
    %4209 = vmatpush1.msra.mxu0 %v4198
    %4210 = vmatprep.subr.mxu0 0.0
    %4211 = vmatpush1.msra.mxu0 0.0
    %4212 = vmatprep.subr.mxu0 0.0
    %4213 = vmatpush1.msra.mxu0 0.0
    %4214 = vmatprep.subr.mxu0 0.0
    %4215 = vmatpush1.msra.mxu0 0.0
    %4216 = vmatprep.subr.mxu0 0.0
    %4217 = vmatpush1.msra.mxu0 0.0
    %4218 = vmatprep.subr.mxu0 0.0
    %4219 = vmatpush1.msra.mxu0 0.0
    %4220 = vmatprep.subr.mxu0 0.0
    %4221 = vmatpush1.msra.mxu0 0.0
    %4222 = vmatprep.subr.mxu0 0.0
    %4223 = vmatpush1.msra.mxu0 0.0
    %4224 = vmatprep.subr.mxu0 0.0
    %4225 = vmatpush1.msra.mxu0 0.0
    %4226 = vmatprep.subr.mxu0 0.0
    %4227 = vmatpush1.msra.mxu0 0.0
    %4228 = vmatprep.subr.mxu0 0.0
    %4229 = vmatpush1.msra.mxu0 0.0
    %4230 = vmatprep.subr.mxu0 0.0
    %4231 = vmatpush1.msra.mxu0 0.0
    %4232 = vmatprep.subr.mxu0 0.0
    %4233 = vmatpush1.msra.mxu0 0.0
    %4234 = vmatprep.subr.mxu0 0.0
    %4235 = vmatpush1.msra.mxu0 0.0
    %4236 = vmatprep.subr.mxu0 0.0
    %4237 = vmatpush1.msra.mxu0 0.0
    %4238 = vmatprep.subr.mxu0 0.0
    %4239 = vmatpush1.msra.mxu0 0.0
    %4240 = vmatprep.subr.mxu0 0.0
    %4241 = vmatpush1.msra.mxu0 0.0
    %4242 = vmatprep.subr.mxu0 0.0
    %4243 = vmatpush1.msra.mxu0 0.0
    %4244 = vmatprep.subr.mxu0 0.0
    %4245 = vmatpush1.msra.mxu0 0.0
    %4246 = vmatprep.subr.mxu0 0.0
    %4247 = vmatpush1.msra.mxu0 0.0
    %4248 = vmatprep.subr.mxu0 0.0
    %4249 = vmatpush1.msra.mxu0 0.0
    %4250 = vmatprep.subr.mxu0 0.0
    %4251 = vmatpush1.msra.mxu0 0.0
    %4252 = vmatprep.subr.mxu0 0.0
    %4253 = vmatpush1.msra.mxu0 0.0
    %4254 = vmatprep.subr.mxu0 0.0
    %4255 = vmatpush1.msra.mxu0 0.0
    %4256 = vmatprep.subr.mxu0 0.0
    %4257 = vmatpush1.msra.mxu0 0.0
    %4258 = vmatprep.subr.mxu0 0.0
    %4259 = vmatpush1.msra.mxu0 0.0
    %4260 = vmatprep.subr.mxu0 0.0
    %4261 = vmatpush1.msra.mxu0 0.0
    %4262 = vmatprep.subr.mxu0 0.0
    %4263 = vmatpush1.msra.mxu0 0.0
    %4264 = vmatprep.subr.mxu0 0.0
    %4265 = vmatpush1.msra.mxu0 0.0
    %4266 = vmatprep.subr.mxu0 0.0
    %4267 = vmatpush1.msra.mxu0 0.0
    %4268 = vmatprep.subr.mxu0 0.0
    %4269 = vmatpush1.msra.mxu0 0.0
    %4270 = vmatprep.mubr.f32.mxu0 0.0
    %4271 = vmatmul.mubr.f32.gmra.mrb[0].mxu0 %v4204
    %v4272 = vpop.f32.mrb[0].mxu0
    %v4273 = vadd.f32 0.0, %v4272
    %v4274 = vpop.f32.mrb[0].mxu0
    %4275 = vdwg.mxu0
    %vm4276 = vcmask 1024
    %4277 = vst.msk [vmem:[%s15] sm:$0x3] %vm4276, %v4273
    // Predicated region
    $region78: #{tpu_custom_call.1} parent=1 // pred_check
      _
    $region79: #{tpu_custom_call.1} parent=1 // pred_check_branch
      %4279 = sbr.rel (0) target = $region81
    $region80: #{tpu_custom_call.1} parent=1 // pred_region
      _
    $region81: #{tpu_custom_call.1} parent=1 // pred_fallthru
      _
    // Predicated region
    $region82: #{tpu_custom_call.1} parent=1 // pred_check
      _
    $region83: #{tpu_custom_call.1} parent=1 // pred_check_branch
      %4281 = sbr.rel (0) target = $region85
    $region84: #{tpu_custom_call.1} parent=1 // pred_region
      _
    $region85: #{tpu_custom_call.1} parent=1 // pred_fallthru
      _
    // Predicated region
    $region86: #{tpu_custom_call.1} parent=1 // pred_check
      _
    $region87: #{tpu_custom_call.1} parent=1 // pred_check_branch
      %4283 = sbr.rel (0) target = $region89
    $region88: #{tpu_custom_call.1} parent=1 // pred_region
      _
    $region89: #{tpu_custom_call.1} parent=1 // pred_fallthru
      _
    // Predicated region
    $region90: #{tpu_custom_call.1} parent=1 // pred_check
      _
    $region91: #{tpu_custom_call.1} parent=1 // pred_check_branch
      %4285 = sbr.rel (0) target = $region93
    $region92: #{tpu_custom_call.1} parent=1 // pred_region
      _
    $region93: #{tpu_custom_call.1} parent=1 // pred_fallthru
      _
    %4286 = vsyncpa [#allocation3], 1
    %4287 = vsyncpa [#allocation5], 1
    %4288 = vsyncpa [#allocation8], 1

</llo_original>
